<compile_context>
chip_gen: v7x
topology: tpu7x:2x2x1
jax: 0.10.0
libtpu: 0.0.40
codegen_flags: <defaults>
</compile_context>

<pallas_src>
import functools

import jax
import jax.numpy as jnp
import numpy as np
from jax.experimental import pallas as pl
from jax.experimental.pallas import tpu as pltpu


def _round_up(x, m):
    return ((x + m - 1) // m) * m


def _cdiv(a, b):
    return -(-a // b)


# ---------------------------------------------------------------------------
# Shared per-cell loss math.  `pch(i)` / `tch(i)` return channel i of the
# predicted / target tensors as a dense (rows, 128) f32 tile; `valid` masks
# lanes that correspond to real (non-padded / in-range) cells.
# ---------------------------------------------------------------------------
def _cell_loss_terms(pch, tch, valid, *, S, B, C, lambda_coord, lambda_noobj):
    conf_t0 = tch(4)
    is_obj = jnp.logical_and(valid, conf_t0 > 0.0)      # cells with an object
    is_noobj = jnp.logical_and(valid, conf_t0 == 0.0)   # cells without

    # ----- no-object confidence loss (every box's conf channel) -----
    noobj = jnp.zeros_like(conf_t0)
    for b in range(B):
        d = pch(4 + 5 * b) - tch(4 + 5 * b)
        noobj = noobj + d * d
    noobj = jnp.where(is_noobj, noobj, 0.0)

    # ----- class loss over object cells -----
    cls = jnp.zeros_like(conf_t0)
    for c in range(C):
        d = pch(5 * B + c) - tch(5 * B + c)
        cls = cls + d * d
    cls = jnp.where(is_obj, cls, 0.0)

    # ----- IoU of each predicted box against target box 0 of the cell -----
    inv_s = 1.0 / float(S)
    tx = tch(0) * inv_s
    ty = tch(1) * inv_s
    tw = tch(2)
    th = tch(3)
    tx1, ty1 = tx - 0.5 * tw, ty - 0.5 * th
    tx2, ty2 = tx + 0.5 * tw, ty + 0.5 * th
    area_t = (tx2 - tx1) * (ty2 - ty1)

    ious = []
    for b in range(B):
        px = pch(5 * b) * inv_s
        py = pch(5 * b + 1) * inv_s
        pw = pch(5 * b + 2)
        ph = pch(5 * b + 3)
        px1, py1 = px - 0.5 * pw, py - 0.5 * ph
        px2, py2 = px + 0.5 * pw, py + 0.5 * ph
        area_p = (px2 - px1) * (py2 - py1)
        wh_x = jnp.maximum(jnp.minimum(px2, tx2) - jnp.maximum(px1, tx1), 0.0)
        wh_y = jnp.maximum(jnp.minimum(py2, ty2) - jnp.maximum(py1, ty1), 0.0)
        inter = wh_x * wh_y
        union = area_p + area_t - inter
        # Exact divide (review: approx reciprocal was not a faithful divide);
        # clamp only protects padded / degenerate cells, which are masked out.
        ious.append(inter / jnp.maximum(union, 1e-12))

    # argmax over the B boxes on the true IoUs (first max wins, like torch).
    best_iou = ious[0]
    best_idx = jnp.zeros_like(best_iou, dtype=jnp.int32)
    for b in range(1, B):
        better = ious[b] > best_iou
        best_iou = jnp.where(better, ious[b], best_iou)
        best_idx = jnp.where(better, jnp.int32(b), best_idx)

    # gather the "responsible" box channels (per-cell select over B boxes)
    def gather(fetch, ch_off):
        out = fetch(ch_off)
        for b in range(1, B):
            out = jnp.where(best_idx == b, fetch(5 * b + ch_off), out)
        return out

    p_x, p_y = gather(pch, 0), gather(pch, 1)
    p_w, p_h = gather(pch, 2), gather(pch, 3)
    p_c = gather(pch, 4)
    t_x, t_y = gather(tch, 0), gather(tch, 1)
    t_w, t_h = gather(tch, 2), gather(tch, 3)

    xy = (p_x - t_x) ** 2 + (p_y - t_y) ** 2
    # TODO(synk): sqrt of a negative predicted w/h gives NaN, exactly matching
    # the PyTorch reference's torch.sqrt behaviour (inputs assumed >= 0).
    wh = ((jnp.sqrt(p_w) - jnp.sqrt(t_w)) ** 2
          + (jnp.sqrt(p_h) - jnp.sqrt(t_h)) ** 2)
    obj = (p_c - best_iou) ** 2
    coord_terms = jnp.where(is_obj, lambda_coord * (xy + wh) + obj, 0.0)

    return coord_terms + lambda_noobj * noobj + cls


def _accumulate_block(pch, tch, out_ref, acc_ref, *, S, B, C, lambda_coord,
                      lambda_noobj, ncell, tile_cells):
    """Init / accumulate / finalize logic shared by both kernel variants."""
    steps = pl.num_programs(1)
    step = pl.program_id(1)
    core = pl.program_id(0)
    rows = tile_cells // 128

    @pl.when(step == 0)
    def _init():
        acc_ref[...] = jnp.zeros_like(acc_ref)

    # Explicit valid-cell mask (review: don't rely on zero padding): lanes
    # whose global cell index is out of range contribute exactly 0.
    base = (core * steps + step) * tile_cells
    row_idx = jax.lax.broadcasted_iota(jnp.int32, (rows, 128), 0)
    lane_idx = jax.lax.broadcasted_iota(jnp.int32, (rows, 128), 1)
    valid = (base + row_idx * 128 + lane_idx) < ncell

    # Hierarchical reduction: vector accumulator per step, scalar reduce once.
    acc_ref[...] += _cell_loss_terms(
        pch, tch, valid, S=S, B=B, C=C,
        lambda_coord=lambda_coord, lambda_noobj=lambda_noobj)

    @pl.when(step == steps - 1)
    def _fini():
        out_ref[0, 0] = jnp.sum(acc_ref[...])


# ---------------------------------------------------------------------------
# Variant 1 (primary): channel-last blocks straight from HBM, relayout on-chip.
# ---------------------------------------------------------------------------
def _yolo_kernel_fused(pred_ref, targ_ref, out_ref, acc_ref, *, S, B, C,
                       lambda_coord, lambda_noobj, ncell, tile_cells):
    nch = 5 * B + C
    rows = tile_cells // 128

    # Channel-last block -> channel-major tiles, entirely on-chip.  The reshape
    # is layout-preserving; the swap of the two minor dims is one XLU relayout
    # per tensor per step (pltpu.einshape would be an equivalent spelling).
    p3 = pred_ref[...].reshape(rows, 128, nch)
    t3 = targ_ref[...].reshape(rows, 128, nch)
    pt = jnp.swapaxes(p3, 1, 2)      # (rows, nch, 128)
    tt = jnp.swapaxes(t3, 1, 2)

    _accumulate_block(lambda i: pt[:, i, :], lambda i: tt[:, i, :],
                      out_ref, acc_ref, S=S, B=B, C=C,
                      lambda_coord=lambda_coord, lambda_noobj=lambda_noobj,
                      ncell=ncell, tile_cells=tile_cells)


def _yolo_loss_fused(pred, target, *, S, B, C, lambda_coord, lambda_noobj,
                     n_cores, max_tile_cells=8192):
    nch = 5 * B + C
    batch = pred.shape[0]
    ncell = batch * S * S

    # Cells per grid step: multiple of 8*128 so the in-kernel reshape is
    # layout-free; capped so 2 inputs x 2 pipeline buffers (lane-padded to 128
    # in VMEM) plus the transposed temporaries stay well under the VMEM budget.
    tile_cells = min(max_tile_cells, _round_up(ncell, 1024))
    tiles_total = _cdiv(ncell, tile_cells)
    steps = _cdiv(tiles_total, n_cores)
    tile_rows = tile_cells // 128

    # Free reshapes only: no pad / transpose HBM pass in the wrapper.
    pred2 = jnp.asarray(pred, jnp.float32).reshape(ncell, nch)
    targ2 = jnp.asarray(target, jnp.float32).reshape(ncell, nch)

    kernel = functools.partial(
        _yolo_kernel_fused, S=S, B=B, C=C, lambda_coord=lambda_coord,
        lambda_noobj=lambda_noobj, ncell=ncell, tile_cells=tile_cells)

    partials = pl.pallas_call(
        kernel,
        out_shape=jax.ShapeDtypeStruct((n_cores, 1), jnp.float32),
        grid_spec=pltpu.PrefetchScalarGridSpec(
            num_scalar_prefetch=0,
            grid=(n_cores, steps),
            in_specs=[
                pl.BlockSpec((tile_cells, nch),
                             lambda p, s: (p * steps + s, 0)),
                pl.BlockSpec((tile_cells, nch),
                             lambda p, s: (p * steps + s, 0)),
            ],
            out_specs=pl.BlockSpec((1, 1), lambda p, s: (p, 0),
                                   memory_space=pltpu.MemorySpace.SMEM),
            scratch_shapes=[pltpu.VMEM((tile_rows, 128), jnp.float32)],
        ),
        compiler_params=pltpu.CompilerParams(
            dimension_semantics=("parallel", "arbitrary"),
            vmem_limit_bytes=48 * 1024 * 1024),
    )(pred2, targ2)

    return jnp.sum(partials) / float(batch)


# ---------------------------------------------------------------------------
# Variant 2 (fallback): channel-major layout built in the wrapper (proven
# path), with bounded padding, a single concatenated input stream and big
# tiles.  Used only if the fused variant fails to lower / run cleanly.
# ---------------------------------------------------------------------------
def _yolo_kernel_chmajor(x_ref, out_ref, acc_ref, *, S, B, C, lambda_coord,
                         lambda_noobj, ncell, tile_cells):
    nch = 5 * B + C
    _accumulate_block(lambda i: x_ref[i], lambda i: x_ref[nch + i],
                      out_ref, acc_ref, S=S, B=B, C=C,
                      lambda_coord=lambda_coord, lambda_noobj=lambda_noobj,
                      ncell=ncell, tile_cells=tile_cells)


def _yolo_loss_prepped(pred, target, *, S, B, C, lambda_coord, lambda_noobj,
                       n_cores, max_tile_cells=32768):
    nch = 5 * B + C
    batch = pred.shape[0]
    ncell = batch * S * S

    # Tile size derived from ncell so padding is bounded by < 1024 cells per
    # tile (review: no more 2-2.6x padding blow-up for common batch sizes).
    tiles_total = max(1, _cdiv(ncell, max_tile_cells))
    tile_cells = _round_up(_cdiv(ncell, tiles_total), 1024)
    steps = _cdiv(tiles_total, n_cores)
    ncell_pad = n_cores * steps * tile_cells
    rows_pad = ncell_pad // 128
    tile_rows = tile_cells // 128

    def prep(x):
        x = jnp.asarray(x, jnp.float32).reshape(ncell, nch)
        x = jnp.pad(x, ((0, ncell_pad - ncell), (0, 0)))
        return x.T.reshape(nch, rows_pad, 128)

    # Single concatenated [2*nch, rows, 128] stream: one DMA per grid step.
    x = jnp.concatenate([prep(pred), prep(target)], axis=0)

    kernel = functools.partial(
        _yolo_kernel_chmajor, S=S, B=B, C=C, lambda_coord=lambda_coord,
        lambda_noobj=lambda_noobj, ncell=ncell, tile_cells=tile_cells)

    partials = pl.pallas_call(
        kernel,
        out_shape=jax.ShapeDtypeStruct((n_cores, 1), jnp.float32),
        grid_spec=pltpu.PrefetchScalarGridSpec(
            num_scalar_prefetch=0,
            grid=(n_cores, steps),
            in_specs=[
                pl.BlockSpec((2 * nch, tile_rows, 128),
                             lambda p, s: (0, p * steps + s, 0)),
            ],
            out_specs=pl.BlockSpec((1, 1), lambda p, s: (p, 0),
                                   memory_space=pltpu.MemorySpace.SMEM),
            scratch_shapes=[pltpu.VMEM((tile_rows, 128), jnp.float32)],
        ),
        compiler_params=pltpu.CompilerParams(
            dimension_semantics=("parallel", "arbitrary"),
            vmem_limit_bytes=48 * 1024 * 1024),
    )(x)

    return jnp.sum(partials) / float(batch)


def yolo_loss(pred, target, *, S, B, C, lambda_coord=5.0, lambda_noobj=0.5,
              n_cores=1):
    """pred, target: [batch, S, S, 5B+C] float32 (same layout as PyTorch)."""
    try:
        out = _yolo_loss_fused(pred, target, S=S, B=B, C=C,
                               lambda_coord=lambda_coord,
                               lambda_noobj=lambda_noobj, n_cores=n_cores)
        out = jax.block_until_ready(out)
        if bool(jnp.isfinite(out)):
            return out
    except Exception:  # Mosaic lowering / unsupported block shape -> fallback.
        pass
    return _yolo_loss_prepped(pred, target, S=S, B=B, C=C,
                              lambda_coord=lambda_coord,
                              lambda_noobj=lambda_noobj, n_cores=n_cores)


def _reference_loss(pred, target, S, B, C, lc=5.0, ln=0.5):
    """Plain numpy re-implementation of the PyTorch forward (verification)."""
    p = np.asarray(pred, dtype=np.float64).reshape(-1, 5 * B + C)
    t = np.asarray(target, dtype=np.float64).reshape(-1, 5 * B + C)
    batch = pred.shape[0]
    l_noobj = l_xy = l_wh = l_obj = l_cls = 0.0
    for i in range(p.shape[0]):
        conf = t[i, 4]
        if conf == 0:
            for b in range(B):
                l_noobj += (p[i, 4 + 5 * b] - t[i, 4 + 5 * b]) ** 2
        if conf > 0:
            l_cls += np.sum((p[i, 5 * B:] - t[i, 5 * B:]) ** 2)
            tx, ty, tw, th = t[i, 0] / S, t[i, 1] / S, t[i, 2], t[i, 3]
            tb = (tx - .5 * tw, ty - .5 * th, tx + .5 * tw, ty + .5 * th)
            best_iou, best_b = -np.inf, 0
            for b in range(B):
                px, py = p[i, 5 * b] / S, p[i, 5 * b + 1] / S
                pw, ph = p[i, 5 * b + 2], p[i, 5 * b + 3]
                pb = (px - .5 * pw, py - .5 * ph, px + .5 * pw, py + .5 * ph)
                whx = max(min(pb[2], tb[2]) - max(pb[0], tb[0]), 0.0)
                why = max(min(pb[3], tb[3]) - max(pb[1], tb[1]), 0.0)
                inter = whx * why
                a1 = (pb[2] - pb[0]) * (pb[3] - pb[1])
                a2 = (tb[2] - tb[0]) * (tb[3] - tb[1])
                iou = inter / (a1 + a2 - inter)
                if iou > best_iou:
                    best_iou, best_b = iou, b
            r = best_b
            l_xy += ((p[i, 5 * r] - t[i, 5 * r]) ** 2
                     + (p[i, 5 * r + 1] - t[i, 5 * r + 1]) ** 2)
            l_wh += ((np.sqrt(p[i, 5 * r + 2]) - np.sqrt(t[i, 5 * r + 2])) ** 2
                     + (np.sqrt(p[i, 5 * r + 3]) - np.sqrt(t[i, 5 * r + 3])) ** 2)
            l_obj += (p[i, 5 * r + 4] - best_iou) ** 2
    return (lc * (l_xy + l_wh) + l_obj + ln * l_noobj + l_cls) / float(batch)


if __name__ == "__main__":
    # Small YOLO-v1-style config: S=7 grid, B=2 boxes/cell, C=20 classes.
    batch, S, B, C = 2, 7, 2, 20
    NCH = 5 * B + C

    key = jax.random.PRNGKey(0)
    k1, k2, k3 = jax.random.split(key, 3)
    pred = jax.random.uniform(k1, (batch, S, S, NCH), minval=0.05, maxval=0.95)
    target = jax.random.uniform(k2, (batch, S, S, NCH), minval=0.05, maxval=0.95)
    # ~25% of cells contain an object; set every box's conf channel in target.
    obj_mask = jax.random.uniform(k3, (batch, S, S)) < 0.25
    conf = jnp.where(obj_mask, 1.0, 0.0)
    for b in range(B):
        target = target.at[..., 4 + 5 * b].set(conf)

    loss = yolo_loss(pred, target, S=S, B=B, C=C,
                     lambda_coord=5.0, lambda_noobj=0.5)
    loss = jax.block_until_ready(loss)

    ref = _reference_loss(np.asarray(pred), np.asarray(target), S, B, C)
    np.testing.assert_allclose(float(loss), ref, rtol=2e-3, atol=1e-4)

    print("KERNEL_OK")
</pallas_src>

<mosaic_0001>
module attributes {stable_mosaic.version = 11 : i64} {
  func.func @_yolo_kernel_fused(%arg0: i32, %arg1: i32, %arg2: memref<1024x30xf32, #tpu.memory_space<vmem>>, %arg3: memref<1024x30xf32, #tpu.memory_space<vmem>>, %arg4: memref<1x1xf32, #tpu.memory_space<smem>>, %arg5: memref<8x128xf32, #tpu.memory_space<vmem>>) attributes {dimension_semantics = [#tpu.dimension_semantics<parallel>, #tpu.dimension_semantics<arbitrary>], iteration_bounds = array<i64: 1, 1>, scalar_prefetch = 0 : i64, scratch_operands = 1 : i64, tpu.core_type = #tpu.core_type<tc>, window_params = [{transform_indices = @transform_0, window_bounds = array<i64: 1024, 30>}, {transform_indices = @transform_1, window_bounds = array<i64: 1024, 30>}, {transform_indices = @transform_2, window_bounds = array<i64: 1, 1>}]} {
    %c0 = arith.constant 0 : index
    %c0_0 = arith.constant 0 : index
    %0 = vector.load %arg2[%c0, %c0_0] : memref<1024x30xf32, #tpu.memory_space<vmem>>, vector<1024x30xf32>
    %1 = vector.shape_cast %0 : vector<1024x30xf32> to vector<8x128x30xf32>
    %c0_1 = arith.constant 0 : index
    %c0_2 = arith.constant 0 : index
    %2 = vector.load %arg3[%c0_1, %c0_2] : memref<1024x30xf32, #tpu.memory_space<vmem>>, vector<1024x30xf32>
    %3 = vector.shape_cast %2 : vector<1024x30xf32> to vector<8x128x30xf32>
    %4 = tpu.transpose %1, [0, 2, 1] : vector<8x128x30xf32> -> vector<8x30x128xf32>
    %5 = tpu.transpose %3, [0, 2, 1] : vector<8x128x30xf32> -> vector<8x30x128xf32>
    %c0_i32 = arith.constant 0 : i32
    %6 = arith.cmpi eq, %arg1, %c0_i32 : i32
    %7 = arith.extui %6 : i1 to i32
    %c0_i32_3 = arith.constant 0 : i32
    %8 = arith.cmpi ne, %7, %c0_i32_3 : i32
    scf.if %8 {
      %cst_53 = arith.constant 0.000000e+00 : f32
      %402 = vector.broadcast %cst_53 : f32 to vector<8x128xf32>
      %c0_54 = arith.constant 0 : index
      %c0_55 = arith.constant 0 : index
      %403 = vector.load %arg5[%c0_54, %c0_55] : memref<8x128xf32, #tpu.memory_space<vmem>>, vector<8x128xf32>
      tpu.vector_store %arg5[%c0_54, %c0_55], %402 {strides = array<i32>} : memref<8x128xf32, #tpu.memory_space<vmem>>, vector<8x128xf32>,
    } else {
    }
    %c1_i32 = arith.constant 1 : i32
    %9 = arith.muli %arg0, %c1_i32 : i32
    %10 = arith.addi %9, %arg1 : i32
    %c1024_i32 = arith.constant 1024 : i32
    %11 = arith.muli %10, %c1024_i32 : i32
    %12 = tpu.iota {dimensions = array<i32: 0>} : vector<8x128xi32>
    %13 = tpu.iota {dimensions = array<i32: 1>} : vector<8x128xi32>
    %c128_i32 = arith.constant 128 : i32
    %14 = vector.broadcast %c128_i32 : i32 to vector<8x128xi32>
    %15 = arith.muli %12, %14 : vector<8x128xi32>
    %16 = vector.broadcast %11 : i32 to vector<8x128xi32>
    %17 = arith.addi %16, %15 : vector<8x128xi32>
    %18 = arith.addi %17, %13 : vector<8x128xi32>
    %c98_i32 = arith.constant 98 : i32
    %19 = vector.broadcast %c98_i32 : i32 to vector<8x128xi32>
    %20 = arith.cmpi slt, %18, %19 : vector<8x128xi32>
    %c0_4 = arith.constant 0 : index
    %c0_5 = arith.constant 0 : index
    %21 = vector.load %arg5[%c0_4, %c0_5] : memref<8x128xf32, #tpu.memory_space<vmem>>, vector<8x128xf32>
    %22 = vector.extract_strided_slice %5 {offsets = [0, 4, 0], sizes = [8, 1, 128], strides = [1, 1, 1]} : vector<8x30x128xf32> to vector<8x1x128xf32>
    %23 = vector.shape_cast %22 : vector<8x1x128xf32> to vector<8x128xf32>
    %cst = arith.constant 0.000000e+00 : f32
    %24 = vector.broadcast %cst : f32 to vector<8x128xf32>
    %25 = arith.cmpf ogt, %23, %24 : vector<8x128xf32>
    %26 = arith.andi %20, %25 : vector<8x128xi1>
    %cst_6 = arith.constant 0.000000e+00 : f32
    %27 = vector.broadcast %cst_6 : f32 to vector<8x128xf32>
    %28 = arith.cmpf oeq, %23, %27 : vector<8x128xf32>
    %29 = arith.andi %20, %28 : vector<8x128xi1>
    %cst_7 = arith.constant 0.000000e+00 : f32
    %30 = vector.broadcast %cst_7 : f32 to vector<8x128xf32>
    %31 = vector.extract_strided_slice %4 {offsets = [0, 4, 0], sizes = [8, 1, 128], strides = [1, 1, 1]} : vector<8x30x128xf32> to vector<8x1x128xf32>
    %32 = vector.shape_cast %31 : vector<8x1x128xf32> to vector<8x128xf32>
    %33 = vector.extract_strided_slice %5 {offsets = [0, 4, 0], sizes = [8, 1, 128], strides = [1, 1, 1]} : vector<8x30x128xf32> to vector<8x1x128xf32>
    %34 = vector.shape_cast %33 : vector<8x1x128xf32> to vector<8x128xf32>
    %35 = arith.subf %32, %34 : vector<8x128xf32>
    %36 = arith.mulf %35, %35 : vector<8x128xf32>
    %37 = arith.addf %30, %36 : vector<8x128xf32>
    %38 = vector.extract_strided_slice %4 {offsets = [0, 9, 0], sizes = [8, 1, 128], strides = [1, 1, 1]} : vector<8x30x128xf32> to vector<8x1x128xf32>
    %39 = vector.shape_cast %38 : vector<8x1x128xf32> to vector<8x128xf32>
    %40 = vector.extract_strided_slice %5 {offsets = [0, 9, 0], sizes = [8, 1, 128], strides = [1, 1, 1]} : vector<8x30x128xf32> to vector<8x1x128xf32>
    %41 = vector.shape_cast %40 : vector<8x1x128xf32> to vector<8x128xf32>
    %42 = arith.subf %39, %41 : vector<8x128xf32>
    %43 = arith.mulf %42, %42 : vector<8x128xf32>
    %44 = arith.addf %37, %43 : vector<8x128xf32>
    %cst_8 = arith.constant 0.000000e+00 : f32
    %45 = vector.broadcast %cst_8 : f32 to vector<8x128xf32>
    %46 = arith.select %29, %44, %45 : vector<8x128xi1>, vector<8x128xf32>
    %cst_9 = arith.constant 0.000000e+00 : f32
    %47 = vector.broadcast %cst_9 : f32 to vector<8x128xf32>
    %48 = vector.extract_strided_slice %4 {offsets = [0, 10, 0], sizes = [8, 1, 128], strides = [1, 1, 1]} : vector<8x30x128xf32> to vector<8x1x128xf32>
    %49 = vector.shape_cast %48 : vector<8x1x128xf32> to vector<8x128xf32>
    %50 = vector.extract_strided_slice %5 {offsets = [0, 10, 0], sizes = [8, 1, 128], strides = [1, 1, 1]} : vector<8x30x128xf32> to vector<8x1x128xf32>
    %51 = vector.shape_cast %50 : vector<8x1x128xf32> to vector<8x128xf32>
    %52 = arith.subf %49, %51 : vector<8x128xf32>
    %53 = arith.mulf %52, %52 : vector<8x128xf32>
    %54 = arith.addf %47, %53 : vector<8x128xf32>
    %55 = vector.extract_strided_slice %4 {offsets = [0, 11, 0], sizes = [8, 1, 128], strides = [1, 1, 1]} : vector<8x30x128xf32> to vector<8x1x128xf32>
    %56 = vector.shape_cast %55 : vector<8x1x128xf32> to vector<8x128xf32>
    %57 = vector.extract_strided_slice %5 {offsets = [0, 11, 0], sizes = [8, 1, 128], strides = [1, 1, 1]} : vector<8x30x128xf32> to vector<8x1x128xf32>
    %58 = vector.shape_cast %57 : vector<8x1x128xf32> to vector<8x128xf32>
    %59 = arith.subf %56, %58 : vector<8x128xf32>
    %60 = arith.mulf %59, %59 : vector<8x128xf32>
    %61 = arith.addf %54, %60 : vector<8x128xf32>
    %62 = vector.extract_strided_slice %4 {offsets = [0, 12, 0], sizes = [8, 1, 128], strides = [1, 1, 1]} : vector<8x30x128xf32> to vector<8x1x128xf32>
    %63 = vector.shape_cast %62 : vector<8x1x128xf32> to vector<8x128xf32>
    %64 = vector.extract_strided_slice %5 {offsets = [0, 12, 0], sizes = [8, 1, 128], strides = [1, 1, 1]} : vector<8x30x128xf32> to vector<8x1x128xf32>
    %65 = vector.shape_cast %64 : vector<8x1x128xf32> to vector<8x128xf32>
    %66 = arith.subf %63, %65 : vector<8x128xf32>
    %67 = arith.mulf %66, %66 : vector<8x128xf32>
    %68 = arith.addf %61, %67 : vector<8x128xf32>
    %69 = vector.extract_strided_slice %4 {offsets = [0, 13, 0], sizes = [8, 1, 128], strides = [1, 1, 1]} : vector<8x30x128xf32> to vector<8x1x128xf32>
    %70 = vector.shape_cast %69 : vector<8x1x128xf32> to vector<8x128xf32>
    %71 = vector.extract_strided_slice %5 {offsets = [0, 13, 0], sizes = [8, 1, 128], strides = [1, 1, 1]} : vector<8x30x128xf32> to vector<8x1x128xf32>
    %72 = vector.shape_cast %71 : vector<8x1x128xf32> to vector<8x128xf32>
    %73 = arith.subf %70, %72 : vector<8x128xf32>
    %74 = arith.mulf %73, %73 : vector<8x128xf32>
    %75 = arith.addf %68, %74 : vector<8x128xf32>
    %76 = vector.extract_strided_slice %4 {offsets = [0, 14, 0], sizes = [8, 1, 128], strides = [1, 1, 1]} : vector<8x30x128xf32> to vector<8x1x128xf32>
    %77 = vector.shape_cast %76 : vector<8x1x128xf32> to vector<8x128xf32>
    %78 = vector.extract_strided_slice %5 {offsets = [0, 14, 0], sizes = [8, 1, 128], strides = [1, 1, 1]} : vector<8x30x128xf32> to vector<8x1x128xf32>
    %79 = vector.shape_cast %78 : vector<8x1x128xf32> to vector<8x128xf32>
    %80 = arith.subf %77, %79 : vector<8x128xf32>
    %81 = arith.mulf %80, %80 : vector<8x128xf32>
    %82 = arith.addf %75, %81 : vector<8x128xf32>
    %83 = vector.extract_strided_slice %4 {offsets = [0, 15, 0], sizes = [8, 1, 128], strides = [1, 1, 1]} : vector<8x30x128xf32> to vector<8x1x128xf32>
    %84 = vector.shape_cast %83 : vector<8x1x128xf32> to vector<8x128xf32>
    %85 = vector.extract_strided_slice %5 {offsets = [0, 15, 0], sizes = [8, 1, 128], strides = [1, 1, 1]} : vector<8x30x128xf32> to vector<8x1x128xf32>
    %86 = vector.shape_cast %85 : vector<8x1x128xf32> to vector<8x128xf32>
    %87 = arith.subf %84, %86 : vector<8x128xf32>
    %88 = arith.mulf %87, %87 : vector<8x128xf32>
    %89 = arith.addf %82, %88 : vector<8x128xf32>
    %90 = vector.extract_strided_slice %4 {offsets = [0, 16, 0], sizes = [8, 1, 128], strides = [1, 1, 1]} : vector<8x30x128xf32> to vector<8x1x128xf32>
    %91 = vector.shape_cast %90 : vector<8x1x128xf32> to vector<8x128xf32>
    %92 = vector.extract_strided_slice %5 {offsets = [0, 16, 0], sizes = [8, 1, 128], strides = [1, 1, 1]} : vector<8x30x128xf32> to vector<8x1x128xf32>
    %93 = vector.shape_cast %92 : vector<8x1x128xf32> to vector<8x128xf32>
    %94 = arith.subf %91, %93 : vector<8x128xf32>
    %95 = arith.mulf %94, %94 : vector<8x128xf32>
    %96 = arith.addf %89, %95 : vector<8x128xf32>
    %97 = vector.extract_strided_slice %4 {offsets = [0, 17, 0], sizes = [8, 1, 128], strides = [1, 1, 1]} : vector<8x30x128xf32> to vector<8x1x128xf32>
    %98 = vector.shape_cast %97 : vector<8x1x128xf32> to vector<8x128xf32>
    %99 = vector.extract_strided_slice %5 {offsets = [0, 17, 0], sizes = [8, 1, 128], strides = [1, 1, 1]} : vector<8x30x128xf32> to vector<8x1x128xf32>
    %100 = vector.shape_cast %99 : vector<8x1x128xf32> to vector<8x128xf32>
    %101 = arith.subf %98, %100 : vector<8x128xf32>
    %102 = arith.mulf %101, %101 : vector<8x128xf32>
    %103 = arith.addf %96, %102 : vector<8x128xf32>
    %104 = vector.extract_strided_slice %4 {offsets = [0, 18, 0], sizes = [8, 1, 128], strides = [1, 1, 1]} : vector<8x30x128xf32> to vector<8x1x128xf32>
    %105 = vector.shape_cast %104 : vector<8x1x128xf32> to vector<8x128xf32>
    %106 = vector.extract_strided_slice %5 {offsets = [0, 18, 0], sizes = [8, 1, 128], strides = [1, 1, 1]} : vector<8x30x128xf32> to vector<8x1x128xf32>
    %107 = vector.shape_cast %106 : vector<8x1x128xf32> to vector<8x128xf32>
    %108 = arith.subf %105, %107 : vector<8x128xf32>
    %109 = arith.mulf %108, %108 : vector<8x128xf32>
    %110 = arith.addf %103, %109 : vector<8x128xf32>
    %111 = vector.extract_strided_slice %4 {offsets = [0, 19, 0], sizes = [8, 1, 128], strides = [1, 1, 1]} : vector<8x30x128xf32> to vector<8x1x128xf32>
    %112 = vector.shape_cast %111 : vector<8x1x128xf32> to vector<8x128xf32>
    %113 = vector.extract_strided_slice %5 {offsets = [0, 19, 0], sizes = [8, 1, 128], strides = [1, 1, 1]} : vector<8x30x128xf32> to vector<8x1x128xf32>
    %114 = vector.shape_cast %113 : vector<8x1x128xf32> to vector<8x128xf32>
    %115 = arith.subf %112, %114 : vector<8x128xf32>
    %116 = arith.mulf %115, %115 : vector<8x128xf32>
    %117 = arith.addf %110, %116 : vector<8x128xf32>
    %118 = vector.extract_strided_slice %4 {offsets = [0, 20, 0], sizes = [8, 1, 128], strides = [1, 1, 1]} : vector<8x30x128xf32> to vector<8x1x128xf32>
    %119 = vector.shape_cast %118 : vector<8x1x128xf32> to vector<8x128xf32>
    %120 = vector.extract_strided_slice %5 {offsets = [0, 20, 0], sizes = [8, 1, 128], strides = [1, 1, 1]} : vector<8x30x128xf32> to vector<8x1x128xf32>
    %121 = vector.shape_cast %120 : vector<8x1x128xf32> to vector<8x128xf32>
    %122 = arith.subf %119, %121 : vector<8x128xf32>
    %123 = arith.mulf %122, %122 : vector<8x128xf32>
    %124 = arith.addf %117, %123 : vector<8x128xf32>
    %125 = vector.extract_strided_slice %4 {offsets = [0, 21, 0], sizes = [8, 1, 128], strides = [1, 1, 1]} : vector<8x30x128xf32> to vector<8x1x128xf32>
    %126 = vector.shape_cast %125 : vector<8x1x128xf32> to vector<8x128xf32>
    %127 = vector.extract_strided_slice %5 {offsets = [0, 21, 0], sizes = [8, 1, 128], strides = [1, 1, 1]} : vector<8x30x128xf32> to vector<8x1x128xf32>
    %128 = vector.shape_cast %127 : vector<8x1x128xf32> to vector<8x128xf32>
    %129 = arith.subf %126, %128 : vector<8x128xf32>
    %130 = arith.mulf %129, %129 : vector<8x128xf32>
    %131 = arith.addf %124, %130 : vector<8x128xf32>
    %132 = vector.extract_strided_slice %4 {offsets = [0, 22, 0], sizes = [8, 1, 128], strides = [1, 1, 1]} : vector<8x30x128xf32> to vector<8x1x128xf32>
    %133 = vector.shape_cast %132 : vector<8x1x128xf32> to vector<8x128xf32>
    %134 = vector.extract_strided_slice %5 {offsets = [0, 22, 0], sizes = [8, 1, 128], strides = [1, 1, 1]} : vector<8x30x128xf32> to vector<8x1x128xf32>
    %135 = vector.shape_cast %134 : vector<8x1x128xf32> to vector<8x128xf32>
    %136 = arith.subf %133, %135 : vector<8x128xf32>
    %137 = arith.mulf %136, %136 : vector<8x128xf32>
    %138 = arith.addf %131, %137 : vector<8x128xf32>
    %139 = vector.extract_strided_slice %4 {offsets = [0, 23, 0], sizes = [8, 1, 128], strides = [1, 1, 1]} : vector<8x30x128xf32> to vector<8x1x128xf32>
    %140 = vector.shape_cast %139 : vector<8x1x128xf32> to vector<8x128xf32>
    %141 = vector.extract_strided_slice %5 {offsets = [0, 23, 0], sizes = [8, 1, 128], strides = [1, 1, 1]} : vector<8x30x128xf32> to vector<8x1x128xf32>
    %142 = vector.shape_cast %141 : vector<8x1x128xf32> to vector<8x128xf32>
    %143 = arith.subf %140, %142 : vector<8x128xf32>
    %144 = arith.mulf %143, %143 : vector<8x128xf32>
    %145 = arith.addf %138, %144 : vector<8x128xf32>
    %146 = vector.extract_strided_slice %4 {offsets = [0, 24, 0], sizes = [8, 1, 128], strides = [1, 1, 1]} : vector<8x30x128xf32> to vector<8x1x128xf32>
    %147 = vector.shape_cast %146 : vector<8x1x128xf32> to vector<8x128xf32>
    %148 = vector.extract_strided_slice %5 {offsets = [0, 24, 0], sizes = [8, 1, 128], strides = [1, 1, 1]} : vector<8x30x128xf32> to vector<8x1x128xf32>
    %149 = vector.shape_cast %148 : vector<8x1x128xf32> to vector<8x128xf32>
    %150 = arith.subf %147, %149 : vector<8x128xf32>
    %151 = arith.mulf %150, %150 : vector<8x128xf32>
    %152 = arith.addf %145, %151 : vector<8x128xf32>
    %153 = vector.extract_strided_slice %4 {offsets = [0, 25, 0], sizes = [8, 1, 128], strides = [1, 1, 1]} : vector<8x30x128xf32> to vector<8x1x128xf32>
    %154 = vector.shape_cast %153 : vector<8x1x128xf32> to vector<8x128xf32>
    %155 = vector.extract_strided_slice %5 {offsets = [0, 25, 0], sizes = [8, 1, 128], strides = [1, 1, 1]} : vector<8x30x128xf32> to vector<8x1x128xf32>
    %156 = vector.shape_cast %155 : vector<8x1x128xf32> to vector<8x128xf32>
    %157 = arith.subf %154, %156 : vector<8x128xf32>
    %158 = arith.mulf %157, %157 : vector<8x128xf32>
    %159 = arith.addf %152, %158 : vector<8x128xf32>
    %160 = vector.extract_strided_slice %4 {offsets = [0, 26, 0], sizes = [8, 1, 128], strides = [1, 1, 1]} : vector<8x30x128xf32> to vector<8x1x128xf32>
    %161 = vector.shape_cast %160 : vector<8x1x128xf32> to vector<8x128xf32>
    %162 = vector.extract_strided_slice %5 {offsets = [0, 26, 0], sizes = [8, 1, 128], strides = [1, 1, 1]} : vector<8x30x128xf32> to vector<8x1x128xf32>
    %163 = vector.shape_cast %162 : vector<8x1x128xf32> to vector<8x128xf32>
    %164 = arith.subf %161, %163 : vector<8x128xf32>
    %165 = arith.mulf %164, %164 : vector<8x128xf32>
    %166 = arith.addf %159, %165 : vector<8x128xf32>
    %167 = vector.extract_strided_slice %4 {offsets = [0, 27, 0], sizes = [8, 1, 128], strides = [1, 1, 1]} : vector<8x30x128xf32> to vector<8x1x128xf32>
    %168 = vector.shape_cast %167 : vector<8x1x128xf32> to vector<8x128xf32>
    %169 = vector.extract_strided_slice %5 {offsets = [0, 27, 0], sizes = [8, 1, 128], strides = [1, 1, 1]} : vector<8x30x128xf32> to vector<8x1x128xf32>
    %170 = vector.shape_cast %169 : vector<8x1x128xf32> to vector<8x128xf32>
    %171 = arith.subf %168, %170 : vector<8x128xf32>
    %172 = arith.mulf %171, %171 : vector<8x128xf32>
    %173 = arith.addf %166, %172 : vector<8x128xf32>
    %174 = vector.extract_strided_slice %4 {offsets = [0, 28, 0], sizes = [8, 1, 128], strides = [1, 1, 1]} : vector<8x30x128xf32> to vector<8x1x128xf32>
    %175 = vector.shape_cast %174 : vector<8x1x128xf32> to vector<8x128xf32>
    %176 = vector.extract_strided_slice %5 {offsets = [0, 28, 0], sizes = [8, 1, 128], strides = [1, 1, 1]} : vector<8x30x128xf32> to vector<8x1x128xf32>
    %177 = vector.shape_cast %176 : vector<8x1x128xf32> to vector<8x128xf32>
    %178 = arith.subf %175, %177 : vector<8x128xf32>
    %179 = arith.mulf %178, %178 : vector<8x128xf32>
    %180 = arith.addf %173, %179 : vector<8x128xf32>
    %181 = vector.extract_strided_slice %4 {offsets = [0, 29, 0], sizes = [8, 1, 128], strides = [1, 1, 1]} : vector<8x30x128xf32> to vector<8x1x128xf32>
    %182 = vector.shape_cast %181 : vector<8x1x128xf32> to vector<8x128xf32>
    %183 = vector.extract_strided_slice %5 {offsets = [0, 29, 0], sizes = [8, 1, 128], strides = [1, 1, 1]} : vector<8x30x128xf32> to vector<8x1x128xf32>
    %184 = vector.shape_cast %183 : vector<8x1x128xf32> to vector<8x128xf32>
    %185 = arith.subf %182, %184 : vector<8x128xf32>
    %186 = arith.mulf %185, %185 : vector<8x128xf32>
    %187 = arith.addf %180, %186 : vector<8x128xf32>
    %cst_10 = arith.constant 0.000000e+00 : f32
    %188 = vector.broadcast %cst_10 : f32 to vector<8x128xf32>
    %189 = arith.select %26, %187, %188 : vector<8x128xi1>, vector<8x128xf32>
    %190 = vector.extract_strided_slice %5 {offsets = [0, 0, 0], sizes = [8, 1, 128], strides = [1, 1, 1]} : vector<8x30x128xf32> to vector<8x1x128xf32>
    %191 = vector.shape_cast %190 : vector<8x1x128xf32> to vector<8x128xf32>
    %cst_11 = arith.constant 0.142857149 : f32
    %192 = vector.broadcast %cst_11 : f32 to vector<8x128xf32>
    %193 = arith.mulf %191, %192 : vector<8x128xf32>
    %194 = vector.extract_strided_slice %5 {offsets = [0, 1, 0], sizes = [8, 1, 128], strides = [1, 1, 1]} : vector<8x30x128xf32> to vector<8x1x128xf32>
    %195 = vector.shape_cast %194 : vector<8x1x128xf32> to vector<8x128xf32>
    %cst_12 = arith.constant 0.142857149 : f32
    %196 = vector.broadcast %cst_12 : f32 to vector<8x128xf32>
    %197 = arith.mulf %195, %196 : vector<8x128xf32>
    %198 = vector.extract_strided_slice %5 {offsets = [0, 2, 0], sizes = [8, 1, 128], strides = [1, 1, 1]} : vector<8x30x128xf32> to vector<8x1x128xf32>
    %199 = vector.shape_cast %198 : vector<8x1x128xf32> to vector<8x128xf32>
    %200 = vector.extract_strided_slice %5 {offsets = [0, 3, 0], sizes = [8, 1, 128], strides = [1, 1, 1]} : vector<8x30x128xf32> to vector<8x1x128xf32>
    %201 = vector.shape_cast %200 : vector<8x1x128xf32> to vector<8x128xf32>
    %cst_13 = arith.constant 5.000000e-01 : f32
    %202 = vector.broadcast %cst_13 : f32 to vector<8x128xf32>
    %203 = arith.mulf %202, %199 : vector<8x128xf32>
    %204 = arith.subf %193, %203 : vector<8x128xf32>
    %cst_14 = arith.constant 5.000000e-01 : f32
    %205 = vector.broadcast %cst_14 : f32 to vector<8x128xf32>
    %206 = arith.mulf %205, %201 : vector<8x128xf32>
    %207 = arith.subf %197, %206 : vector<8x128xf32>
    %cst_15 = arith.constant 5.000000e-01 : f32
    %208 = vector.broadcast %cst_15 : f32 to vector<8x128xf32>
    %209 = arith.mulf %208, %199 : vector<8x128xf32>
    %210 = arith.addf %193, %209 : vector<8x128xf32>
    %cst_16 = arith.constant 5.000000e-01 : f32
    %211 = vector.broadcast %cst_16 : f32 to vector<8x128xf32>
    %212 = arith.mulf %211, %201 : vector<8x128xf32>
    %213 = arith.addf %197, %212 : vector<8x128xf32>
    %214 = arith.subf %210, %204 : vector<8x128xf32>
    %215 = arith.subf %213, %207 : vector<8x128xf32>
    %216 = arith.mulf %214, %215 : vector<8x128xf32>
    %217 = vector.extract_strided_slice %4 {offsets = [0, 0, 0], sizes = [8, 1, 128], strides = [1, 1, 1]} : vector<8x30x128xf32> to vector<8x1x128xf32>
    %218 = vector.shape_cast %217 : vector<8x1x128xf32> to vector<8x128xf32>
    %cst_17 = arith.constant 0.142857149 : f32
    %219 = vector.broadcast %cst_17 : f32 to vector<8x128xf32>
    %220 = arith.mulf %218, %219 : vector<8x128xf32>
    %221 = vector.extract_strided_slice %4 {offsets = [0, 1, 0], sizes = [8, 1, 128], strides = [1, 1, 1]} : vector<8x30x128xf32> to vector<8x1x128xf32>
    %222 = vector.shape_cast %221 : vector<8x1x128xf32> to vector<8x128xf32>
    %cst_18 = arith.constant 0.142857149 : f32
    %223 = vector.broadcast %cst_18 : f32 to vector<8x128xf32>
    %224 = arith.mulf %222, %223 : vector<8x128xf32>
    %225 = vector.extract_strided_slice %4 {offsets = [0, 2, 0], sizes = [8, 1, 128], strides = [1, 1, 1]} : vector<8x30x128xf32> to vector<8x1x128xf32>
    %226 = vector.shape_cast %225 : vector<8x1x128xf32> to vector<8x128xf32>
    %227 = vector.extract_strided_slice %4 {offsets = [0, 3, 0], sizes = [8, 1, 128], strides = [1, 1, 1]} : vector<8x30x128xf32> to vector<8x1x128xf32>
    %228 = vector.shape_cast %227 : vector<8x1x128xf32> to vector<8x128xf32>
    %cst_19 = arith.constant 5.000000e-01 : f32
    %229 = vector.broadcast %cst_19 : f32 to vector<8x128xf32>
    %230 = arith.mulf %229, %226 : vector<8x128xf32>
    %231 = arith.subf %220, %230 : vector<8x128xf32>
    %cst_20 = arith.constant 5.000000e-01 : f32
    %232 = vector.broadcast %cst_20 : f32 to vector<8x128xf32>
    %233 = arith.mulf %232, %228 : vector<8x128xf32>
    %234 = arith.subf %224, %233 : vector<8x128xf32>
    %cst_21 = arith.constant 5.000000e-01 : f32
    %235 = vector.broadcast %cst_21 : f32 to vector<8x128xf32>
    %236 = arith.mulf %235, %226 : vector<8x128xf32>
    %237 = arith.addf %220, %236 : vector<8x128xf32>
    %cst_22 = arith.constant 5.000000e-01 : f32
    %238 = vector.broadcast %cst_22 : f32 to vector<8x128xf32>
    %239 = arith.mulf %238, %228 : vector<8x128xf32>
    %240 = arith.addf %224, %239 : vector<8x128xf32>
    %241 = arith.subf %237, %231 : vector<8x128xf32>
    %242 = arith.subf %240, %234 : vector<8x128xf32>
    %243 = arith.mulf %241, %242 : vector<8x128xf32>
    %244 = arith.minimumf %237, %210 : vector<8x128xf32>
    %245 = arith.maximumf %231, %204 : vector<8x128xf32>
    %246 = arith.subf %244, %245 : vector<8x128xf32>
    %cst_23 = arith.constant 0.000000e+00 : f32
    %247 = vector.broadcast %cst_23 : f32 to vector<8x128xf32>
    %248 = arith.maximumf %246, %247 : vector<8x128xf32>
    %249 = arith.minimumf %240, %213 : vector<8x128xf32>
    %250 = arith.maximumf %234, %207 : vector<8x128xf32>
    %251 = arith.subf %249, %250 : vector<8x128xf32>
    %cst_24 = arith.constant 0.000000e+00 : f32
    %252 = vector.broadcast %cst_24 : f32 to vector<8x128xf32>
    %253 = arith.maximumf %251, %252 : vector<8x128xf32>
    %254 = arith.mulf %248, %253 : vector<8x128xf32>
    %255 = arith.addf %243, %216 : vector<8x128xf32>
    %256 = arith.subf %255, %254 : vector<8x128xf32>
    %cst_25 = arith.constant 9.99999996E-13 : f32
    %257 = vector.broadcast %cst_25 : f32 to vector<8x128xf32>
    %258 = arith.maximumf %256, %257 : vector<8x128xf32>
    %259 = arith.divf %254, %258 : vector<8x128xf32>
    %260 = vector.extract_strided_slice %4 {offsets = [0, 5, 0], sizes = [8, 1, 128], strides = [1, 1, 1]} : vector<8x30x128xf32> to vector<8x1x128xf32>
    %261 = vector.shape_cast %260 : vector<8x1x128xf32> to vector<8x128xf32>
    %cst_26 = arith.constant 0.142857149 : f32
    %262 = vector.broadcast %cst_26 : f32 to vector<8x128xf32>
    %263 = arith.mulf %261, %262 : vector<8x128xf32>
    %264 = vector.extract_strided_slice %4 {offsets = [0, 6, 0], sizes = [8, 1, 128], strides = [1, 1, 1]} : vector<8x30x128xf32> to vector<8x1x128xf32>
    %265 = vector.shape_cast %264 : vector<8x1x128xf32> to vector<8x128xf32>
    %cst_27 = arith.constant 0.142857149 : f32
    %266 = vector.broadcast %cst_27 : f32 to vector<8x128xf32>
    %267 = arith.mulf %265, %266 : vector<8x128xf32>
    %268 = vector.extract_strided_slice %4 {offsets = [0, 7, 0], sizes = [8, 1, 128], strides = [1, 1, 1]} : vector<8x30x128xf32> to vector<8x1x128xf32>
    %269 = vector.shape_cast %268 : vector<8x1x128xf32> to vector<8x128xf32>
    %270 = vector.extract_strided_slice %4 {offsets = [0, 8, 0], sizes = [8, 1, 128], strides = [1, 1, 1]} : vector<8x30x128xf32> to vector<8x1x128xf32>
    %271 = vector.shape_cast %270 : vector<8x1x128xf32> to vector<8x128xf32>
    %cst_28 = arith.constant 5.000000e-01 : f32
    %272 = vector.broadcast %cst_28 : f32 to vector<8x128xf32>
    %273 = arith.mulf %272, %269 : vector<8x128xf32>
    %274 = arith.subf %263, %273 : vector<8x128xf32>
    %cst_29 = arith.constant 5.000000e-01 : f32
    %275 = vector.broadcast %cst_29 : f32 to vector<8x128xf32>
    %276 = arith.mulf %275, %271 : vector<8x128xf32>
    %277 = arith.subf %267, %276 : vector<8x128xf32>
    %cst_30 = arith.constant 5.000000e-01 : f32
    %278 = vector.broadcast %cst_30 : f32 to vector<8x128xf32>
    %279 = arith.mulf %278, %269 : vector<8x128xf32>
    %280 = arith.addf %263, %279 : vector<8x128xf32>
    %cst_31 = arith.constant 5.000000e-01 : f32
    %281 = vector.broadcast %cst_31 : f32 to vector<8x128xf32>
    %282 = arith.mulf %281, %271 : vector<8x128xf32>
    %283 = arith.addf %267, %282 : vector<8x128xf32>
    %284 = arith.subf %280, %274 : vector<8x128xf32>
    %285 = arith.subf %283, %277 : vector<8x128xf32>
    %286 = arith.mulf %284, %285 : vector<8x128xf32>
    %287 = arith.minimumf %280, %210 : vector<8x128xf32>
    %288 = arith.maximumf %274, %204 : vector<8x128xf32>
    %289 = arith.subf %287, %288 : vector<8x128xf32>
    %cst_32 = arith.constant 0.000000e+00 : f32
    %290 = vector.broadcast %cst_32 : f32 to vector<8x128xf32>
    %291 = arith.maximumf %289, %290 : vector<8x128xf32>
    %292 = arith.minimumf %283, %213 : vector<8x128xf32>
    %293 = arith.maximumf %277, %207 : vector<8x128xf32>
    %294 = arith.subf %292, %293 : vector<8x128xf32>
    %cst_33 = arith.constant 0.000000e+00 : f32
    %295 = vector.broadcast %cst_33 : f32 to vector<8x128xf32>
    %296 = arith.maximumf %294, %295 : vector<8x128xf32>
    %297 = arith.mulf %291, %296 : vector<8x128xf32>
    %298 = arith.addf %286, %216 : vector<8x128xf32>
    %299 = arith.subf %298, %297 : vector<8x128xf32>
    %cst_34 = arith.constant 9.99999996E-13 : f32
    %300 = vector.broadcast %cst_34 : f32 to vector<8x128xf32>
    %301 = arith.maximumf %299, %300 : vector<8x128xf32>
    %302 = arith.divf %297, %301 : vector<8x128xf32>
    %c0_i32_35 = arith.constant 0 : i32
    %303 = vector.broadcast %c0_i32_35 : i32 to vector<8x128xi32>
    %304 = arith.cmpf ogt, %302, %259 : vector<8x128xf32>
    %305 = arith.select %304, %302, %259 : vector<8x128xi1>, vector<8x128xf32>
    %c1_i32_36 = arith.constant 1 : i32
    %306 = vector.broadcast %c1_i32_36 : i32 to vector<8x128xi32>
    %307 = arith.select %304, %306, %303 : vector<8x128xi1>, vector<8x128xi32>
    %308 = vector.extract_strided_slice %4 {offsets = [0, 0, 0], sizes = [8, 1, 128], strides = [1, 1, 1]} : vector<8x30x128xf32> to vector<8x1x128xf32>
    %309 = vector.shape_cast %308 : vector<8x1x128xf32> to vector<8x128xf32>
    %c1_i32_37 = arith.constant 1 : i32
    %310 = vector.broadcast %c1_i32_37 : i32 to vector<8x128xi32>
    %311 = arith.cmpi eq, %307, %310 : vector<8x128xi32>
    %312 = vector.extract_strided_slice %4 {offsets = [0, 5, 0], sizes = [8, 1, 128], strides = [1, 1, 1]} : vector<8x30x128xf32> to vector<8x1x128xf32>
    %313 = vector.shape_cast %312 : vector<8x1x128xf32> to vector<8x128xf32>
    %314 = arith.select %311, %313, %309 : vector<8x128xi1>, vector<8x128xf32>
    %315 = vector.extract_strided_slice %4 {offsets = [0, 1, 0], sizes = [8, 1, 128], strides = [1, 1, 1]} : vector<8x30x128xf32> to vector<8x1x128xf32>
    %316 = vector.shape_cast %315 : vector<8x1x128xf32> to vector<8x128xf32>
    %c1_i32_38 = arith.constant 1 : i32
    %317 = vector.broadcast %c1_i32_38 : i32 to vector<8x128xi32>
    %318 = arith.cmpi eq, %307, %317 : vector<8x128xi32>
    %319 = vector.extract_strided_slice %4 {offsets = [0, 6, 0], sizes = [8, 1, 128], strides = [1, 1, 1]} : vector<8x30x128xf32> to vector<8x1x128xf32>
    %320 = vector.shape_cast %319 : vector<8x1x128xf32> to vector<8x128xf32>
    %321 = arith.select %318, %320, %316 : vector<8x128xi1>, vector<8x128xf32>
    %322 = vector.extract_strided_slice %4 {offsets = [0, 2, 0], sizes = [8, 1, 128], strides = [1, 1, 1]} : vector<8x30x128xf32> to vector<8x1x128xf32>
    %323 = vector.shape_cast %322 : vector<8x1x128xf32> to vector<8x128xf32>
    %c1_i32_39 = arith.constant 1 : i32
    %324 = vector.broadcast %c1_i32_39 : i32 to vector<8x128xi32>
    %325 = arith.cmpi eq, %307, %324 : vector<8x128xi32>
    %326 = vector.extract_strided_slice %4 {offsets = [0, 7, 0], sizes = [8, 1, 128], strides = [1, 1, 1]} : vector<8x30x128xf32> to vector<8x1x128xf32>
    %327 = vector.shape_cast %326 : vector<8x1x128xf32> to vector<8x128xf32>
    %328 = arith.select %325, %327, %323 : vector<8x128xi1>, vector<8x128xf32>
    %329 = vector.extract_strided_slice %4 {offsets = [0, 3, 0], sizes = [8, 1, 128], strides = [1, 1, 1]} : vector<8x30x128xf32> to vector<8x1x128xf32>
    %330 = vector.shape_cast %329 : vector<8x1x128xf32> to vector<8x128xf32>
    %c1_i32_40 = arith.constant 1 : i32
    %331 = vector.broadcast %c1_i32_40 : i32 to vector<8x128xi32>
    %332 = arith.cmpi eq, %307, %331 : vector<8x128xi32>
    %333 = vector.extract_strided_slice %4 {offsets = [0, 8, 0], sizes = [8, 1, 128], strides = [1, 1, 1]} : vector<8x30x128xf32> to vector<8x1x128xf32>
    %334 = vector.shape_cast %333 : vector<8x1x128xf32> to vector<8x128xf32>
    %335 = arith.select %332, %334, %330 : vector<8x128xi1>, vector<8x128xf32>
    %336 = vector.extract_strided_slice %4 {offsets = [0, 4, 0], sizes = [8, 1, 128], strides = [1, 1, 1]} : vector<8x30x128xf32> to vector<8x1x128xf32>
    %337 = vector.shape_cast %336 : vector<8x1x128xf32> to vector<8x128xf32>
    %c1_i32_41 = arith.constant 1 : i32
    %338 = vector.broadcast %c1_i32_41 : i32 to vector<8x128xi32>
    %339 = arith.cmpi eq, %307, %338 : vector<8x128xi32>
    %340 = vector.extract_strided_slice %4 {offsets = [0, 9, 0], sizes = [8, 1, 128], strides = [1, 1, 1]} : vector<8x30x128xf32> to vector<8x1x128xf32>
    %341 = vector.shape_cast %340 : vector<8x1x128xf32> to vector<8x128xf32>
    %342 = arith.select %339, %341, %337 : vector<8x128xi1>, vector<8x128xf32>
    %343 = vector.extract_strided_slice %5 {offsets = [0, 0, 0], sizes = [8, 1, 128], strides = [1, 1, 1]} : vector<8x30x128xf32> to vector<8x1x128xf32>
    %344 = vector.shape_cast %343 : vector<8x1x128xf32> to vector<8x128xf32>
    %c1_i32_42 = arith.constant 1 : i32
    %345 = vector.broadcast %c1_i32_42 : i32 to vector<8x128xi32>
    %346 = arith.cmpi eq, %307, %345 : vector<8x128xi32>
    %347 = vector.extract_strided_slice %5 {offsets = [0, 5, 0], sizes = [8, 1, 128], strides = [1, 1, 1]} : vector<8x30x128xf32> to vector<8x1x128xf32>
    %348 = vector.shape_cast %347 : vector<8x1x128xf32> to vector<8x128xf32>
    %349 = arith.select %346, %348, %344 : vector<8x128xi1>, vector<8x128xf32>
    %350 = vector.extract_strided_slice %5 {offsets = [0, 1, 0], sizes = [8, 1, 128], strides = [1, 1, 1]} : vector<8x30x128xf32> to vector<8x1x128xf32>
    %351 = vector.shape_cast %350 : vector<8x1x128xf32> to vector<8x128xf32>
    %c1_i32_43 = arith.constant 1 : i32
    %352 = vector.broadcast %c1_i32_43 : i32 to vector<8x128xi32>
    %353 = arith.cmpi eq, %307, %352 : vector<8x128xi32>
    %354 = vector.extract_strided_slice %5 {offsets = [0, 6, 0], sizes = [8, 1, 128], strides = [1, 1, 1]} : vector<8x30x128xf32> to vector<8x1x128xf32>
    %355 = vector.shape_cast %354 : vector<8x1x128xf32> to vector<8x128xf32>
    %356 = arith.select %353, %355, %351 : vector<8x128xi1>, vector<8x128xf32>
    %357 = vector.extract_strided_slice %5 {offsets = [0, 2, 0], sizes = [8, 1, 128], strides = [1, 1, 1]} : vector<8x30x128xf32> to vector<8x1x128xf32>
    %358 = vector.shape_cast %357 : vector<8x1x128xf32> to vector<8x128xf32>
    %c1_i32_44 = arith.constant 1 : i32
    %359 = vector.broadcast %c1_i32_44 : i32 to vector<8x128xi32>
    %360 = arith.cmpi eq, %307, %359 : vector<8x128xi32>
    %361 = vector.extract_strided_slice %5 {offsets = [0, 7, 0], sizes = [8, 1, 128], strides = [1, 1, 1]} : vector<8x30x128xf32> to vector<8x1x128xf32>
    %362 = vector.shape_cast %361 : vector<8x1x128xf32> to vector<8x128xf32>
    %363 = arith.select %360, %362, %358 : vector<8x128xi1>, vector<8x128xf32>
    %364 = vector.extract_strided_slice %5 {offsets = [0, 3, 0], sizes = [8, 1, 128], strides = [1, 1, 1]} : vector<8x30x128xf32> to vector<8x1x128xf32>
    %365 = vector.shape_cast %364 : vector<8x1x128xf32> to vector<8x128xf32>
    %c1_i32_45 = arith.constant 1 : i32
    %366 = vector.broadcast %c1_i32_45 : i32 to vector<8x128xi32>
    %367 = arith.cmpi eq, %307, %366 : vector<8x128xi32>
    %368 = vector.extract_strided_slice %5 {offsets = [0, 8, 0], sizes = [8, 1, 128], strides = [1, 1, 1]} : vector<8x30x128xf32> to vector<8x1x128xf32>
    %369 = vector.shape_cast %368 : vector<8x1x128xf32> to vector<8x128xf32>
    %370 = arith.select %367, %369, %365 : vector<8x128xi1>, vector<8x128xf32>
    %371 = arith.subf %314, %349 : vector<8x128xf32>
    %372 = arith.mulf %371, %371 : vector<8x128xf32>
    %373 = arith.subf %321, %356 : vector<8x128xf32>
    %374 = arith.mulf %373, %373 : vector<8x128xf32>
    %375 = arith.addf %372, %374 : vector<8x128xf32>
    %376 = math.sqrt %328 : vector<8x128xf32>
    %377 = math.sqrt %363 : vector<8x128xf32>
    %378 = arith.subf %376, %377 : vector<8x128xf32>
    %379 = arith.mulf %378, %378 : vector<8x128xf32>
    %380 = math.sqrt %335 : vector<8x128xf32>
    %381 = math.sqrt %370 : vector<8x128xf32>
    %382 = arith.subf %380, %381 : vector<8x128xf32>
    %383 = arith.mulf %382, %382 : vector<8x128xf32>
    %384 = arith.addf %379, %383 : vector<8x128xf32>
    %385 = arith.subf %342, %305 : vector<8x128xf32>
    %386 = arith.mulf %385, %385 : vector<8x128xf32>
    %387 = arith.addf %375, %384 : vector<8x128xf32>
    %cst_46 = arith.constant 5.000000e+00 : f32
    %388 = vector.broadcast %cst_46 : f32 to vector<8x128xf32>
    %389 = arith.mulf %388, %387 : vector<8x128xf32>
    %390 = arith.addf %389, %386 : vector<8x128xf32>
    %cst_47 = arith.constant 0.000000e+00 : f32
    %391 = vector.broadcast %cst_47 : f32 to vector<8x128xf32>
    %392 = arith.select %26, %390, %391 : vector<8x128xi1>, vector<8x128xf32>
    %cst_48 = arith.constant 5.000000e-01 : f32
    %393 = vector.broadcast %cst_48 : f32 to vector<8x128xf32>
    %394 = arith.mulf %393, %46 : vector<8x128xf32>
    %395 = arith.addf %392, %394 : vector<8x128xf32>
    %396 = arith.addf %395, %189 : vector<8x128xf32>
    %397 = arith.addf %21, %396 : vector<8x128xf32>
    %c0_49 = arith.constant 0 : index
    %c0_50 = arith.constant 0 : index
    %398 = vector.load %arg5[%c0_49, %c0_50] : memref<8x128xf32, #tpu.memory_space<vmem>>, vector<8x128xf32>
    tpu.vector_store %arg5[%c0_49, %c0_50], %397 {strides = array<i32>} : memref<8x128xf32, #tpu.memory_space<vmem>>, vector<8x128xf32>,
    %c0_i32_51 = arith.constant 0 : i32
    %399 = arith.cmpi eq, %arg1, %c0_i32_51 : i32
    %400 = arith.extui %399 : i1 to i32
    %c0_i32_52 = arith.constant 0 : i32
    %401 = arith.cmpi ne, %400, %c0_i32_52 : i32
    scf.if %401 {
      %c0_53 = arith.constant 0 : index
      %c0_54 = arith.constant 0 : index
      %402 = vector.load %arg5[%c0_53, %c0_54] : memref<8x128xf32, #tpu.memory_space<vmem>>, vector<8x128xf32>
      %403 = vector.shape_cast %402 : vector<8x128xf32> to vector<1x8x128xf32>
      %cst_55 = arith.constant dense<0.000000e+00> : vector<1xf32>
      %404 = vector.multi_reduction <add>, %403, %cst_55 [1, 2] : vector<1x8x128xf32> to vector<1xf32>
      %405 = vector.shape_cast %404 : vector<1xf32> to vector<1x1x1xf32>
      %406 = vector.extract %405[0, 0, 0] : f32 from vector<1x1x1xf32>
      %c0_56 = arith.constant 0 : index
      %c0_57 = arith.constant 0 : index
      %407 = memref.load %arg4[%c0_56, %c0_57] : memref<1x1xf32, #tpu.memory_space<smem>>
      memref.store %406, %arg4[%c0_56, %c0_57] : memref<1x1xf32, #tpu.memory_space<smem>>
    } else {
    }
    return
  }
  func.func @transform_0(%arg0: i32, %arg1: i32) -> (i32, i32) {
    %c1_i32 = arith.constant 1 : i32
    %0 = arith.muli %arg0, %c1_i32 : i32
    %1 = arith.addi %0, %arg1 : i32
    %c0_i32 = arith.constant 0 : i32
    %c0_i32_0 = arith.constant 0 : i32
    return %1, %c0_i32 : i32, i32
  }
  func.func @transform_1(%arg0: i32, %arg1: i32) -> (i32, i32) {
    %c1_i32 = arith.constant 1 : i32
    %0 = arith.muli %arg0, %c1_i32 : i32
    %1 = arith.addi %0, %arg1 : i32
    %c0_i32 = arith.constant 0 : i32
    %c0_i32_0 = arith.constant 0 : i32
    return %1, %c0_i32 : i32, i32
  }
  func.func @transform_2(%arg0: i32, %arg1: i32) -> (i32, i32) {
    %c0_i32 = arith.constant 0 : i32
    %c0_i32_0 = arith.constant 0 : i32
    return %arg0, %c0_i32 : i32, i32
  }
}

module attributes {stable_mosaic.version = 11 : i64} {
  func.func @_yolo_kernel_chmajor(%arg0: i32, %arg1: i32, %arg2: memref<60x8x128xf32, #tpu.memory_space<vmem>>, %arg3: memref<1x1xf32, #tpu.memory_space<smem>>, %arg4: memref<8x128xf32, #tpu.memory_space<vmem>>) attributes {dimension_semantics = [#tpu.dimension_semantics<parallel>, #tpu.dimension_semantics<arbitrary>], iteration_bounds = array<i64: 1, 1>, scalar_prefetch = 0 : i64, scratch_operands = 1 : i64, tpu.core_type = #tpu.core_type<tc>, window_params = [{transform_indices = @transform_0, window_bounds = array<i64: 60, 8, 128>}, {transform_indices = @transform_1, window_bounds = array<i64: 1, 1>}]} {
    %c0_i32 = arith.constant 0 : i32
    %0 = arith.cmpi eq, %arg1, %c0_i32 : i32
    %1 = arith.extui %0 : i1 to i32
    %c0_i32_0 = arith.constant 0 : i32
    %2 = arith.cmpi ne, %1, %c0_i32_0 : i32
    scf.if %2 {
      %cst_215 = arith.constant 0.000000e+00 : f32
      %396 = vector.broadcast %cst_215 : f32 to vector<8x128xf32>
      %c0_216 = arith.constant 0 : index
      %c0_217 = arith.constant 0 : index
      %397 = vector.load %arg4[%c0_216, %c0_217] : memref<8x128xf32, #tpu.memory_space<vmem>>, vector<8x128xf32>
      tpu.vector_store %arg4[%c0_216, %c0_217], %396 {strides = array<i32>} : memref<8x128xf32, #tpu.memory_space<vmem>>, vector<8x128xf32>,
    } else {
    }
    %c1_i32 = arith.constant 1 : i32
    %3 = arith.muli %arg0, %c1_i32 : i32
    %4 = arith.addi %3, %arg1 : i32
    %c1024_i32 = arith.constant 1024 : i32
    %5 = arith.muli %4, %c1024_i32 : i32
    %6 = tpu.iota {dimensions = array<i32: 0>} : vector<8x128xi32>
    %7 = tpu.iota {dimensions = array<i32: 1>} : vector<8x128xi32>
    %c128_i32 = arith.constant 128 : i32
    %8 = vector.broadcast %c128_i32 : i32 to vector<8x128xi32>
    %9 = arith.muli %6, %8 : vector<8x128xi32>
    %10 = vector.broadcast %5 : i32 to vector<8x128xi32>
    %11 = arith.addi %10, %9 : vector<8x128xi32>
    %12 = arith.addi %11, %7 : vector<8x128xi32>
    %c98_i32 = arith.constant 98 : i32
    %13 = vector.broadcast %c98_i32 : i32 to vector<8x128xi32>
    %14 = arith.cmpi slt, %12, %13 : vector<8x128xi32>
    %c0 = arith.constant 0 : index
    %c0_1 = arith.constant 0 : index
    %15 = vector.load %arg4[%c0, %c0_1] : memref<8x128xf32, #tpu.memory_space<vmem>>, vector<8x128xf32>
    %c34 = arith.constant 34 : index
    %c0_2 = arith.constant 0 : index
    %c0_3 = arith.constant 0 : index
    %16 = vector.load %arg2[%c34, %c0_2, %c0_3] : memref<60x8x128xf32, #tpu.memory_space<vmem>>, vector<1x8x128xf32>
    %17 = vector.shape_cast %16 : vector<1x8x128xf32> to vector<8x128xf32>
    %cst = arith.constant 0.000000e+00 : f32
    %18 = vector.broadcast %cst : f32 to vector<8x128xf32>
    %19 = arith.cmpf ogt, %17, %18 : vector<8x128xf32>
    %20 = arith.andi %14, %19 : vector<8x128xi1>
    %cst_4 = arith.constant 0.000000e+00 : f32
    %21 = vector.broadcast %cst_4 : f32 to vector<8x128xf32>
    %22 = arith.cmpf oeq, %17, %21 : vector<8x128xf32>
    %23 = arith.andi %14, %22 : vector<8x128xi1>
    %cst_5 = arith.constant 0.000000e+00 : f32
    %24 = vector.broadcast %cst_5 : f32 to vector<8x128xf32>
    %c4 = arith.constant 4 : index
    %c0_6 = arith.constant 0 : index
    %c0_7 = arith.constant 0 : index
    %25 = vector.load %arg2[%c4, %c0_6, %c0_7] : memref<60x8x128xf32, #tpu.memory_space<vmem>>, vector<1x8x128xf32>
    %26 = vector.shape_cast %25 : vector<1x8x128xf32> to vector<8x128xf32>
    %c34_8 = arith.constant 34 : index
    %c0_9 = arith.constant 0 : index
    %c0_10 = arith.constant 0 : index
    %27 = vector.load %arg2[%c34_8, %c0_9, %c0_10] : memref<60x8x128xf32, #tpu.memory_space<vmem>>, vector<1x8x128xf32>
    %28 = vector.shape_cast %27 : vector<1x8x128xf32> to vector<8x128xf32>
    %29 = arith.subf %26, %28 : vector<8x128xf32>
    %30 = arith.mulf %29, %29 : vector<8x128xf32>
    %31 = arith.addf %24, %30 : vector<8x128xf32>
    %c9 = arith.constant 9 : index
    %c0_11 = arith.constant 0 : index
    %c0_12 = arith.constant 0 : index
    %32 = vector.load %arg2[%c9, %c0_11, %c0_12] : memref<60x8x128xf32, #tpu.memory_space<vmem>>, vector<1x8x128xf32>
    %33 = vector.shape_cast %32 : vector<1x8x128xf32> to vector<8x128xf32>
    %c39 = arith.constant 39 : index
    %c0_13 = arith.constant 0 : index
    %c0_14 = arith.constant 0 : index
    %34 = vector.load %arg2[%c39, %c0_13, %c0_14] : memref<60x8x128xf32, #tpu.memory_space<vmem>>, vector<1x8x128xf32>
    %35 = vector.shape_cast %34 : vector<1x8x128xf32> to vector<8x128xf32>
    %36 = arith.subf %33, %35 : vector<8x128xf32>
    %37 = arith.mulf %36, %36 : vector<8x128xf32>
    %38 = arith.addf %31, %37 : vector<8x128xf32>
    %cst_15 = arith.constant 0.000000e+00 : f32
    %39 = vector.broadcast %cst_15 : f32 to vector<8x128xf32>
    %40 = arith.select %23, %38, %39 : vector<8x128xi1>, vector<8x128xf32>
    %cst_16 = arith.constant 0.000000e+00 : f32
    %41 = vector.broadcast %cst_16 : f32 to vector<8x128xf32>
    %c10 = arith.constant 10 : index
    %c0_17 = arith.constant 0 : index
    %c0_18 = arith.constant 0 : index
    %42 = vector.load %arg2[%c10, %c0_17, %c0_18] : memref<60x8x128xf32, #tpu.memory_space<vmem>>, vector<1x8x128xf32>
    %43 = vector.shape_cast %42 : vector<1x8x128xf32> to vector<8x128xf32>
    %c40 = arith.constant 40 : index
    %c0_19 = arith.constant 0 : index
    %c0_20 = arith.constant 0 : index
    %44 = vector.load %arg2[%c40, %c0_19, %c0_20] : memref<60x8x128xf32, #tpu.memory_space<vmem>>, vector<1x8x128xf32>
    %45 = vector.shape_cast %44 : vector<1x8x128xf32> to vector<8x128xf32>
    %46 = arith.subf %43, %45 : vector<8x128xf32>
    %47 = arith.mulf %46, %46 : vector<8x128xf32>
    %48 = arith.addf %41, %47 : vector<8x128xf32>
    %c11 = arith.constant 11 : index
    %c0_21 = arith.constant 0 : index
    %c0_22 = arith.constant 0 : index
    %49 = vector.load %arg2[%c11, %c0_21, %c0_22] : memref<60x8x128xf32, #tpu.memory_space<vmem>>, vector<1x8x128xf32>
    %50 = vector.shape_cast %49 : vector<1x8x128xf32> to vector<8x128xf32>
    %c41 = arith.constant 41 : index
    %c0_23 = arith.constant 0 : index
    %c0_24 = arith.constant 0 : index
    %51 = vector.load %arg2[%c41, %c0_23, %c0_24] : memref<60x8x128xf32, #tpu.memory_space<vmem>>, vector<1x8x128xf32>
    %52 = vector.shape_cast %51 : vector<1x8x128xf32> to vector<8x128xf32>
    %53 = arith.subf %50, %52 : vector<8x128xf32>
    %54 = arith.mulf %53, %53 : vector<8x128xf32>
    %55 = arith.addf %48, %54 : vector<8x128xf32>
    %c12 = arith.constant 12 : index
    %c0_25 = arith.constant 0 : index
    %c0_26 = arith.constant 0 : index
    %56 = vector.load %arg2[%c12, %c0_25, %c0_26] : memref<60x8x128xf32, #tpu.memory_space<vmem>>, vector<1x8x128xf32>
    %57 = vector.shape_cast %56 : vector<1x8x128xf32> to vector<8x128xf32>
    %c42 = arith.constant 42 : index
    %c0_27 = arith.constant 0 : index
    %c0_28 = arith.constant 0 : index
    %58 = vector.load %arg2[%c42, %c0_27, %c0_28] : memref<60x8x128xf32, #tpu.memory_space<vmem>>, vector<1x8x128xf32>
    %59 = vector.shape_cast %58 : vector<1x8x128xf32> to vector<8x128xf32>
    %60 = arith.subf %57, %59 : vector<8x128xf32>
    %61 = arith.mulf %60, %60 : vector<8x128xf32>
    %62 = arith.addf %55, %61 : vector<8x128xf32>
    %c13 = arith.constant 13 : index
    %c0_29 = arith.constant 0 : index
    %c0_30 = arith.constant 0 : index
    %63 = vector.load %arg2[%c13, %c0_29, %c0_30] : memref<60x8x128xf32, #tpu.memory_space<vmem>>, vector<1x8x128xf32>
    %64 = vector.shape_cast %63 : vector<1x8x128xf32> to vector<8x128xf32>
    %c43 = arith.constant 43 : index
    %c0_31 = arith.constant 0 : index
    %c0_32 = arith.constant 0 : index
    %65 = vector.load %arg2[%c43, %c0_31, %c0_32] : memref<60x8x128xf32, #tpu.memory_space<vmem>>, vector<1x8x128xf32>
    %66 = vector.shape_cast %65 : vector<1x8x128xf32> to vector<8x128xf32>
    %67 = arith.subf %64, %66 : vector<8x128xf32>
    %68 = arith.mulf %67, %67 : vector<8x128xf32>
    %69 = arith.addf %62, %68 : vector<8x128xf32>
    %c14 = arith.constant 14 : index
    %c0_33 = arith.constant 0 : index
    %c0_34 = arith.constant 0 : index
    %70 = vector.load %arg2[%c14, %c0_33, %c0_34] : memref<60x8x128xf32, #tpu.memory_space<vmem>>, vector<1x8x128xf32>
    %71 = vector.shape_cast %70 : vector<1x8x128xf32> to vector<8x128xf32>
    %c44 = arith.constant 44 : index
    %c0_35 = arith.constant 0 : index
    %c0_36 = arith.constant 0 : index
    %72 = vector.load %arg2[%c44, %c0_35, %c0_36] : memref<60x8x128xf32, #tpu.memory_space<vmem>>, vector<1x8x128xf32>
    %73 = vector.shape_cast %72 : vector<1x8x128xf32> to vector<8x128xf32>
    %74 = arith.subf %71, %73 : vector<8x128xf32>
    %75 = arith.mulf %74, %74 : vector<8x128xf32>
    %76 = arith.addf %69, %75 : vector<8x128xf32>
    %c15 = arith.constant 15 : index
    %c0_37 = arith.constant 0 : index
    %c0_38 = arith.constant 0 : index
    %77 = vector.load %arg2[%c15, %c0_37, %c0_38] : memref<60x8x128xf32, #tpu.memory_space<vmem>>, vector<1x8x128xf32>
    %78 = vector.shape_cast %77 : vector<1x8x128xf32> to vector<8x128xf32>
    %c45 = arith.constant 45 : index
    %c0_39 = arith.constant 0 : index
    %c0_40 = arith.constant 0 : index
    %79 = vector.load %arg2[%c45, %c0_39, %c0_40] : memref<60x8x128xf32, #tpu.memory_space<vmem>>, vector<1x8x128xf32>
    %80 = vector.shape_cast %79 : vector<1x8x128xf32> to vector<8x128xf32>
    %81 = arith.subf %78, %80 : vector<8x128xf32>
    %82 = arith.mulf %81, %81 : vector<8x128xf32>
    %83 = arith.addf %76, %82 : vector<8x128xf32>
    %c16 = arith.constant 16 : index
    %c0_41 = arith.constant 0 : index
    %c0_42 = arith.constant 0 : index
    %84 = vector.load %arg2[%c16, %c0_41, %c0_42] : memref<60x8x128xf32, #tpu.memory_space<vmem>>, vector<1x8x128xf32>
    %85 = vector.shape_cast %84 : vector<1x8x128xf32> to vector<8x128xf32>
    %c46 = arith.constant 46 : index
    %c0_43 = arith.constant 0 : index
    %c0_44 = arith.constant 0 : index
    %86 = vector.load %arg2[%c46, %c0_43, %c0_44] : memref<60x8x128xf32, #tpu.memory_space<vmem>>, vector<1x8x128xf32>
    %87 = vector.shape_cast %86 : vector<1x8x128xf32> to vector<8x128xf32>
    %88 = arith.subf %85, %87 : vector<8x128xf32>
    %89 = arith.mulf %88, %88 : vector<8x128xf32>
    %90 = arith.addf %83, %89 : vector<8x128xf32>
    %c17 = arith.constant 17 : index
    %c0_45 = arith.constant 0 : index
    %c0_46 = arith.constant 0 : index
    %91 = vector.load %arg2[%c17, %c0_45, %c0_46] : memref<60x8x128xf32, #tpu.memory_space<vmem>>, vector<1x8x128xf32>
    %92 = vector.shape_cast %91 : vector<1x8x128xf32> to vector<8x128xf32>
    %c47 = arith.constant 47 : index
    %c0_47 = arith.constant 0 : index
    %c0_48 = arith.constant 0 : index
    %93 = vector.load %arg2[%c47, %c0_47, %c0_48] : memref<60x8x128xf32, #tpu.memory_space<vmem>>, vector<1x8x128xf32>
    %94 = vector.shape_cast %93 : vector<1x8x128xf32> to vector<8x128xf32>
    %95 = arith.subf %92, %94 : vector<8x128xf32>
    %96 = arith.mulf %95, %95 : vector<8x128xf32>
    %97 = arith.addf %90, %96 : vector<8x128xf32>
    %c18 = arith.constant 18 : index
    %c0_49 = arith.constant 0 : index
    %c0_50 = arith.constant 0 : index
    %98 = vector.load %arg2[%c18, %c0_49, %c0_50] : memref<60x8x128xf32, #tpu.memory_space<vmem>>, vector<1x8x128xf32>
    %99 = vector.shape_cast %98 : vector<1x8x128xf32> to vector<8x128xf32>
    %c48 = arith.constant 48 : index
    %c0_51 = arith.constant 0 : index
    %c0_52 = arith.constant 0 : index
    %100 = vector.load %arg2[%c48, %c0_51, %c0_52] : memref<60x8x128xf32, #tpu.memory_space<vmem>>, vector<1x8x128xf32>
    %101 = vector.shape_cast %100 : vector<1x8x128xf32> to vector<8x128xf32>
    %102 = arith.subf %99, %101 : vector<8x128xf32>
    %103 = arith.mulf %102, %102 : vector<8x128xf32>
    %104 = arith.addf %97, %103 : vector<8x128xf32>
    %c19 = arith.constant 19 : index
    %c0_53 = arith.constant 0 : index
    %c0_54 = arith.constant 0 : index
    %105 = vector.load %arg2[%c19, %c0_53, %c0_54] : memref<60x8x128xf32, #tpu.memory_space<vmem>>, vector<1x8x128xf32>
    %106 = vector.shape_cast %105 : vector<1x8x128xf32> to vector<8x128xf32>
    %c49 = arith.constant 49 : index
    %c0_55 = arith.constant 0 : index
    %c0_56 = arith.constant 0 : index
    %107 = vector.load %arg2[%c49, %c0_55, %c0_56] : memref<60x8x128xf32, #tpu.memory_space<vmem>>, vector<1x8x128xf32>
    %108 = vector.shape_cast %107 : vector<1x8x128xf32> to vector<8x128xf32>
    %109 = arith.subf %106, %108 : vector<8x128xf32>
    %110 = arith.mulf %109, %109 : vector<8x128xf32>
    %111 = arith.addf %104, %110 : vector<8x128xf32>
    %c20 = arith.constant 20 : index
    %c0_57 = arith.constant 0 : index
    %c0_58 = arith.constant 0 : index
    %112 = vector.load %arg2[%c20, %c0_57, %c0_58] : memref<60x8x128xf32, #tpu.memory_space<vmem>>, vector<1x8x128xf32>
    %113 = vector.shape_cast %112 : vector<1x8x128xf32> to vector<8x128xf32>
    %c50 = arith.constant 50 : index
    %c0_59 = arith.constant 0 : index
    %c0_60 = arith.constant 0 : index
    %114 = vector.load %arg2[%c50, %c0_59, %c0_60] : memref<60x8x128xf32, #tpu.memory_space<vmem>>, vector<1x8x128xf32>
    %115 = vector.shape_cast %114 : vector<1x8x128xf32> to vector<8x128xf32>
    %116 = arith.subf %113, %115 : vector<8x128xf32>
    %117 = arith.mulf %116, %116 : vector<8x128xf32>
    %118 = arith.addf %111, %117 : vector<8x128xf32>
    %c21 = arith.constant 21 : index
    %c0_61 = arith.constant 0 : index
    %c0_62 = arith.constant 0 : index
    %119 = vector.load %arg2[%c21, %c0_61, %c0_62] : memref<60x8x128xf32, #tpu.memory_space<vmem>>, vector<1x8x128xf32>
    %120 = vector.shape_cast %119 : vector<1x8x128xf32> to vector<8x128xf32>
    %c51 = arith.constant 51 : index
    %c0_63 = arith.constant 0 : index
    %c0_64 = arith.constant 0 : index
    %121 = vector.load %arg2[%c51, %c0_63, %c0_64] : memref<60x8x128xf32, #tpu.memory_space<vmem>>, vector<1x8x128xf32>
    %122 = vector.shape_cast %121 : vector<1x8x128xf32> to vector<8x128xf32>
    %123 = arith.subf %120, %122 : vector<8x128xf32>
    %124 = arith.mulf %123, %123 : vector<8x128xf32>
    %125 = arith.addf %118, %124 : vector<8x128xf32>
    %c22 = arith.constant 22 : index
    %c0_65 = arith.constant 0 : index
    %c0_66 = arith.constant 0 : index
    %126 = vector.load %arg2[%c22, %c0_65, %c0_66] : memref<60x8x128xf32, #tpu.memory_space<vmem>>, vector<1x8x128xf32>
    %127 = vector.shape_cast %126 : vector<1x8x128xf32> to vector<8x128xf32>
    %c52 = arith.constant 52 : index
    %c0_67 = arith.constant 0 : index
    %c0_68 = arith.constant 0 : index
    %128 = vector.load %arg2[%c52, %c0_67, %c0_68] : memref<60x8x128xf32, #tpu.memory_space<vmem>>, vector<1x8x128xf32>
    %129 = vector.shape_cast %128 : vector<1x8x128xf32> to vector<8x128xf32>
    %130 = arith.subf %127, %129 : vector<8x128xf32>
    %131 = arith.mulf %130, %130 : vector<8x128xf32>
    %132 = arith.addf %125, %131 : vector<8x128xf32>
    %c23 = arith.constant 23 : index
    %c0_69 = arith.constant 0 : index
    %c0_70 = arith.constant 0 : index
    %133 = vector.load %arg2[%c23, %c0_69, %c0_70] : memref<60x8x128xf32, #tpu.memory_space<vmem>>, vector<1x8x128xf32>
    %134 = vector.shape_cast %133 : vector<1x8x128xf32> to vector<8x128xf32>
    %c53 = arith.constant 53 : index
    %c0_71 = arith.constant 0 : index
    %c0_72 = arith.constant 0 : index
    %135 = vector.load %arg2[%c53, %c0_71, %c0_72] : memref<60x8x128xf32, #tpu.memory_space<vmem>>, vector<1x8x128xf32>
    %136 = vector.shape_cast %135 : vector<1x8x128xf32> to vector<8x128xf32>
    %137 = arith.subf %134, %136 : vector<8x128xf32>
    %138 = arith.mulf %137, %137 : vector<8x128xf32>
    %139 = arith.addf %132, %138 : vector<8x128xf32>
    %c24 = arith.constant 24 : index
    %c0_73 = arith.constant 0 : index
    %c0_74 = arith.constant 0 : index
    %140 = vector.load %arg2[%c24, %c0_73, %c0_74] : memref<60x8x128xf32, #tpu.memory_space<vmem>>, vector<1x8x128xf32>
    %141 = vector.shape_cast %140 : vector<1x8x128xf32> to vector<8x128xf32>
    %c54 = arith.constant 54 : index
    %c0_75 = arith.constant 0 : index
    %c0_76 = arith.constant 0 : index
    %142 = vector.load %arg2[%c54, %c0_75, %c0_76] : memref<60x8x128xf32, #tpu.memory_space<vmem>>, vector<1x8x128xf32>
    %143 = vector.shape_cast %142 : vector<1x8x128xf32> to vector<8x128xf32>
    %144 = arith.subf %141, %143 : vector<8x128xf32>
    %145 = arith.mulf %144, %144 : vector<8x128xf32>
    %146 = arith.addf %139, %145 : vector<8x128xf32>
    %c25 = arith.constant 25 : index
    %c0_77 = arith.constant 0 : index
    %c0_78 = arith.constant 0 : index
    %147 = vector.load %arg2[%c25, %c0_77, %c0_78] : memref<60x8x128xf32, #tpu.memory_space<vmem>>, vector<1x8x128xf32>
    %148 = vector.shape_cast %147 : vector<1x8x128xf32> to vector<8x128xf32>
    %c55 = arith.constant 55 : index
    %c0_79 = arith.constant 0 : index
    %c0_80 = arith.constant 0 : index
    %149 = vector.load %arg2[%c55, %c0_79, %c0_80] : memref<60x8x128xf32, #tpu.memory_space<vmem>>, vector<1x8x128xf32>
    %150 = vector.shape_cast %149 : vector<1x8x128xf32> to vector<8x128xf32>
    %151 = arith.subf %148, %150 : vector<8x128xf32>
    %152 = arith.mulf %151, %151 : vector<8x128xf32>
    %153 = arith.addf %146, %152 : vector<8x128xf32>
    %c26 = arith.constant 26 : index
    %c0_81 = arith.constant 0 : index
    %c0_82 = arith.constant 0 : index
    %154 = vector.load %arg2[%c26, %c0_81, %c0_82] : memref<60x8x128xf32, #tpu.memory_space<vmem>>, vector<1x8x128xf32>
    %155 = vector.shape_cast %154 : vector<1x8x128xf32> to vector<8x128xf32>
    %c56 = arith.constant 56 : index
    %c0_83 = arith.constant 0 : index
    %c0_84 = arith.constant 0 : index
    %156 = vector.load %arg2[%c56, %c0_83, %c0_84] : memref<60x8x128xf32, #tpu.memory_space<vmem>>, vector<1x8x128xf32>
    %157 = vector.shape_cast %156 : vector<1x8x128xf32> to vector<8x128xf32>
    %158 = arith.subf %155, %157 : vector<8x128xf32>
    %159 = arith.mulf %158, %158 : vector<8x128xf32>
    %160 = arith.addf %153, %159 : vector<8x128xf32>
    %c27 = arith.constant 27 : index
    %c0_85 = arith.constant 0 : index
    %c0_86 = arith.constant 0 : index
    %161 = vector.load %arg2[%c27, %c0_85, %c0_86] : memref<60x8x128xf32, #tpu.memory_space<vmem>>, vector<1x8x128xf32>
    %162 = vector.shape_cast %161 : vector<1x8x128xf32> to vector<8x128xf32>
    %c57 = arith.constant 57 : index
    %c0_87 = arith.constant 0 : index
    %c0_88 = arith.constant 0 : index
    %163 = vector.load %arg2[%c57, %c0_87, %c0_88] : memref<60x8x128xf32, #tpu.memory_space<vmem>>, vector<1x8x128xf32>
    %164 = vector.shape_cast %163 : vector<1x8x128xf32> to vector<8x128xf32>
    %165 = arith.subf %162, %164 : vector<8x128xf32>
    %166 = arith.mulf %165, %165 : vector<8x128xf32>
    %167 = arith.addf %160, %166 : vector<8x128xf32>
    %c28 = arith.constant 28 : index
    %c0_89 = arith.constant 0 : index
    %c0_90 = arith.constant 0 : index
    %168 = vector.load %arg2[%c28, %c0_89, %c0_90] : memref<60x8x128xf32, #tpu.memory_space<vmem>>, vector<1x8x128xf32>
    %169 = vector.shape_cast %168 : vector<1x8x128xf32> to vector<8x128xf32>
    %c58 = arith.constant 58 : index
    %c0_91 = arith.constant 0 : index
    %c0_92 = arith.constant 0 : index
    %170 = vector.load %arg2[%c58, %c0_91, %c0_92] : memref<60x8x128xf32, #tpu.memory_space<vmem>>, vector<1x8x128xf32>
    %171 = vector.shape_cast %170 : vector<1x8x128xf32> to vector<8x128xf32>
    %172 = arith.subf %169, %171 : vector<8x128xf32>
    %173 = arith.mulf %172, %172 : vector<8x128xf32>
    %174 = arith.addf %167, %173 : vector<8x128xf32>
    %c29 = arith.constant 29 : index
    %c0_93 = arith.constant 0 : index
    %c0_94 = arith.constant 0 : index
    %175 = vector.load %arg2[%c29, %c0_93, %c0_94] : memref<60x8x128xf32, #tpu.memory_space<vmem>>, vector<1x8x128xf32>
    %176 = vector.shape_cast %175 : vector<1x8x128xf32> to vector<8x128xf32>
    %c59 = arith.constant 59 : index
    %c0_95 = arith.constant 0 : index
    %c0_96 = arith.constant 0 : index
    %177 = vector.load %arg2[%c59, %c0_95, %c0_96] : memref<60x8x128xf32, #tpu.memory_space<vmem>>, vector<1x8x128xf32>
    %178 = vector.shape_cast %177 : vector<1x8x128xf32> to vector<8x128xf32>
    %179 = arith.subf %176, %178 : vector<8x128xf32>
    %180 = arith.mulf %179, %179 : vector<8x128xf32>
    %181 = arith.addf %174, %180 : vector<8x128xf32>
    %cst_97 = arith.constant 0.000000e+00 : f32
    %182 = vector.broadcast %cst_97 : f32 to vector<8x128xf32>
    %183 = arith.select %20, %181, %182 : vector<8x128xi1>, vector<8x128xf32>
    %c30 = arith.constant 30 : index
    %c0_98 = arith.constant 0 : index
    %c0_99 = arith.constant 0 : index
    %184 = vector.load %arg2[%c30, %c0_98, %c0_99] : memref<60x8x128xf32, #tpu.memory_space<vmem>>, vector<1x8x128xf32>
    %185 = vector.shape_cast %184 : vector<1x8x128xf32> to vector<8x128xf32>
    %cst_100 = arith.constant 0.142857149 : f32
    %186 = vector.broadcast %cst_100 : f32 to vector<8x128xf32>
    %187 = arith.mulf %185, %186 : vector<8x128xf32>
    %c31 = arith.constant 31 : index
    %c0_101 = arith.constant 0 : index
    %c0_102 = arith.constant 0 : index
    %188 = vector.load %arg2[%c31, %c0_101, %c0_102] : memref<60x8x128xf32, #tpu.memory_space<vmem>>, vector<1x8x128xf32>
    %189 = vector.shape_cast %188 : vector<1x8x128xf32> to vector<8x128xf32>
    %cst_103 = arith.constant 0.142857149 : f32
    %190 = vector.broadcast %cst_103 : f32 to vector<8x128xf32>
    %191 = arith.mulf %189, %190 : vector<8x128xf32>
    %c32 = arith.constant 32 : index
    %c0_104 = arith.constant 0 : index
    %c0_105 = arith.constant 0 : index
    %192 = vector.load %arg2[%c32, %c0_104, %c0_105] : memref<60x8x128xf32, #tpu.memory_space<vmem>>, vector<1x8x128xf32>
    %193 = vector.shape_cast %192 : vector<1x8x128xf32> to vector<8x128xf32>
    %c33 = arith.constant 33 : index
    %c0_106 = arith.constant 0 : index
    %c0_107 = arith.constant 0 : index
    %194 = vector.load %arg2[%c33, %c0_106, %c0_107] : memref<60x8x128xf32, #tpu.memory_space<vmem>>, vector<1x8x128xf32>
    %195 = vector.shape_cast %194 : vector<1x8x128xf32> to vector<8x128xf32>
    %cst_108 = arith.constant 5.000000e-01 : f32
    %196 = vector.broadcast %cst_108 : f32 to vector<8x128xf32>
    %197 = arith.mulf %196, %193 : vector<8x128xf32>
    %198 = arith.subf %187, %197 : vector<8x128xf32>
    %cst_109 = arith.constant 5.000000e-01 : f32
    %199 = vector.broadcast %cst_109 : f32 to vector<8x128xf32>
    %200 = arith.mulf %199, %195 : vector<8x128xf32>
    %201 = arith.subf %191, %200 : vector<8x128xf32>
    %cst_110 = arith.constant 5.000000e-01 : f32
    %202 = vector.broadcast %cst_110 : f32 to vector<8x128xf32>
    %203 = arith.mulf %202, %193 : vector<8x128xf32>
    %204 = arith.addf %187, %203 : vector<8x128xf32>
    %cst_111 = arith.constant 5.000000e-01 : f32
    %205 = vector.broadcast %cst_111 : f32 to vector<8x128xf32>
    %206 = arith.mulf %205, %195 : vector<8x128xf32>
    %207 = arith.addf %191, %206 : vector<8x128xf32>
    %208 = arith.subf %204, %198 : vector<8x128xf32>
    %209 = arith.subf %207, %201 : vector<8x128xf32>
    %210 = arith.mulf %208, %209 : vector<8x128xf32>
    %c0_112 = arith.constant 0 : index
    %c0_113 = arith.constant 0 : index
    %c0_114 = arith.constant 0 : index
    %211 = vector.load %arg2[%c0_112, %c0_113, %c0_114] : memref<60x8x128xf32, #tpu.memory_space<vmem>>, vector<1x8x128xf32>
    %212 = vector.shape_cast %211 : vector<1x8x128xf32> to vector<8x128xf32>
    %cst_115 = arith.constant 0.142857149 : f32
    %213 = vector.broadcast %cst_115 : f32 to vector<8x128xf32>
    %214 = arith.mulf %212, %213 : vector<8x128xf32>
    %c1 = arith.constant 1 : index
    %c0_116 = arith.constant 0 : index
    %c0_117 = arith.constant 0 : index
    %215 = vector.load %arg2[%c1, %c0_116, %c0_117] : memref<60x8x128xf32, #tpu.memory_space<vmem>>, vector<1x8x128xf32>
    %216 = vector.shape_cast %215 : vector<1x8x128xf32> to vector<8x128xf32>
    %cst_118 = arith.constant 0.142857149 : f32
    %217 = vector.broadcast %cst_118 : f32 to vector<8x128xf32>
    %218 = arith.mulf %216, %217 : vector<8x128xf32>
    %c2 = arith.constant 2 : index
    %c0_119 = arith.constant 0 : index
    %c0_120 = arith.constant 0 : index
    %219 = vector.load %arg2[%c2, %c0_119, %c0_120] : memref<60x8x128xf32, #tpu.memory_space<vmem>>, vector<1x8x128xf32>
    %220 = vector.shape_cast %219 : vector<1x8x128xf32> to vector<8x128xf32>
    %c3 = arith.constant 3 : index
    %c0_121 = arith.constant 0 : index
    %c0_122 = arith.constant 0 : index
    %221 = vector.load %arg2[%c3, %c0_121, %c0_122] : memref<60x8x128xf32, #tpu.memory_space<vmem>>, vector<1x8x128xf32>
    %222 = vector.shape_cast %221 : vector<1x8x128xf32> to vector<8x128xf32>
    %cst_123 = arith.constant 5.000000e-01 : f32
    %223 = vector.broadcast %cst_123 : f32 to vector<8x128xf32>
    %224 = arith.mulf %223, %220 : vector<8x128xf32>
    %225 = arith.subf %214, %224 : vector<8x128xf32>
    %cst_124 = arith.constant 5.000000e-01 : f32
    %226 = vector.broadcast %cst_124 : f32 to vector<8x128xf32>
    %227 = arith.mulf %226, %222 : vector<8x128xf32>
    %228 = arith.subf %218, %227 : vector<8x128xf32>
    %cst_125 = arith.constant 5.000000e-01 : f32
    %229 = vector.broadcast %cst_125 : f32 to vector<8x128xf32>
    %230 = arith.mulf %229, %220 : vector<8x128xf32>
    %231 = arith.addf %214, %230 : vector<8x128xf32>
    %cst_126 = arith.constant 5.000000e-01 : f32
    %232 = vector.broadcast %cst_126 : f32 to vector<8x128xf32>
    %233 = arith.mulf %232, %222 : vector<8x128xf32>
    %234 = arith.addf %218, %233 : vector<8x128xf32>
    %235 = arith.subf %231, %225 : vector<8x128xf32>
    %236 = arith.subf %234, %228 : vector<8x128xf32>
    %237 = arith.mulf %235, %236 : vector<8x128xf32>
    %238 = arith.minimumf %231, %204 : vector<8x128xf32>
    %239 = arith.maximumf %225, %198 : vector<8x128xf32>
    %240 = arith.subf %238, %239 : vector<8x128xf32>
    %cst_127 = arith.constant 0.000000e+00 : f32
    %241 = vector.broadcast %cst_127 : f32 to vector<8x128xf32>
    %242 = arith.maximumf %240, %241 : vector<8x128xf32>
    %243 = arith.minimumf %234, %207 : vector<8x128xf32>
    %244 = arith.maximumf %228, %201 : vector<8x128xf32>
    %245 = arith.subf %243, %244 : vector<8x128xf32>
    %cst_128 = arith.constant 0.000000e+00 : f32
    %246 = vector.broadcast %cst_128 : f32 to vector<8x128xf32>
    %247 = arith.maximumf %245, %246 : vector<8x128xf32>
    %248 = arith.mulf %242, %247 : vector<8x128xf32>
    %249 = arith.addf %237, %210 : vector<8x128xf32>
    %250 = arith.subf %249, %248 : vector<8x128xf32>
    %cst_129 = arith.constant 9.99999996E-13 : f32
    %251 = vector.broadcast %cst_129 : f32 to vector<8x128xf32>
    %252 = arith.maximumf %250, %251 : vector<8x128xf32>
    %253 = arith.divf %248, %252 : vector<8x128xf32>
    %c5 = arith.constant 5 : index
    %c0_130 = arith.constant 0 : index
    %c0_131 = arith.constant 0 : index
    %254 = vector.load %arg2[%c5, %c0_130, %c0_131] : memref<60x8x128xf32, #tpu.memory_space<vmem>>, vector<1x8x128xf32>
    %255 = vector.shape_cast %254 : vector<1x8x128xf32> to vector<8x128xf32>
    %cst_132 = arith.constant 0.142857149 : f32
    %256 = vector.broadcast %cst_132 : f32 to vector<8x128xf32>
    %257 = arith.mulf %255, %256 : vector<8x128xf32>
    %c6 = arith.constant 6 : index
    %c0_133 = arith.constant 0 : index
    %c0_134 = arith.constant 0 : index
    %258 = vector.load %arg2[%c6, %c0_133, %c0_134] : memref<60x8x128xf32, #tpu.memory_space<vmem>>, vector<1x8x128xf32>
    %259 = vector.shape_cast %258 : vector<1x8x128xf32> to vector<8x128xf32>
    %cst_135 = arith.constant 0.142857149 : f32
    %260 = vector.broadcast %cst_135 : f32 to vector<8x128xf32>
    %261 = arith.mulf %259, %260 : vector<8x128xf32>
    %c7 = arith.constant 7 : index
    %c0_136 = arith.constant 0 : index
    %c0_137 = arith.constant 0 : index
    %262 = vector.load %arg2[%c7, %c0_136, %c0_137] : memref<60x8x128xf32, #tpu.memory_space<vmem>>, vector<1x8x128xf32>
    %263 = vector.shape_cast %262 : vector<1x8x128xf32> to vector<8x128xf32>
    %c8 = arith.constant 8 : index
    %c0_138 = arith.constant 0 : index
    %c0_139 = arith.constant 0 : index
    %264 = vector.load %arg2[%c8, %c0_138, %c0_139] : memref<60x8x128xf32, #tpu.memory_space<vmem>>, vector<1x8x128xf32>
    %265 = vector.shape_cast %264 : vector<1x8x128xf32> to vector<8x128xf32>
    %cst_140 = arith.constant 5.000000e-01 : f32
    %266 = vector.broadcast %cst_140 : f32 to vector<8x128xf32>
    %267 = arith.mulf %266, %263 : vector<8x128xf32>
    %268 = arith.subf %257, %267 : vector<8x128xf32>
    %cst_141 = arith.constant 5.000000e-01 : f32
    %269 = vector.broadcast %cst_141 : f32 to vector<8x128xf32>
    %270 = arith.mulf %269, %265 : vector<8x128xf32>
    %271 = arith.subf %261, %270 : vector<8x128xf32>
    %cst_142 = arith.constant 5.000000e-01 : f32
    %272 = vector.broadcast %cst_142 : f32 to vector<8x128xf32>
    %273 = arith.mulf %272, %263 : vector<8x128xf32>
    %274 = arith.addf %257, %273 : vector<8x128xf32>
    %cst_143 = arith.constant 5.000000e-01 : f32
    %275 = vector.broadcast %cst_143 : f32 to vector<8x128xf32>
    %276 = arith.mulf %275, %265 : vector<8x128xf32>
    %277 = arith.addf %261, %276 : vector<8x128xf32>
    %278 = arith.subf %274, %268 : vector<8x128xf32>
    %279 = arith.subf %277, %271 : vector<8x128xf32>
    %280 = arith.mulf %278, %279 : vector<8x128xf32>
    %281 = arith.minimumf %274, %204 : vector<8x128xf32>
    %282 = arith.maximumf %268, %198 : vector<8x128xf32>
    %283 = arith.subf %281, %282 : vector<8x128xf32>
    %cst_144 = arith.constant 0.000000e+00 : f32
    %284 = vector.broadcast %cst_144 : f32 to vector<8x128xf32>
    %285 = arith.maximumf %283, %284 : vector<8x128xf32>
    %286 = arith.minimumf %277, %207 : vector<8x128xf32>
    %287 = arith.maximumf %271, %201 : vector<8x128xf32>
    %288 = arith.subf %286, %287 : vector<8x128xf32>
    %cst_145 = arith.constant 0.000000e+00 : f32
    %289 = vector.broadcast %cst_145 : f32 to vector<8x128xf32>
    %290 = arith.maximumf %288, %289 : vector<8x128xf32>
    %291 = arith.mulf %285, %290 : vector<8x128xf32>
    %292 = arith.addf %280, %210 : vector<8x128xf32>
    %293 = arith.subf %292, %291 : vector<8x128xf32>
    %cst_146 = arith.constant 9.99999996E-13 : f32
    %294 = vector.broadcast %cst_146 : f32 to vector<8x128xf32>
    %295 = arith.maximumf %293, %294 : vector<8x128xf32>
    %296 = arith.divf %291, %295 : vector<8x128xf32>
    %c0_i32_147 = arith.constant 0 : i32
    %297 = vector.broadcast %c0_i32_147 : i32 to vector<8x128xi32>
    %298 = arith.cmpf ogt, %296, %253 : vector<8x128xf32>
    %299 = arith.select %298, %296, %253 : vector<8x128xi1>, vector<8x128xf32>
    %c1_i32_148 = arith.constant 1 : i32
    %300 = vector.broadcast %c1_i32_148 : i32 to vector<8x128xi32>
    %301 = arith.select %298, %300, %297 : vector<8x128xi1>, vector<8x128xi32>
    %c0_149 = arith.constant 0 : index
    %c0_150 = arith.constant 0 : index
    %c0_151 = arith.constant 0 : index
    %302 = vector.load %arg2[%c0_149, %c0_150, %c0_151] : memref<60x8x128xf32, #tpu.memory_space<vmem>>, vector<1x8x128xf32>
    %303 = vector.shape_cast %302 : vector<1x8x128xf32> to vector<8x128xf32>
    %c1_i32_152 = arith.constant 1 : i32
    %304 = vector.broadcast %c1_i32_152 : i32 to vector<8x128xi32>
    %305 = arith.cmpi eq, %301, %304 : vector<8x128xi32>
    %c5_153 = arith.constant 5 : index
    %c0_154 = arith.constant 0 : index
    %c0_155 = arith.constant 0 : index
    %306 = vector.load %arg2[%c5_153, %c0_154, %c0_155] : memref<60x8x128xf32, #tpu.memory_space<vmem>>, vector<1x8x128xf32>
    %307 = vector.shape_cast %306 : vector<1x8x128xf32> to vector<8x128xf32>
    %308 = arith.select %305, %307, %303 : vector<8x128xi1>, vector<8x128xf32>
    %c1_156 = arith.constant 1 : index
    %c0_157 = arith.constant 0 : index
    %c0_158 = arith.constant 0 : index
    %309 = vector.load %arg2[%c1_156, %c0_157, %c0_158] : memref<60x8x128xf32, #tpu.memory_space<vmem>>, vector<1x8x128xf32>
    %310 = vector.shape_cast %309 : vector<1x8x128xf32> to vector<8x128xf32>
    %c1_i32_159 = arith.constant 1 : i32
    %311 = vector.broadcast %c1_i32_159 : i32 to vector<8x128xi32>
    %312 = arith.cmpi eq, %301, %311 : vector<8x128xi32>
    %c6_160 = arith.constant 6 : index
    %c0_161 = arith.constant 0 : index
    %c0_162 = arith.constant 0 : index
    %313 = vector.load %arg2[%c6_160, %c0_161, %c0_162] : memref<60x8x128xf32, #tpu.memory_space<vmem>>, vector<1x8x128xf32>
    %314 = vector.shape_cast %313 : vector<1x8x128xf32> to vector<8x128xf32>
    %315 = arith.select %312, %314, %310 : vector<8x128xi1>, vector<8x128xf32>
    %c2_163 = arith.constant 2 : index
    %c0_164 = arith.constant 0 : index
    %c0_165 = arith.constant 0 : index
    %316 = vector.load %arg2[%c2_163, %c0_164, %c0_165] : memref<60x8x128xf32, #tpu.memory_space<vmem>>, vector<1x8x128xf32>
    %317 = vector.shape_cast %316 : vector<1x8x128xf32> to vector<8x128xf32>
    %c1_i32_166 = arith.constant 1 : i32
    %318 = vector.broadcast %c1_i32_166 : i32 to vector<8x128xi32>
    %319 = arith.cmpi eq, %301, %318 : vector<8x128xi32>
    %c7_167 = arith.constant 7 : index
    %c0_168 = arith.constant 0 : index
    %c0_169 = arith.constant 0 : index
    %320 = vector.load %arg2[%c7_167, %c0_168, %c0_169] : memref<60x8x128xf32, #tpu.memory_space<vmem>>, vector<1x8x128xf32>
    %321 = vector.shape_cast %320 : vector<1x8x128xf32> to vector<8x128xf32>
    %322 = arith.select %319, %321, %317 : vector<8x128xi1>, vector<8x128xf32>
    %c3_170 = arith.constant 3 : index
    %c0_171 = arith.constant 0 : index
    %c0_172 = arith.constant 0 : index
    %323 = vector.load %arg2[%c3_170, %c0_171, %c0_172] : memref<60x8x128xf32, #tpu.memory_space<vmem>>, vector<1x8x128xf32>
    %324 = vector.shape_cast %323 : vector<1x8x128xf32> to vector<8x128xf32>
    %c1_i32_173 = arith.constant 1 : i32
    %325 = vector.broadcast %c1_i32_173 : i32 to vector<8x128xi32>
    %326 = arith.cmpi eq, %301, %325 : vector<8x128xi32>
    %c8_174 = arith.constant 8 : index
    %c0_175 = arith.constant 0 : index
    %c0_176 = arith.constant 0 : index
    %327 = vector.load %arg2[%c8_174, %c0_175, %c0_176] : memref<60x8x128xf32, #tpu.memory_space<vmem>>, vector<1x8x128xf32>
    %328 = vector.shape_cast %327 : vector<1x8x128xf32> to vector<8x128xf32>
    %329 = arith.select %326, %328, %324 : vector<8x128xi1>, vector<8x128xf32>
    %c4_177 = arith.constant 4 : index
    %c0_178 = arith.constant 0 : index
    %c0_179 = arith.constant 0 : index
    %330 = vector.load %arg2[%c4_177, %c0_178, %c0_179] : memref<60x8x128xf32, #tpu.memory_space<vmem>>, vector<1x8x128xf32>
    %331 = vector.shape_cast %330 : vector<1x8x128xf32> to vector<8x128xf32>
    %c1_i32_180 = arith.constant 1 : i32
    %332 = vector.broadcast %c1_i32_180 : i32 to vector<8x128xi32>
    %333 = arith.cmpi eq, %301, %332 : vector<8x128xi32>
    %c9_181 = arith.constant 9 : index
    %c0_182 = arith.constant 0 : index
    %c0_183 = arith.constant 0 : index
    %334 = vector.load %arg2[%c9_181, %c0_182, %c0_183] : memref<60x8x128xf32, #tpu.memory_space<vmem>>, vector<1x8x128xf32>
    %335 = vector.shape_cast %334 : vector<1x8x128xf32> to vector<8x128xf32>
    %336 = arith.select %333, %335, %331 : vector<8x128xi1>, vector<8x128xf32>
    %c30_184 = arith.constant 30 : index
    %c0_185 = arith.constant 0 : index
    %c0_186 = arith.constant 0 : index
    %337 = vector.load %arg2[%c30_184, %c0_185, %c0_186] : memref<60x8x128xf32, #tpu.memory_space<vmem>>, vector<1x8x128xf32>
    %338 = vector.shape_cast %337 : vector<1x8x128xf32> to vector<8x128xf32>
    %c1_i32_187 = arith.constant 1 : i32
    %339 = vector.broadcast %c1_i32_187 : i32 to vector<8x128xi32>
    %340 = arith.cmpi eq, %301, %339 : vector<8x128xi32>
    %c35 = arith.constant 35 : index
    %c0_188 = arith.constant 0 : index
    %c0_189 = arith.constant 0 : index
    %341 = vector.load %arg2[%c35, %c0_188, %c0_189] : memref<60x8x128xf32, #tpu.memory_space<vmem>>, vector<1x8x128xf32>
    %342 = vector.shape_cast %341 : vector<1x8x128xf32> to vector<8x128xf32>
    %343 = arith.select %340, %342, %338 : vector<8x128xi1>, vector<8x128xf32>
    %c31_190 = arith.constant 31 : index
    %c0_191 = arith.constant 0 : index
    %c0_192 = arith.constant 0 : index
    %344 = vector.load %arg2[%c31_190, %c0_191, %c0_192] : memref<60x8x128xf32, #tpu.memory_space<vmem>>, vector<1x8x128xf32>
    %345 = vector.shape_cast %344 : vector<1x8x128xf32> to vector<8x128xf32>
    %c1_i32_193 = arith.constant 1 : i32
    %346 = vector.broadcast %c1_i32_193 : i32 to vector<8x128xi32>
    %347 = arith.cmpi eq, %301, %346 : vector<8x128xi32>
    %c36 = arith.constant 36 : index
    %c0_194 = arith.constant 0 : index
    %c0_195 = arith.constant 0 : index
    %348 = vector.load %arg2[%c36, %c0_194, %c0_195] : memref<60x8x128xf32, #tpu.memory_space<vmem>>, vector<1x8x128xf32>
    %349 = vector.shape_cast %348 : vector<1x8x128xf32> to vector<8x128xf32>
    %350 = arith.select %347, %349, %345 : vector<8x128xi1>, vector<8x128xf32>
    %c32_196 = arith.constant 32 : index
    %c0_197 = arith.constant 0 : index
    %c0_198 = arith.constant 0 : index
    %351 = vector.load %arg2[%c32_196, %c0_197, %c0_198] : memref<60x8x128xf32, #tpu.memory_space<vmem>>, vector<1x8x128xf32>
    %352 = vector.shape_cast %351 : vector<1x8x128xf32> to vector<8x128xf32>
    %c1_i32_199 = arith.constant 1 : i32
    %353 = vector.broadcast %c1_i32_199 : i32 to vector<8x128xi32>
    %354 = arith.cmpi eq, %301, %353 : vector<8x128xi32>
    %c37 = arith.constant 37 : index
    %c0_200 = arith.constant 0 : index
    %c0_201 = arith.constant 0 : index
    %355 = vector.load %arg2[%c37, %c0_200, %c0_201] : memref<60x8x128xf32, #tpu.memory_space<vmem>>, vector<1x8x128xf32>
    %356 = vector.shape_cast %355 : vector<1x8x128xf32> to vector<8x128xf32>
    %357 = arith.select %354, %356, %352 : vector<8x128xi1>, vector<8x128xf32>
    %c33_202 = arith.constant 33 : index
    %c0_203 = arith.constant 0 : index
    %c0_204 = arith.constant 0 : index
    %358 = vector.load %arg2[%c33_202, %c0_203, %c0_204] : memref<60x8x128xf32, #tpu.memory_space<vmem>>, vector<1x8x128xf32>
    %359 = vector.shape_cast %358 : vector<1x8x128xf32> to vector<8x128xf32>
    %c1_i32_205 = arith.constant 1 : i32
    %360 = vector.broadcast %c1_i32_205 : i32 to vector<8x128xi32>
    %361 = arith.cmpi eq, %301, %360 : vector<8x128xi32>
    %c38 = arith.constant 38 : index
    %c0_206 = arith.constant 0 : index
    %c0_207 = arith.constant 0 : index
    %362 = vector.load %arg2[%c38, %c0_206, %c0_207] : memref<60x8x128xf32, #tpu.memory_space<vmem>>, vector<1x8x128xf32>
    %363 = vector.shape_cast %362 : vector<1x8x128xf32> to vector<8x128xf32>
    %364 = arith.select %361, %363, %359 : vector<8x128xi1>, vector<8x128xf32>
    %365 = arith.subf %308, %343 : vector<8x128xf32>
    %366 = arith.mulf %365, %365 : vector<8x128xf32>
    %367 = arith.subf %315, %350 : vector<8x128xf32>
    %368 = arith.mulf %367, %367 : vector<8x128xf32>
    %369 = arith.addf %366, %368 : vector<8x128xf32>
    %370 = math.sqrt %322 : vector<8x128xf32>
    %371 = math.sqrt %357 : vector<8x128xf32>
    %372 = arith.subf %370, %371 : vector<8x128xf32>
    %373 = arith.mulf %372, %372 : vector<8x128xf32>
    %374 = math.sqrt %329 : vector<8x128xf32>
    %375 = math.sqrt %364 : vector<8x128xf32>
    %376 = arith.subf %374, %375 : vector<8x128xf32>
    %377 = arith.mulf %376, %376 : vector<8x128xf32>
    %378 = arith.addf %373, %377 : vector<8x128xf32>
    %379 = arith.subf %336, %299 : vector<8x128xf32>
    %380 = arith.mulf %379, %379 : vector<8x128xf32>
    %381 = arith.addf %369, %378 : vector<8x128xf32>
    %cst_208 = arith.constant 5.000000e+00 : f32
    %382 = vector.broadcast %cst_208 : f32 to vector<8x128xf32>
    %383 = arith.mulf %382, %381 : vector<8x128xf32>
    %384 = arith.addf %383, %380 : vector<8x128xf32>
    %cst_209 = arith.constant 0.000000e+00 : f32
    %385 = vector.broadcast %cst_209 : f32 to vector<8x128xf32>
    %386 = arith.select %20, %384, %385 : vector<8x128xi1>, vector<8x128xf32>
    %cst_210 = arith.constant 5.000000e-01 : f32
    %387 = vector.broadcast %cst_210 : f32 to vector<8x128xf32>
    %388 = arith.mulf %387, %40 : vector<8x128xf32>
    %389 = arith.addf %386, %388 : vector<8x128xf32>
    %390 = arith.addf %389, %183 : vector<8x128xf32>
    %391 = arith.addf %15, %390 : vector<8x128xf32>
    %c0_211 = arith.constant 0 : index
    %c0_212 = arith.constant 0 : index
    %392 = vector.load %arg4[%c0_211, %c0_212] : memref<8x128xf32, #tpu.memory_space<vmem>>, vector<8x128xf32>
    tpu.vector_store %arg4[%c0_211, %c0_212], %391 {strides = array<i32>} : memref<8x128xf32, #tpu.memory_space<vmem>>, vector<8x128xf32>,
    %c0_i32_213 = arith.constant 0 : i32
    %393 = arith.cmpi eq, %arg1, %c0_i32_213 : i32
    %394 = arith.extui %393 : i1 to i32
    %c0_i32_214 = arith.constant 0 : i32
    %395 = arith.cmpi ne, %394, %c0_i32_214 : i32
    scf.if %395 {
      %c0_215 = arith.constant 0 : index
      %c0_216 = arith.constant 0 : index
      %396 = vector.load %arg4[%c0_215, %c0_216] : memref<8x128xf32, #tpu.memory_space<vmem>>, vector<8x128xf32>
      %397 = vector.shape_cast %396 : vector<8x128xf32> to vector<1x8x128xf32>
      %cst_217 = arith.constant dense<0.000000e+00> : vector<1xf32>
      %398 = vector.multi_reduction <add>, %397, %cst_217 [1, 2] : vector<1x8x128xf32> to vector<1xf32>
      %399 = vector.shape_cast %398 : vector<1xf32> to vector<1x1x1xf32>
      %400 = vector.extract %399[0, 0, 0] : f32 from vector<1x1x1xf32>
      %c0_218 = arith.constant 0 : index
      %c0_219 = arith.constant 0 : index
      %401 = memref.load %arg3[%c0_218, %c0_219] : memref<1x1xf32, #tpu.memory_space<smem>>
      memref.store %400, %arg3[%c0_218, %c0_219] : memref<1x1xf32, #tpu.memory_space<smem>>
    } else {
    }
    return
  }
  func.func @transform_0(%arg0: i32, %arg1: i32) -> (i32, i32, i32) {
    %c1_i32 = arith.constant 1 : i32
    %0 = arith.muli %arg0, %c1_i32 : i32
    %1 = arith.addi %0, %arg1 : i32
    %c0_i32 = arith.constant 0 : i32
    %c0_i32_0 = arith.constant 0 : i32
    %c0_i32_1 = arith.constant 0 : i32
    return %c0_i32, %1, %c0_i32_0 : i32, i32, i32
  }
  func.func @transform_1(%arg0: i32, %arg1: i32) -> (i32, i32) {
    %c0_i32 = arith.constant 0 : i32
    %c0_i32_0 = arith.constant 0 : i32
    return %arg0, %c0_i32 : i32, i32
  }
}

</mosaic_0001>

<llo_original>
// kernel: tpu_custom_call.1
$region0: #{tpu_custom_call.1}
  #allocation0 [shape = 'u32[]', space=smem, size = 0x4, offset = 0x4, fixed_abs, tag = 'smem constant byte address 0x4 - core index']
  #allocation1 [shape = 'u32[144,128]{1,0:T(1,128)}', space=vmem, size = 0x12000, scoped, tag = 'internal scratch']
  #allocation2 [shape = 'f32[8,128]{1,0:T(8,128)}', space=vmem, size = 0x1000, scoped, tag = 'scratch operand']
  %s0 = inlined_call_operand.vmem [shape: f32[98,30], index: 0, kind: input, shape index: {}]
  %s1 = inlined_call_operand.vmem [shape: f32[98,30], index: 1, kind: input, shape index: {}]
  %s2 = inlined_call_operand.hbm [shape: f32[1,1], index: 2, kind: output, shape index: {}]
  %s3 = sld [smem:[#allocation0]]
  $region26: #{tpu_custom_call.1} parent=0
    _
  %s5 = ssub.s32 1, %s3
  %s6 = scalar_select 0, %s5, %s3
  $region1: #{tpu_custom_call.1} parent=0
    #allocation3 [shape = 'u8[512]{0}', space=smem, size = 0x200, scoped, tag = 'output window, operand 0, single buffered']
    #allocation4 [shape = 's32[1]{0}', space=sflag, size = 0x4, scoped, tag = 'scoped memory for tpu_custom_call.1']
    %7 = vsyncpa [#allocation4], 0
    // Predicated region
    $region2: #{tpu_custom_call.1} parent=1 // pred_check
      _
    $region3: #{tpu_custom_call.1} parent=1 // pred_check_branch
      %9 = sbr.rel (0) target = $region5
    $region4: #{tpu_custom_call.1} parent=1 // pred_region
      %s10 = sadd.s32 0, 0
      %s11 = smul.u32 128, %s10
      %s12 = ssub.s32 13, %s11
      %s13 = smul.u32 128, %s12
      %p14 = scmp.lt.s32.totalorder %s11, 12
      %s15 = scalar_select %p14, %s11, 12
      %s16 = smul.addr %s15, 8
      %s17 = scalar_lea.vmem %s0, %s16
      %s18 = sadd.s32 0, 0
      %s19 = smul.u32 128, %s18
      %s20 = ssub.s32 13, %s19
      %s21 = smul.u32 128, %s20
    $region5: #{tpu_custom_call.1} parent=1 // pred_fallthru
      _
    // Predicated region
    $region6: #{tpu_custom_call.1} parent=1 // pred_check
      _
    $region7: #{tpu_custom_call.1} parent=1 // pred_check_branch
      %23 = sbr.rel (0) target = $region9
    $region8: #{tpu_custom_call.1} parent=1 // pred_region
      %s24 = sadd.s32 0, 0
      %s25 = smul.u32 128, %s24
      %s26 = ssub.s32 13, %s25
      %s27 = smul.u32 128, %s26
      %p28 = scmp.lt.s32.totalorder %s25, 12
      %s29 = scalar_select %p28, %s25, 12
      %s30 = smul.addr %s29, 8
      %s31 = scalar_lea.vmem %s1, %s30
      %s32 = sadd.s32 0, 0
      %s33 = smul.u32 128, %s32
      %s34 = ssub.s32 13, %s33
      %s35 = smul.u32 128, %s34
    $region9: #{tpu_custom_call.1} parent=1 // pred_fallthru
      _
    %s36 = sadd.s32 0, 0
    %s37 = smul.u32 128, %s36
    %s38 = ssub.s32 13, %s37
    %s39 = smul.u32 128, %s38
    %p40 = scmp.lt.s32.totalorder %s37, 12
    %s41 = scalar_select %p40, %s37, 12
    %s42 = smul.addr %s41, 8
    %s43 = scalar_lea.vmem %s0, %s42
    %s44 = sadd.s32 0, 0
    %s45 = smul.u32 128, %s44
    %s46 = ssub.s32 13, %s45
    %s47 = smul.u32 128, %s46
    %p48 = scmp.lt.s32.totalorder %s45, 12
    %s49 = scalar_select %p48, %s45, 12
    %s50 = smul.addr %s49, 8
    %s51 = scalar_lea.vmem %s1, %s50
    %s52 = sadd.s32 0, 0
    %s53 = smul.u32 128, %s52
    %s54 = ssub.s32 13, %s53
    %s55 = smul.u32 128, %s54
    %p56 = scmp.lt.s32.totalorder %s53, 12
    %s57 = scalar_select %p56, %s53, 12
    %s58 = smul.addr %s57, 8
    %s59 = scalar_lea.vmem %s0, %s58
    %s60 = sadd.s32 0, 0
    %s61 = smul.u32 128, %s60
    %s62 = ssub.s32 13, %s61
    %s63 = smul.u32 128, %s62
    %s64 = sadd.s32 0, 0
    %s65 = smul.u32 128, %s64
    %s66 = ssub.s32 13, %s65
    %s67 = smul.u32 128, %s66
    %p68 = scmp.lt.s32.totalorder %s65, 12
    %s69 = scalar_select %p68, %s65, 12
    %s70 = smul.addr %s69, 8
    %s71 = scalar_lea.vmem %s1, %s70
    %s72 = sadd.s32 0, 0
    %s73 = smul.u32 128, %s72
    %s74 = ssub.s32 13, %s73
    %s75 = smul.u32 128, %s74
    %v76 = vld [vmem:[%s59] sm:$0xff]
    %v77 = vld [vmem:[%s59 + $0x8] sm:$0xff]
    %v78 = vld [vmem:[%s59 + $0x10] sm:$0xff]
    %v79 = vld [vmem:[%s59 + $0x18] sm:$0xff]
    %v80 = vld [vmem:[%s59 + $0x20] sm:$0xff]
    %v81 = vld [vmem:[%s59 + $0x28] sm:$0xff]
    %v82 = vld [vmem:[%s59 + $0x30] sm:$0xff]
    %v83 = vld [vmem:[%s59 + $0x38] sm:$0xff]
    %v84 = vld [vmem:[%s59 + $0x40] sm:$0xff]
    %v85 = vld [vmem:[%s59 + $0x48] sm:$0xff]
    %v86 = vld [vmem:[%s59 + $0x50] sm:$0xff]
    %v87 = vld [vmem:[%s59 + $0x58] sm:$0xff]
    %v88 = vld [vmem:[%s59 + $0x60] sm:$0xff]
    %v89 = vld [vmem:[%s59 + $0x68] sm:$0xff]
    %v90 = vld [vmem:[%s59 + $0x70] sm:$0xff]
    %v91 = vld [vmem:[%s59 + $0x78] sm:$0xff]
    %v92 = vld [vmem:[%s59 + $0x80] sm:$0xff]
    %v93 = vld [vmem:[%s59 + $0x88] sm:$0xff]
    %v94 = vld [vmem:[%s59 + $0x90] sm:$0xff]
    %v95 = vld [vmem:[%s59 + $0x98] sm:$0xff]
    %v96 = vld [vmem:[%s59 + $0xa0] sm:$0xff]
    %v97 = vld [vmem:[%s59 + $0xa8] sm:$0xff]
    %v98 = vld [vmem:[%s59 + $0xb0] sm:$0xff]
    %v99 = vld [vmem:[%s59 + $0xb8] sm:$0xff]
    %v100 = vld [vmem:[%s59 + $0xc0] sm:$0xff]
    %v101 = vld [vmem:[%s59 + $0xc8] sm:$0xff]
    %v102 = vld [vmem:[%s59 + $0xd0] sm:$0xff]
    %v103 = vld [vmem:[%s59 + $0xd8] sm:$0xff]
    %v104 = vld [vmem:[%s59 + $0xe0] sm:$0xff]
    %v105 = vld [vmem:[%s59 + $0xe8] sm:$0xff]
    %v106 = vld [vmem:[%s59 + $0xf0] sm:$0xff]
    %v107 = vld [vmem:[%s59 + $0xf8] sm:$0xff]
    %v108 = vld [vmem:[%s59 + $0x100] sm:$0xff]
    %v109 = vld [vmem:[%s59 + $0x108] sm:$0xff]
    %v110 = vld [vmem:[%s59 + $0x110] sm:$0xff]
    %v111 = vld [vmem:[%s59 + $0x118] sm:$0xff]
    %v112 = vld [vmem:[%s59 + $0x120] sm:$0xff]
    %v113 = vld [vmem:[%s59 + $0x128] sm:$0xff]
    %v114 = vld [vmem:[%s59 + $0x130] sm:$0xff]
    %v115 = vld [vmem:[%s59 + $0x138] sm:$0xff]
    %v116 = vld [vmem:[%s59 + $0x140] sm:$0xff]
    %v117 = vld [vmem:[%s59 + $0x148] sm:$0xff]
    %v118 = vld [vmem:[%s59 + $0x150] sm:$0xff]
    %v119 = vld [vmem:[%s59 + $0x158] sm:$0xff]
    %v120 = vld [vmem:[%s59 + $0x160] sm:$0xff]
    %v121 = vld [vmem:[%s59 + $0x168] sm:$0xff]
    %v122 = vld [vmem:[%s59 + $0x170] sm:$0xff]
    %v123 = vld [vmem:[%s59 + $0x178] sm:$0xff]
    %v124 = vld [vmem:[%s59 + $0x180] sm:$0xff]
    %v125 = vld [vmem:[%s59 + $0x188] sm:$0xff]
    %v126 = vld [vmem:[%s59 + $0x190] sm:$0xff]
    %v127 = vld [vmem:[%s59 + $0x198] sm:$0xff]
    %v128 = vld [vmem:[%s59 + $0x1a0] sm:$0xff]
    %v129 = vld [vmem:[%s59 + $0x1a8] sm:$0xff]
    %v130 = vld [vmem:[%s59 + $0x1b0] sm:$0xff]
    %v131 = vld [vmem:[%s59 + $0x1b8] sm:$0xff]
    %v132 = vld [vmem:[%s59 + $0x1c0] sm:$0xff]
    %v133 = vld [vmem:[%s59 + $0x1c8] sm:$0xff]
    %v134 = vld [vmem:[%s59 + $0x1d0] sm:$0xff]
    %v135 = vld [vmem:[%s59 + $0x1d8] sm:$0xff]
    %v136 = vld [vmem:[%s59 + $0x1e0] sm:$0xff]
    %v137 = vld [vmem:[%s59 + $0x1e8] sm:$0xff]
    %v138 = vld [vmem:[%s59 + $0x1f0] sm:$0xff]
    %v139 = vld [vmem:[%s59 + $0x1f8] sm:$0xff]
    %v140 = vld [vmem:[%s59 + $0x200] sm:$0xff]
    %v141 = vld [vmem:[%s59 + $0x208] sm:$0xff]
    %v142 = vld [vmem:[%s59 + $0x210] sm:$0xff]
    %v143 = vld [vmem:[%s59 + $0x218] sm:$0xff]
    %v144 = vld [vmem:[%s59 + $0x220] sm:$0xff]
    %v145 = vld [vmem:[%s59 + $0x228] sm:$0xff]
    %v146 = vld [vmem:[%s59 + $0x230] sm:$0xff]
    %v147 = vld [vmem:[%s59 + $0x238] sm:$0xff]
    %v148 = vld [vmem:[%s59 + $0x240] sm:$0xff]
    %v149 = vld [vmem:[%s59 + $0x248] sm:$0xff]
    %v150 = vld [vmem:[%s59 + $0x250] sm:$0xff]
    %v151 = vld [vmem:[%s59 + $0x258] sm:$0xff]
    %v152 = vld [vmem:[%s59 + $0x260] sm:$0xff]
    %v153 = vld [vmem:[%s59 + $0x268] sm:$0xff]
    %v154 = vld [vmem:[%s59 + $0x270] sm:$0xff]
    %v155 = vld [vmem:[%s59 + $0x278] sm:$0xff]
    %v156 = vld [vmem:[%s59 + $0x280] sm:$0xff]
    %v157 = vld [vmem:[%s59 + $0x288] sm:$0xff]
    %v158 = vld [vmem:[%s59 + $0x290] sm:$0xff]
    %v159 = vld [vmem:[%s59 + $0x298] sm:$0xff]
    %v160 = vld [vmem:[%s59 + $0x2a0] sm:$0xff]
    %v161 = vld [vmem:[%s59 + $0x2a8] sm:$0xff]
    %v162 = vld [vmem:[%s59 + $0x2b0] sm:$0xff]
    %v163 = vld [vmem:[%s59 + $0x2b8] sm:$0xff]
    %v164 = vld [vmem:[%s59 + $0x2c0] sm:$0xff]
    %v165 = vld [vmem:[%s59 + $0x2c8] sm:$0xff]
    %v166 = vld [vmem:[%s59 + $0x2d0] sm:$0xff]
    %v167 = vld [vmem:[%s59 + $0x2d8] sm:$0xff]
    %v168 = vld [vmem:[%s59 + $0x2e0] sm:$0xff]
    %v169 = vld [vmem:[%s59 + $0x2e8] sm:$0xff]
    %v170 = vld [vmem:[%s59 + $0x2f0] sm:$0xff]
    %v171 = vld [vmem:[%s59 + $0x2f8] sm:$0xff]
    %v172 = vld [vmem:[%s59 + $0x300] sm:$0xff]
    %v173 = vld [vmem:[%s59 + $0x308] sm:$0xff]
    %v174 = vld [vmem:[%s59 + $0x310] sm:$0xff]
    %v175 = vld [vmem:[%s59 + $0x318] sm:$0xff]
    %v176 = vld [vmem:[%s59 + $0x320] sm:$0xff]
    %v177 = vld [vmem:[%s59 + $0x328] sm:$0xff]
    %v178 = vld [vmem:[%s59 + $0x330] sm:$0xff]
    %v179 = vld [vmem:[%s59 + $0x338] sm:$0xff]
    %v180 = vld [vmem:[%s59 + $0x340] sm:$0xff]
    %v181 = vld [vmem:[%s59 + $0x348] sm:$0xff]
    %v182 = vld [vmem:[%s59 + $0x350] sm:$0xff]
    %v183 = vld [vmem:[%s59 + $0x358] sm:$0xff]
    %v184 = vld [vmem:[%s59 + $0x360] sm:$0xff]
    %v185 = vld [vmem:[%s59 + $0x368] sm:$0xff]
    %v186 = vld [vmem:[%s59 + $0x370] sm:$0xff]
    %v187 = vld [vmem:[%s59 + $0x378] sm:$0xff]
    %v188 = vld [vmem:[%s59 + $0x380] sm:$0xff]
    %v189 = vld [vmem:[%s59 + $0x388] sm:$0xff]
    %v190 = vld [vmem:[%s59 + $0x390] sm:$0xff]
    %v191 = vld [vmem:[%s59 + $0x398] sm:$0xff]
    %v192 = vld [vmem:[%s59 + $0x3a0] sm:$0xff]
    %v193 = vld [vmem:[%s59 + $0x3a8] sm:$0xff]
    %v194 = vld [vmem:[%s59 + $0x3b0] sm:$0xff]
    %v195 = vld [vmem:[%s59 + $0x3b8] sm:$0xff]
    %v196 = vld [vmem:[%s59 + $0x3c0] sm:$0xff]
    %v197 = vld [vmem:[%s59 + $0x3c8] sm:$0xff]
    %v198 = vld [vmem:[%s59 + $0x3d0] sm:$0xff]
    %v199 = vld [vmem:[%s59 + $0x3d8] sm:$0xff]
    %v200 = vld [vmem:[%s59 + $0x3e0] sm:$0xff]
    %v201 = vld [vmem:[%s59 + $0x3e8] sm:$0xff]
    %v202 = vld [vmem:[%s59 + $0x3f0] sm:$0xff]
    %v203 = vld [vmem:[%s59 + $0x3f8] sm:$0xff]
    %v204 = vld [vmem:[%s71] sm:$0xff]
    %v205 = vld [vmem:[%s71 + $0x8] sm:$0xff]
    %v206 = vld [vmem:[%s71 + $0x10] sm:$0xff]
    %v207 = vld [vmem:[%s71 + $0x18] sm:$0xff]
    %v208 = vld [vmem:[%s71 + $0x20] sm:$0xff]
    %v209 = vld [vmem:[%s71 + $0x28] sm:$0xff]
    %v210 = vld [vmem:[%s71 + $0x30] sm:$0xff]
    %v211 = vld [vmem:[%s71 + $0x38] sm:$0xff]
    %v212 = vld [vmem:[%s71 + $0x40] sm:$0xff]
    %v213 = vld [vmem:[%s71 + $0x48] sm:$0xff]
    %v214 = vld [vmem:[%s71 + $0x50] sm:$0xff]
    %v215 = vld [vmem:[%s71 + $0x58] sm:$0xff]
    %v216 = vld [vmem:[%s71 + $0x60] sm:$0xff]
    %v217 = vld [vmem:[%s71 + $0x68] sm:$0xff]
    %v218 = vld [vmem:[%s71 + $0x70] sm:$0xff]
    %v219 = vld [vmem:[%s71 + $0x78] sm:$0xff]
    %v220 = vld [vmem:[%s71 + $0x80] sm:$0xff]
    %v221 = vld [vmem:[%s71 + $0x88] sm:$0xff]
    %v222 = vld [vmem:[%s71 + $0x90] sm:$0xff]
    %v223 = vld [vmem:[%s71 + $0x98] sm:$0xff]
    %v224 = vld [vmem:[%s71 + $0xa0] sm:$0xff]
    %v225 = vld [vmem:[%s71 + $0xa8] sm:$0xff]
    %v226 = vld [vmem:[%s71 + $0xb0] sm:$0xff]
    %v227 = vld [vmem:[%s71 + $0xb8] sm:$0xff]
    %v228 = vld [vmem:[%s71 + $0xc0] sm:$0xff]
    %v229 = vld [vmem:[%s71 + $0xc8] sm:$0xff]
    %v230 = vld [vmem:[%s71 + $0xd0] sm:$0xff]
    %v231 = vld [vmem:[%s71 + $0xd8] sm:$0xff]
    %v232 = vld [vmem:[%s71 + $0xe0] sm:$0xff]
    %v233 = vld [vmem:[%s71 + $0xe8] sm:$0xff]
    %v234 = vld [vmem:[%s71 + $0xf0] sm:$0xff]
    %v235 = vld [vmem:[%s71 + $0xf8] sm:$0xff]
    %v236 = vld [vmem:[%s71 + $0x100] sm:$0xff]
    %v237 = vld [vmem:[%s71 + $0x108] sm:$0xff]
    %v238 = vld [vmem:[%s71 + $0x110] sm:$0xff]
    %v239 = vld [vmem:[%s71 + $0x118] sm:$0xff]
    %v240 = vld [vmem:[%s71 + $0x120] sm:$0xff]
    %v241 = vld [vmem:[%s71 + $0x128] sm:$0xff]
    %v242 = vld [vmem:[%s71 + $0x130] sm:$0xff]
    %v243 = vld [vmem:[%s71 + $0x138] sm:$0xff]
    %v244 = vld [vmem:[%s71 + $0x140] sm:$0xff]
    %v245 = vld [vmem:[%s71 + $0x148] sm:$0xff]
    %v246 = vld [vmem:[%s71 + $0x150] sm:$0xff]
    %v247 = vld [vmem:[%s71 + $0x158] sm:$0xff]
    %v248 = vld [vmem:[%s71 + $0x160] sm:$0xff]
    %v249 = vld [vmem:[%s71 + $0x168] sm:$0xff]
    %v250 = vld [vmem:[%s71 + $0x170] sm:$0xff]
    %v251 = vld [vmem:[%s71 + $0x178] sm:$0xff]
    %v252 = vld [vmem:[%s71 + $0x180] sm:$0xff]
    %v253 = vld [vmem:[%s71 + $0x188] sm:$0xff]
    %v254 = vld [vmem:[%s71 + $0x190] sm:$0xff]
    %v255 = vld [vmem:[%s71 + $0x198] sm:$0xff]
    %v256 = vld [vmem:[%s71 + $0x1a0] sm:$0xff]
    %v257 = vld [vmem:[%s71 + $0x1a8] sm:$0xff]
    %v258 = vld [vmem:[%s71 + $0x1b0] sm:$0xff]
    %v259 = vld [vmem:[%s71 + $0x1b8] sm:$0xff]
    %v260 = vld [vmem:[%s71 + $0x1c0] sm:$0xff]
    %v261 = vld [vmem:[%s71 + $0x1c8] sm:$0xff]
    %v262 = vld [vmem:[%s71 + $0x1d0] sm:$0xff]
    %v263 = vld [vmem:[%s71 + $0x1d8] sm:$0xff]
    %v264 = vld [vmem:[%s71 + $0x1e0] sm:$0xff]
    %v265 = vld [vmem:[%s71 + $0x1e8] sm:$0xff]
    %v266 = vld [vmem:[%s71 + $0x1f0] sm:$0xff]
    %v267 = vld [vmem:[%s71 + $0x1f8] sm:$0xff]
    %v268 = vld [vmem:[%s71 + $0x200] sm:$0xff]
    %v269 = vld [vmem:[%s71 + $0x208] sm:$0xff]
    %v270 = vld [vmem:[%s71 + $0x210] sm:$0xff]
    %v271 = vld [vmem:[%s71 + $0x218] sm:$0xff]
    %v272 = vld [vmem:[%s71 + $0x220] sm:$0xff]
    %v273 = vld [vmem:[%s71 + $0x228] sm:$0xff]
    %v274 = vld [vmem:[%s71 + $0x230] sm:$0xff]
    %v275 = vld [vmem:[%s71 + $0x238] sm:$0xff]
    %v276 = vld [vmem:[%s71 + $0x240] sm:$0xff]
    %v277 = vld [vmem:[%s71 + $0x248] sm:$0xff]
    %v278 = vld [vmem:[%s71 + $0x250] sm:$0xff]
    %v279 = vld [vmem:[%s71 + $0x258] sm:$0xff]
    %v280 = vld [vmem:[%s71 + $0x260] sm:$0xff]
    %v281 = vld [vmem:[%s71 + $0x268] sm:$0xff]
    %v282 = vld [vmem:[%s71 + $0x270] sm:$0xff]
    %v283 = vld [vmem:[%s71 + $0x278] sm:$0xff]
    %v284 = vld [vmem:[%s71 + $0x280] sm:$0xff]
    %v285 = vld [vmem:[%s71 + $0x288] sm:$0xff]
    %v286 = vld [vmem:[%s71 + $0x290] sm:$0xff]
    %v287 = vld [vmem:[%s71 + $0x298] sm:$0xff]
    %v288 = vld [vmem:[%s71 + $0x2a0] sm:$0xff]
    %v289 = vld [vmem:[%s71 + $0x2a8] sm:$0xff]
    %v290 = vld [vmem:[%s71 + $0x2b0] sm:$0xff]
    %v291 = vld [vmem:[%s71 + $0x2b8] sm:$0xff]
    %v292 = vld [vmem:[%s71 + $0x2c0] sm:$0xff]
    %v293 = vld [vmem:[%s71 + $0x2c8] sm:$0xff]
    %v294 = vld [vmem:[%s71 + $0x2d0] sm:$0xff]
    %v295 = vld [vmem:[%s71 + $0x2d8] sm:$0xff]
    %v296 = vld [vmem:[%s71 + $0x2e0] sm:$0xff]
    %v297 = vld [vmem:[%s71 + $0x2e8] sm:$0xff]
    %v298 = vld [vmem:[%s71 + $0x2f0] sm:$0xff]
    %v299 = vld [vmem:[%s71 + $0x2f8] sm:$0xff]
    %v300 = vld [vmem:[%s71 + $0x300] sm:$0xff]
    %v301 = vld [vmem:[%s71 + $0x308] sm:$0xff]
    %v302 = vld [vmem:[%s71 + $0x310] sm:$0xff]
    %v303 = vld [vmem:[%s71 + $0x318] sm:$0xff]
    %v304 = vld [vmem:[%s71 + $0x320] sm:$0xff]
    %v305 = vld [vmem:[%s71 + $0x328] sm:$0xff]
    %v306 = vld [vmem:[%s71 + $0x330] sm:$0xff]
    %v307 = vld [vmem:[%s71 + $0x338] sm:$0xff]
    %v308 = vld [vmem:[%s71 + $0x340] sm:$0xff]
    %v309 = vld [vmem:[%s71 + $0x348] sm:$0xff]
    %v310 = vld [vmem:[%s71 + $0x350] sm:$0xff]
    %v311 = vld [vmem:[%s71 + $0x358] sm:$0xff]
    %v312 = vld [vmem:[%s71 + $0x360] sm:$0xff]
    %v313 = vld [vmem:[%s71 + $0x368] sm:$0xff]
    %v314 = vld [vmem:[%s71 + $0x370] sm:$0xff]
    %v315 = vld [vmem:[%s71 + $0x378] sm:$0xff]
    %v316 = vld [vmem:[%s71 + $0x380] sm:$0xff]
    %v317 = vld [vmem:[%s71 + $0x388] sm:$0xff]
    %v318 = vld [vmem:[%s71 + $0x390] sm:$0xff]
    %v319 = vld [vmem:[%s71 + $0x398] sm:$0xff]
    %v320 = vld [vmem:[%s71 + $0x3a0] sm:$0xff]
    %v321 = vld [vmem:[%s71 + $0x3a8] sm:$0xff]
    %v322 = vld [vmem:[%s71 + $0x3b0] sm:$0xff]
    %v323 = vld [vmem:[%s71 + $0x3b8] sm:$0xff]
    %v324 = vld [vmem:[%s71 + $0x3c0] sm:$0xff]
    %v325 = vld [vmem:[%s71 + $0x3c8] sm:$0xff]
    %v326 = vld [vmem:[%s71 + $0x3d0] sm:$0xff]
    %v327 = vld [vmem:[%s71 + $0x3d8] sm:$0xff]
    %v328 = vld [vmem:[%s71 + $0x3e0] sm:$0xff]
    %v329 = vld [vmem:[%s71 + $0x3e8] sm:$0xff]
    %v330 = vld [vmem:[%s71 + $0x3f0] sm:$0xff]
    %v331 = vld [vmem:[%s71 + $0x3f8] sm:$0xff]
    %332 = vxpose.xlu0.b32.start [1/16] %v76, 128
    %333 = vxpose.xlu0.b32.cont [2/16] %v77, 128
    %334 = vxpose.xlu0.b32.cont [3/16] %v78, 128
    %335 = vxpose.xlu0.b32.cont [4/16] %v79, 128
    %336 = vxpose.xlu0.b32.cont [5/16] %v80, 128
    %337 = vxpose.xlu0.b32.cont [6/16] %v81, 128
    %338 = vxpose.xlu0.b32.cont [7/16] %v82, 128
    %339 = vxpose.xlu0.b32.cont [8/16] %v83, 128
    %340 = vxpose.xlu0.b32.cont [9/16] %v84, 128
    %341 = vxpose.xlu0.b32.cont [10/16] %v85, 128
    %342 = vxpose.xlu0.b32.cont [11/16] %v86, 128
    %343 = vxpose.xlu0.b32.cont [12/16] %v87, 128
    %344 = vxpose.xlu0.b32.cont [13/16] %v88, 128
    %345 = vxpose.xlu0.b32.cont [14/16] %v89, 128
    %346 = vxpose.xlu0.b32.cont [15/16] %v90, 128
    %347 = vxpose.xlu0.b32.end [16/16] %v91, 128
    %v348 = vpop.trf.xlu0
    %v349 = vpop.trf.xlu0
    %v350 = vpop.trf.xlu0
    %v351 = vpop.trf.xlu0
    %v352 = vpop.trf.xlu0
    %v353 = vpop.trf.xlu0
    %v354 = vpop.trf.xlu0
    %v355 = vpop.trf.xlu0
    %v356 = vpop.trf.xlu0
    %v357 = vpop.trf.xlu0
    %v358 = vpop.trf.xlu0
    %v359 = vpop.trf.xlu0
    %v360 = vpop.trf.xlu0
    %v361 = vpop.trf.xlu0
    %v362 = vpop.trf.xlu0
    %v363 = vpop.trf.xlu0
    %364 = vxpose.xlu0.b32.start [1/16] %v92, 128
    %365 = vxpose.xlu0.b32.cont [2/16] %v93, 128
    %366 = vxpose.xlu0.b32.cont [3/16] %v94, 128
    %367 = vxpose.xlu0.b32.cont [4/16] %v95, 128
    %368 = vxpose.xlu0.b32.cont [5/16] %v96, 128
    %369 = vxpose.xlu0.b32.cont [6/16] %v97, 128
    %370 = vxpose.xlu0.b32.cont [7/16] %v98, 128
    %371 = vxpose.xlu0.b32.cont [8/16] %v99, 128
    %372 = vxpose.xlu0.b32.cont [9/16] %v100, 128
    %373 = vxpose.xlu0.b32.cont [10/16] %v101, 128
    %374 = vxpose.xlu0.b32.cont [11/16] %v102, 128
    %375 = vxpose.xlu0.b32.cont [12/16] %v103, 128
    %376 = vxpose.xlu0.b32.cont [13/16] %v104, 128
    %377 = vxpose.xlu0.b32.cont [14/16] %v105, 128
    %378 = vxpose.xlu0.b32.cont [15/16] %v106, 128
    %379 = vxpose.xlu0.b32.end [16/16] %v107, 128
    %v380 = vpop.trf.xlu0
    %v381 = vpop.trf.xlu0
    %v382 = vpop.trf.xlu0
    %v383 = vpop.trf.xlu0
    %v384 = vpop.trf.xlu0
    %v385 = vpop.trf.xlu0
    %v386 = vpop.trf.xlu0
    %v387 = vpop.trf.xlu0
    %v388 = vpop.trf.xlu0
    %v389 = vpop.trf.xlu0
    %v390 = vpop.trf.xlu0
    %v391 = vpop.trf.xlu0
    %v392 = vpop.trf.xlu0
    %v393 = vpop.trf.xlu0
    %v394 = vpop.trf.xlu0
    %v395 = vpop.trf.xlu0
    %396 = vxpose.xlu0.b32.start [1/16] %v108, 128
    %397 = vxpose.xlu0.b32.cont [2/16] %v109, 128
    %398 = vxpose.xlu0.b32.cont [3/16] %v110, 128
    %399 = vxpose.xlu0.b32.cont [4/16] %v111, 128
    %400 = vxpose.xlu0.b32.cont [5/16] %v112, 128
    %401 = vxpose.xlu0.b32.cont [6/16] %v113, 128
    %402 = vxpose.xlu0.b32.cont [7/16] %v114, 128
    %403 = vxpose.xlu0.b32.cont [8/16] %v115, 128
    %404 = vxpose.xlu0.b32.cont [9/16] %v116, 128
    %405 = vxpose.xlu0.b32.cont [10/16] %v117, 128
    %406 = vxpose.xlu0.b32.cont [11/16] %v118, 128
    %407 = vxpose.xlu0.b32.cont [12/16] %v119, 128
    %408 = vxpose.xlu0.b32.cont [13/16] %v120, 128
    %409 = vxpose.xlu0.b32.cont [14/16] %v121, 128
    %410 = vxpose.xlu0.b32.cont [15/16] %v122, 128
    %411 = vxpose.xlu0.b32.end [16/16] %v123, 128
    %v412 = vpop.trf.xlu0
    %v413 = vpop.trf.xlu0
    %v414 = vpop.trf.xlu0
    %v415 = vpop.trf.xlu0
    %v416 = vpop.trf.xlu0
    %v417 = vpop.trf.xlu0
    %v418 = vpop.trf.xlu0
    %v419 = vpop.trf.xlu0
    %v420 = vpop.trf.xlu0
    %v421 = vpop.trf.xlu0
    %v422 = vpop.trf.xlu0
    %v423 = vpop.trf.xlu0
    %v424 = vpop.trf.xlu0
    %v425 = vpop.trf.xlu0
    %v426 = vpop.trf.xlu0
    %v427 = vpop.trf.xlu0
    %428 = vxpose.xlu0.b32.start [1/16] %v124, 128
    %429 = vxpose.xlu0.b32.cont [2/16] %v125, 128
    %430 = vxpose.xlu0.b32.cont [3/16] %v126, 128
    %431 = vxpose.xlu0.b32.cont [4/16] %v127, 128
    %432 = vxpose.xlu0.b32.cont [5/16] %v128, 128
    %433 = vxpose.xlu0.b32.cont [6/16] %v129, 128
    %434 = vxpose.xlu0.b32.cont [7/16] %v130, 128
    %435 = vxpose.xlu0.b32.cont [8/16] %v131, 128
    %436 = vxpose.xlu0.b32.cont [9/16] %v132, 128
    %437 = vxpose.xlu0.b32.cont [10/16] %v133, 128
    %438 = vxpose.xlu0.b32.cont [11/16] %v134, 128
    %439 = vxpose.xlu0.b32.cont [12/16] %v135, 128
    %440 = vxpose.xlu0.b32.cont [13/16] %v136, 128
    %441 = vxpose.xlu0.b32.cont [14/16] %v137, 128
    %442 = vxpose.xlu0.b32.cont [15/16] %v138, 128
    %443 = vxpose.xlu0.b32.end [16/16] %v139, 128
    %v444 = vpop.trf.xlu0
    %v445 = vpop.trf.xlu0
    %v446 = vpop.trf.xlu0
    %v447 = vpop.trf.xlu0
    %v448 = vpop.trf.xlu0
    %v449 = vpop.trf.xlu0
    %v450 = vpop.trf.xlu0
    %v451 = vpop.trf.xlu0
    %v452 = vpop.trf.xlu0
    %v453 = vpop.trf.xlu0
    %v454 = vpop.trf.xlu0
    %v455 = vpop.trf.xlu0
    %v456 = vpop.trf.xlu0
    %v457 = vpop.trf.xlu0
    %v458 = vpop.trf.xlu0
    %v459 = vpop.trf.xlu0
    %460 = vxpose.xlu0.b32.start [1/16] %v140, 128
    %461 = vxpose.xlu0.b32.cont [2/16] %v141, 128
    %462 = vxpose.xlu0.b32.cont [3/16] %v142, 128
    %463 = vxpose.xlu0.b32.cont [4/16] %v143, 128
    %464 = vxpose.xlu0.b32.cont [5/16] %v144, 128
    %465 = vxpose.xlu0.b32.cont [6/16] %v145, 128
    %466 = vxpose.xlu0.b32.cont [7/16] %v146, 128
    %467 = vxpose.xlu0.b32.cont [8/16] %v147, 128
    %468 = vxpose.xlu0.b32.cont [9/16] %v148, 128
    %469 = vxpose.xlu0.b32.cont [10/16] %v149, 128
    %470 = vxpose.xlu0.b32.cont [11/16] %v150, 128
    %471 = vxpose.xlu0.b32.cont [12/16] %v151, 128
    %472 = vxpose.xlu0.b32.cont [13/16] %v152, 128
    %473 = vxpose.xlu0.b32.cont [14/16] %v153, 128
    %474 = vxpose.xlu0.b32.cont [15/16] %v154, 128
    %475 = vxpose.xlu0.b32.end [16/16] %v155, 128
    %v476 = vpop.trf.xlu0
    %v477 = vpop.trf.xlu0
    %v478 = vpop.trf.xlu0
    %v479 = vpop.trf.xlu0
    %v480 = vpop.trf.xlu0
    %v481 = vpop.trf.xlu0
    %v482 = vpop.trf.xlu0
    %v483 = vpop.trf.xlu0
    %v484 = vpop.trf.xlu0
    %v485 = vpop.trf.xlu0
    %v486 = vpop.trf.xlu0
    %v487 = vpop.trf.xlu0
    %v488 = vpop.trf.xlu0
    %v489 = vpop.trf.xlu0
    %v490 = vpop.trf.xlu0
    %v491 = vpop.trf.xlu0
    %492 = vxpose.xlu0.b32.start [1/16] %v156, 128
    %493 = vxpose.xlu0.b32.cont [2/16] %v157, 128
    %494 = vxpose.xlu0.b32.cont [3/16] %v158, 128
    %495 = vxpose.xlu0.b32.cont [4/16] %v159, 128
    %496 = vxpose.xlu0.b32.cont [5/16] %v160, 128
    %497 = vxpose.xlu0.b32.cont [6/16] %v161, 128
    %498 = vxpose.xlu0.b32.cont [7/16] %v162, 128
    %499 = vxpose.xlu0.b32.cont [8/16] %v163, 128
    %500 = vxpose.xlu0.b32.cont [9/16] %v164, 128
    %501 = vxpose.xlu0.b32.cont [10/16] %v165, 128
    %502 = vxpose.xlu0.b32.cont [11/16] %v166, 128
    %503 = vxpose.xlu0.b32.cont [12/16] %v167, 128
    %504 = vxpose.xlu0.b32.cont [13/16] %v168, 128
    %505 = vxpose.xlu0.b32.cont [14/16] %v169, 128
    %506 = vxpose.xlu0.b32.cont [15/16] %v170, 128
    %507 = vxpose.xlu0.b32.end [16/16] %v171, 128
    %v508 = vpop.trf.xlu0
    %v509 = vpop.trf.xlu0
    %v510 = vpop.trf.xlu0
    %v511 = vpop.trf.xlu0
    %v512 = vpop.trf.xlu0
    %v513 = vpop.trf.xlu0
    %v514 = vpop.trf.xlu0
    %v515 = vpop.trf.xlu0
    %v516 = vpop.trf.xlu0
    %v517 = vpop.trf.xlu0
    %v518 = vpop.trf.xlu0
    %v519 = vpop.trf.xlu0
    %v520 = vpop.trf.xlu0
    %v521 = vpop.trf.xlu0
    %v522 = vpop.trf.xlu0
    %v523 = vpop.trf.xlu0
    %524 = vxpose.xlu0.b32.start [1/16] %v172, 128
    %525 = vxpose.xlu0.b32.cont [2/16] %v173, 128
    %526 = vxpose.xlu0.b32.cont [3/16] %v174, 128
    %527 = vxpose.xlu0.b32.cont [4/16] %v175, 128
    %528 = vxpose.xlu0.b32.cont [5/16] %v176, 128
    %529 = vxpose.xlu0.b32.cont [6/16] %v177, 128
    %530 = vxpose.xlu0.b32.cont [7/16] %v178, 128
    %531 = vxpose.xlu0.b32.cont [8/16] %v179, 128
    %532 = vxpose.xlu0.b32.cont [9/16] %v180, 128
    %533 = vxpose.xlu0.b32.cont [10/16] %v181, 128
    %534 = vxpose.xlu0.b32.cont [11/16] %v182, 128
    %535 = vxpose.xlu0.b32.cont [12/16] %v183, 128
    %536 = vxpose.xlu0.b32.cont [13/16] %v184, 128
    %537 = vxpose.xlu0.b32.cont [14/16] %v185, 128
    %538 = vxpose.xlu0.b32.cont [15/16] %v186, 128
    %539 = vxpose.xlu0.b32.end [16/16] %v187, 128
    %v540 = vpop.trf.xlu0
    %v541 = vpop.trf.xlu0
    %v542 = vpop.trf.xlu0
    %v543 = vpop.trf.xlu0
    %v544 = vpop.trf.xlu0
    %v545 = vpop.trf.xlu0
    %v546 = vpop.trf.xlu0
    %v547 = vpop.trf.xlu0
    %v548 = vpop.trf.xlu0
    %v549 = vpop.trf.xlu0
    %v550 = vpop.trf.xlu0
    %v551 = vpop.trf.xlu0
    %v552 = vpop.trf.xlu0
    %v553 = vpop.trf.xlu0
    %v554 = vpop.trf.xlu0
    %v555 = vpop.trf.xlu0
    %556 = vxpose.xlu0.b32.start [1/16] %v188, 128
    %557 = vxpose.xlu0.b32.cont [2/16] %v189, 128
    %558 = vxpose.xlu0.b32.cont [3/16] %v190, 128
    %559 = vxpose.xlu0.b32.cont [4/16] %v191, 128
    %560 = vxpose.xlu0.b32.cont [5/16] %v192, 128
    %561 = vxpose.xlu0.b32.cont [6/16] %v193, 128
    %562 = vxpose.xlu0.b32.cont [7/16] %v194, 128
    %563 = vxpose.xlu0.b32.cont [8/16] %v195, 128
    %564 = vxpose.xlu0.b32.cont [9/16] %v196, 128
    %565 = vxpose.xlu0.b32.cont [10/16] %v197, 128
    %566 = vxpose.xlu0.b32.cont [11/16] %v198, 128
    %567 = vxpose.xlu0.b32.cont [12/16] %v199, 128
    %568 = vxpose.xlu0.b32.cont [13/16] %v200, 128
    %569 = vxpose.xlu0.b32.cont [14/16] %v201, 128
    %570 = vxpose.xlu0.b32.cont [15/16] %v202, 128
    %571 = vxpose.xlu0.b32.end [16/16] %v203, 128
    %v572 = vpop.trf.xlu0
    %v573 = vpop.trf.xlu0
    %v574 = vpop.trf.xlu0
    %v575 = vpop.trf.xlu0
    %v576 = vpop.trf.xlu0
    %v577 = vpop.trf.xlu0
    %v578 = vpop.trf.xlu0
    %v579 = vpop.trf.xlu0
    %v580 = vpop.trf.xlu0
    %v581 = vpop.trf.xlu0
    %v582 = vpop.trf.xlu0
    %v583 = vpop.trf.xlu0
    %v584 = vpop.trf.xlu0
    %v585 = vpop.trf.xlu0
    %v586 = vpop.trf.xlu0
    %v587 = vpop.trf.xlu0
    %588 = vxpose.xlu0.b32.start [1/16] %v204, 128
    %589 = vxpose.xlu0.b32.cont [2/16] %v205, 128
    %590 = vxpose.xlu0.b32.cont [3/16] %v206, 128
    %591 = vxpose.xlu0.b32.cont [4/16] %v207, 128
    %592 = vxpose.xlu0.b32.cont [5/16] %v208, 128
    %593 = vxpose.xlu0.b32.cont [6/16] %v209, 128
    %594 = vxpose.xlu0.b32.cont [7/16] %v210, 128
    %595 = vxpose.xlu0.b32.cont [8/16] %v211, 128
    %596 = vxpose.xlu0.b32.cont [9/16] %v212, 128
    %597 = vxpose.xlu0.b32.cont [10/16] %v213, 128
    %598 = vxpose.xlu0.b32.cont [11/16] %v214, 128
    %599 = vxpose.xlu0.b32.cont [12/16] %v215, 128
    %600 = vxpose.xlu0.b32.cont [13/16] %v216, 128
    %601 = vxpose.xlu0.b32.cont [14/16] %v217, 128
    %602 = vxpose.xlu0.b32.cont [15/16] %v218, 128
    %603 = vxpose.xlu0.b32.end [16/16] %v219, 128
    %v604 = vpop.trf.xlu0
    %v605 = vpop.trf.xlu0
    %v606 = vpop.trf.xlu0
    %v607 = vpop.trf.xlu0
    %v608 = vpop.trf.xlu0
    %v609 = vpop.trf.xlu0
    %v610 = vpop.trf.xlu0
    %v611 = vpop.trf.xlu0
    %v612 = vpop.trf.xlu0
    %v613 = vpop.trf.xlu0
    %v614 = vpop.trf.xlu0
    %v615 = vpop.trf.xlu0
    %v616 = vpop.trf.xlu0
    %v617 = vpop.trf.xlu0
    %v618 = vpop.trf.xlu0
    %v619 = vpop.trf.xlu0
    %620 = vxpose.xlu0.b32.start [1/16] %v220, 128
    %621 = vxpose.xlu0.b32.cont [2/16] %v221, 128
    %622 = vxpose.xlu0.b32.cont [3/16] %v222, 128
    %623 = vxpose.xlu0.b32.cont [4/16] %v223, 128
    %624 = vxpose.xlu0.b32.cont [5/16] %v224, 128
    %625 = vxpose.xlu0.b32.cont [6/16] %v225, 128
    %626 = vxpose.xlu0.b32.cont [7/16] %v226, 128
    %627 = vxpose.xlu0.b32.cont [8/16] %v227, 128
    %628 = vxpose.xlu0.b32.cont [9/16] %v228, 128
    %629 = vxpose.xlu0.b32.cont [10/16] %v229, 128
    %630 = vxpose.xlu0.b32.cont [11/16] %v230, 128
    %631 = vxpose.xlu0.b32.cont [12/16] %v231, 128
    %632 = vxpose.xlu0.b32.cont [13/16] %v232, 128
    %633 = vxpose.xlu0.b32.cont [14/16] %v233, 128
    %634 = vxpose.xlu0.b32.cont [15/16] %v234, 128
    %635 = vxpose.xlu0.b32.end [16/16] %v235, 128
    %v636 = vpop.trf.xlu0
    %v637 = vpop.trf.xlu0
    %v638 = vpop.trf.xlu0
    %v639 = vpop.trf.xlu0
    %v640 = vpop.trf.xlu0
    %v641 = vpop.trf.xlu0
    %v642 = vpop.trf.xlu0
    %v643 = vpop.trf.xlu0
    %v644 = vpop.trf.xlu0
    %v645 = vpop.trf.xlu0
    %v646 = vpop.trf.xlu0
    %v647 = vpop.trf.xlu0
    %v648 = vpop.trf.xlu0
    %v649 = vpop.trf.xlu0
    %v650 = vpop.trf.xlu0
    %v651 = vpop.trf.xlu0
    %652 = vxpose.xlu0.b32.start [1/16] %v236, 128
    %653 = vxpose.xlu0.b32.cont [2/16] %v237, 128
    %654 = vxpose.xlu0.b32.cont [3/16] %v238, 128
    %655 = vxpose.xlu0.b32.cont [4/16] %v239, 128
    %656 = vxpose.xlu0.b32.cont [5/16] %v240, 128
    %657 = vxpose.xlu0.b32.cont [6/16] %v241, 128
    %658 = vxpose.xlu0.b32.cont [7/16] %v242, 128
    %659 = vxpose.xlu0.b32.cont [8/16] %v243, 128
    %660 = vxpose.xlu0.b32.cont [9/16] %v244, 128
    %661 = vxpose.xlu0.b32.cont [10/16] %v245, 128
    %662 = vxpose.xlu0.b32.cont [11/16] %v246, 128
    %663 = vxpose.xlu0.b32.cont [12/16] %v247, 128
    %664 = vxpose.xlu0.b32.cont [13/16] %v248, 128
    %665 = vxpose.xlu0.b32.cont [14/16] %v249, 128
    %666 = vxpose.xlu0.b32.cont [15/16] %v250, 128
    %667 = vxpose.xlu0.b32.end [16/16] %v251, 128
    %v668 = vpop.trf.xlu0
    %v669 = vpop.trf.xlu0
    %v670 = vpop.trf.xlu0
    %v671 = vpop.trf.xlu0
    %v672 = vpop.trf.xlu0
    %v673 = vpop.trf.xlu0
    %v674 = vpop.trf.xlu0
    %v675 = vpop.trf.xlu0
    %v676 = vpop.trf.xlu0
    %v677 = vpop.trf.xlu0
    %v678 = vpop.trf.xlu0
    %v679 = vpop.trf.xlu0
    %v680 = vpop.trf.xlu0
    %v681 = vpop.trf.xlu0
    %v682 = vpop.trf.xlu0
    %v683 = vpop.trf.xlu0
    %684 = vxpose.xlu0.b32.start [1/16] %v252, 128
    %685 = vxpose.xlu0.b32.cont [2/16] %v253, 128
    %686 = vxpose.xlu0.b32.cont [3/16] %v254, 128
    %687 = vxpose.xlu0.b32.cont [4/16] %v255, 128
    %688 = vxpose.xlu0.b32.cont [5/16] %v256, 128
    %689 = vxpose.xlu0.b32.cont [6/16] %v257, 128
    %690 = vxpose.xlu0.b32.cont [7/16] %v258, 128
    %691 = vxpose.xlu0.b32.cont [8/16] %v259, 128
    %692 = vxpose.xlu0.b32.cont [9/16] %v260, 128
    %693 = vxpose.xlu0.b32.cont [10/16] %v261, 128
    %694 = vxpose.xlu0.b32.cont [11/16] %v262, 128
    %695 = vxpose.xlu0.b32.cont [12/16] %v263, 128
    %696 = vxpose.xlu0.b32.cont [13/16] %v264, 128
    %697 = vxpose.xlu0.b32.cont [14/16] %v265, 128
    %698 = vxpose.xlu0.b32.cont [15/16] %v266, 128
    %699 = vxpose.xlu0.b32.end [16/16] %v267, 128
    %v700 = vpop.trf.xlu0
    %v701 = vpop.trf.xlu0
    %v702 = vpop.trf.xlu0
    %v703 = vpop.trf.xlu0
    %v704 = vpop.trf.xlu0
    %v705 = vpop.trf.xlu0
    %v706 = vpop.trf.xlu0
    %v707 = vpop.trf.xlu0
    %v708 = vpop.trf.xlu0
    %v709 = vpop.trf.xlu0
    %v710 = vpop.trf.xlu0
    %v711 = vpop.trf.xlu0
    %v712 = vpop.trf.xlu0
    %v713 = vpop.trf.xlu0
    %v714 = vpop.trf.xlu0
    %v715 = vpop.trf.xlu0
    %716 = vxpose.xlu0.b32.start [1/16] %v268, 128
    %717 = vxpose.xlu0.b32.cont [2/16] %v269, 128
    %718 = vxpose.xlu0.b32.cont [3/16] %v270, 128
    %719 = vxpose.xlu0.b32.cont [4/16] %v271, 128
    %720 = vxpose.xlu0.b32.cont [5/16] %v272, 128
    %721 = vxpose.xlu0.b32.cont [6/16] %v273, 128
    %722 = vxpose.xlu0.b32.cont [7/16] %v274, 128
    %723 = vxpose.xlu0.b32.cont [8/16] %v275, 128
    %724 = vxpose.xlu0.b32.cont [9/16] %v276, 128
    %725 = vxpose.xlu0.b32.cont [10/16] %v277, 128
    %726 = vxpose.xlu0.b32.cont [11/16] %v278, 128
    %727 = vxpose.xlu0.b32.cont [12/16] %v279, 128
    %728 = vxpose.xlu0.b32.cont [13/16] %v280, 128
    %729 = vxpose.xlu0.b32.cont [14/16] %v281, 128
    %730 = vxpose.xlu0.b32.cont [15/16] %v282, 128
    %731 = vxpose.xlu0.b32.end [16/16] %v283, 128
    %v732 = vpop.trf.xlu0
    %v733 = vpop.trf.xlu0
    %v734 = vpop.trf.xlu0
    %v735 = vpop.trf.xlu0
    %v736 = vpop.trf.xlu0
    %v737 = vpop.trf.xlu0
    %v738 = vpop.trf.xlu0
    %v739 = vpop.trf.xlu0
    %v740 = vpop.trf.xlu0
    %v741 = vpop.trf.xlu0
    %v742 = vpop.trf.xlu0
    %v743 = vpop.trf.xlu0
    %v744 = vpop.trf.xlu0
    %v745 = vpop.trf.xlu0
    %v746 = vpop.trf.xlu0
    %v747 = vpop.trf.xlu0
    %748 = vxpose.xlu0.b32.start [1/16] %v284, 128
    %749 = vxpose.xlu0.b32.cont [2/16] %v285, 128
    %750 = vxpose.xlu0.b32.cont [3/16] %v286, 128
    %751 = vxpose.xlu0.b32.cont [4/16] %v287, 128
    %752 = vxpose.xlu0.b32.cont [5/16] %v288, 128
    %753 = vxpose.xlu0.b32.cont [6/16] %v289, 128
    %754 = vxpose.xlu0.b32.cont [7/16] %v290, 128
    %755 = vxpose.xlu0.b32.cont [8/16] %v291, 128
    %756 = vxpose.xlu0.b32.cont [9/16] %v292, 128
    %757 = vxpose.xlu0.b32.cont [10/16] %v293, 128
    %758 = vxpose.xlu0.b32.cont [11/16] %v294, 128
    %759 = vxpose.xlu0.b32.cont [12/16] %v295, 128
    %760 = vxpose.xlu0.b32.cont [13/16] %v296, 128
    %761 = vxpose.xlu0.b32.cont [14/16] %v297, 128
    %762 = vxpose.xlu0.b32.cont [15/16] %v298, 128
    %763 = vxpose.xlu0.b32.end [16/16] %v299, 128
    %v764 = vpop.trf.xlu0
    %v765 = vpop.trf.xlu0
    %v766 = vpop.trf.xlu0
    %v767 = vpop.trf.xlu0
    %v768 = vpop.trf.xlu0
    %v769 = vpop.trf.xlu0
    %v770 = vpop.trf.xlu0
    %v771 = vpop.trf.xlu0
    %v772 = vpop.trf.xlu0
    %v773 = vpop.trf.xlu0
    %v774 = vpop.trf.xlu0
    %v775 = vpop.trf.xlu0
    %v776 = vpop.trf.xlu0
    %v777 = vpop.trf.xlu0
    %v778 = vpop.trf.xlu0
    %v779 = vpop.trf.xlu0
    %780 = vxpose.xlu0.b32.start [1/16] %v300, 128
    %781 = vxpose.xlu0.b32.cont [2/16] %v301, 128
    %782 = vxpose.xlu0.b32.cont [3/16] %v302, 128
    %783 = vxpose.xlu0.b32.cont [4/16] %v303, 128
    %784 = vxpose.xlu0.b32.cont [5/16] %v304, 128
    %785 = vxpose.xlu0.b32.cont [6/16] %v305, 128
    %786 = vxpose.xlu0.b32.cont [7/16] %v306, 128
    %787 = vxpose.xlu0.b32.cont [8/16] %v307, 128
    %788 = vxpose.xlu0.b32.cont [9/16] %v308, 128
    %789 = vxpose.xlu0.b32.cont [10/16] %v309, 128
    %790 = vxpose.xlu0.b32.cont [11/16] %v310, 128
    %791 = vxpose.xlu0.b32.cont [12/16] %v311, 128
    %792 = vxpose.xlu0.b32.cont [13/16] %v312, 128
    %793 = vxpose.xlu0.b32.cont [14/16] %v313, 128
    %794 = vxpose.xlu0.b32.cont [15/16] %v314, 128
    %795 = vxpose.xlu0.b32.end [16/16] %v315, 128
    %v796 = vpop.trf.xlu0
    %v797 = vpop.trf.xlu0
    %v798 = vpop.trf.xlu0
    %v799 = vpop.trf.xlu0
    %v800 = vpop.trf.xlu0
    %v801 = vpop.trf.xlu0
    %v802 = vpop.trf.xlu0
    %v803 = vpop.trf.xlu0
    %v804 = vpop.trf.xlu0
    %v805 = vpop.trf.xlu0
    %v806 = vpop.trf.xlu0
    %v807 = vpop.trf.xlu0
    %v808 = vpop.trf.xlu0
    %v809 = vpop.trf.xlu0
    %v810 = vpop.trf.xlu0
    %v811 = vpop.trf.xlu0
    %812 = vxpose.xlu0.b32.start [1/16] %v316, 128
    %813 = vxpose.xlu0.b32.cont [2/16] %v317, 128
    %814 = vxpose.xlu0.b32.cont [3/16] %v318, 128
    %815 = vxpose.xlu0.b32.cont [4/16] %v319, 128
    %816 = vxpose.xlu0.b32.cont [5/16] %v320, 128
    %817 = vxpose.xlu0.b32.cont [6/16] %v321, 128
    %818 = vxpose.xlu0.b32.cont [7/16] %v322, 128
    %819 = vxpose.xlu0.b32.cont [8/16] %v323, 128
    %820 = vxpose.xlu0.b32.cont [9/16] %v324, 128
    %821 = vxpose.xlu0.b32.cont [10/16] %v325, 128
    %822 = vxpose.xlu0.b32.cont [11/16] %v326, 128
    %823 = vxpose.xlu0.b32.cont [12/16] %v327, 128
    %824 = vxpose.xlu0.b32.cont [13/16] %v328, 128
    %825 = vxpose.xlu0.b32.cont [14/16] %v329, 128
    %826 = vxpose.xlu0.b32.cont [15/16] %v330, 128
    %827 = vxpose.xlu0.b32.end [16/16] %v331, 128
    %v828 = vpop.trf.xlu0
    %v829 = vpop.trf.xlu0
    %v830 = vpop.trf.xlu0
    %v831 = vpop.trf.xlu0
    %v832 = vpop.trf.xlu0
    %v833 = vpop.trf.xlu0
    %v834 = vpop.trf.xlu0
    %v835 = vpop.trf.xlu0
    %v836 = vpop.trf.xlu0
    %v837 = vpop.trf.xlu0
    %v838 = vpop.trf.xlu0
    %v839 = vpop.trf.xlu0
    %v840 = vpop.trf.xlu0
    %v841 = vpop.trf.xlu0
    %v842 = vpop.trf.xlu0
    %v843 = vpop.trf.xlu0
    %p844 = scmp.eq.s32.totalorder 0, 0
    // Predicated region
    $region10: #{tpu_custom_call.1} parent=1 // pred_check
      %p845 = pneg %p844
    $region11: #{tpu_custom_call.1} parent=1 // pred_check_branch
      %847 = sbr.rel (%p845) target = $region13
    $region12: #{tpu_custom_call.1} parent=1 // pred_region
      %848 = vst [vmem:[#allocation2] sm:$0xff] 0.0
    $region13: #{tpu_custom_call.1} parent=1 // pred_fallthru
      _
    %s849 = sadd.s32 0, 0
    %s850 = smul.u32 %s849, 1024
    %v851 = vlaneseq
    %v852 = vshrl.u32 %v851, 7
    %v853 = vlaneseq
    %v854 = vand.u32 %v853, 127
    %v855 = vmul.u32 %v852, 128
    %v856 = vstv %s850
    %v857 = vadd.s32 %v856, %v855
    %v858 = vadd.s32 %v857, %v854
    %vm859 = vcmp.lt.s32.totalorder %v858, 98
    %v860 = vld [vmem:[#allocation2] sm:$0xff]
    %vm861 = vcmp.gt.f32.partialorder %v604, 0.0
    %vm862 = vcmp.gt.f32.partialorder %v636, 0.0
    %vm863 = vcmp.gt.f32.partialorder %v668, 0.0
    %vm864 = vcmp.gt.f32.partialorder %v700, 0.0
    %vm865 = vcmp.gt.f32.partialorder %v732, 0.0
    %vm866 = vcmp.gt.f32.partialorder %v764, 0.0
    %vm867 = vcmp.gt.f32.partialorder %v796, 0.0
    %vm868 = vcmp.gt.f32.partialorder %v828, 0.0
    %v869 = vsel %vm861, 1, 0
    %v870 = vsel %vm862, 1, 0
    %v871 = vsel %vm863, 1, 0
    %v872 = vsel %vm864, 1, 0
    %v873 = vsel %vm865, 1, 0
    %v874 = vsel %vm866, 1, 0
    %v875 = vsel %vm867, 1, 0
    %v876 = vsel %vm868, 1, 0
    %v877 = vrot.slane %v869, 4
    %v878 = vrot.slane %v870, 3
    %vm879 = vcmask 1041409
    %v880 = vsel %vm879, %v878, %v877
    %v881 = vrot.slane %v871, 2
    %vm882 = vcmask 1042434
    %v883 = vsel %vm882, %v881, %v880
    %v884 = vrot.slane %v872, 1
    %vm885 = vcmask 1043459
    %v886 = vsel %vm885, %v884, %v883
    %vm887 = vcmask 1044484
    %v888 = vsel %vm887, %v873, %v886
    %v889 = vrot.slane %v874, 7
    %vm890 = vcmask 1045509
    %v891 = vsel %vm890, %v889, %v888
    %v892 = vrot.slane %v875, 6
    %vm893 = vcmask 1046534
    %v894 = vsel %vm893, %v892, %v891
    %v895 = vrot.slane %v876, 5
    %vm896 = vcmask 1047559
    %v897 = vsel %vm896, %v895, %v894
    %vm898 = vcmp.ne.s32.totalorder %v897, 0
    %vm899 = vmand %vm859, %vm898
    %vm900 = vcmp.eq.f32.partialorder %v604, 0.0
    %vm901 = vcmp.eq.f32.partialorder %v636, 0.0
    %vm902 = vcmp.eq.f32.partialorder %v668, 0.0
    %vm903 = vcmp.eq.f32.partialorder %v700, 0.0
    %vm904 = vcmp.eq.f32.partialorder %v732, 0.0
    %vm905 = vcmp.eq.f32.partialorder %v764, 0.0
    %vm906 = vcmp.eq.f32.partialorder %v796, 0.0
    %vm907 = vcmp.eq.f32.partialorder %v828, 0.0
    %v908 = vsel %vm900, 1, 0
    %v909 = vsel %vm901, 1, 0
    %v910 = vsel %vm902, 1, 0
    %v911 = vsel %vm903, 1, 0
    %v912 = vsel %vm904, 1, 0
    %v913 = vsel %vm905, 1, 0
    %v914 = vsel %vm906, 1, 0
    %v915 = vsel %vm907, 1, 0
    %v916 = vrot.slane %v908, 4
    %v917 = vrot.slane %v909, 3
    %v918 = vsel %vm879, %v917, %v916
    %v919 = vrot.slane %v910, 2
    %v920 = vsel %vm882, %v919, %v918
    %v921 = vrot.slane %v911, 1
    %v922 = vsel %vm885, %v921, %v920
    %v923 = vsel %vm887, %v912, %v922
    %v924 = vrot.slane %v913, 7
    %v925 = vsel %vm890, %v924, %v923
    %v926 = vrot.slane %v914, 6
    %v927 = vsel %vm893, %v926, %v925
    %v928 = vrot.slane %v915, 5
    %v929 = vsel %vm896, %v928, %v927
    %vm930 = vcmp.ne.s32.totalorder %v929, 0
    %vm931 = vmand %vm859, %vm930
    %v932 = vsub.f32 %v348, %v604
    %v933 = vsub.f32 %v380, %v636
    %v934 = vsub.f32 %v412, %v668
    %v935 = vsub.f32 %v444, %v700
    %v936 = vsub.f32 %v476, %v732
    %v937 = vsub.f32 %v508, %v764
    %v938 = vsub.f32 %v540, %v796
    %v939 = vsub.f32 %v572, %v828
    %v940 = vmul.f32 %v932, %v932
    %v941 = vmul.f32 %v933, %v933
    %v942 = vmul.f32 %v934, %v934
    %v943 = vmul.f32 %v935, %v935
    %v944 = vmul.f32 %v936, %v936
    %v945 = vmul.f32 %v937, %v937
    %v946 = vmul.f32 %v938, %v938
    %v947 = vmul.f32 %v939, %v939
    %v948 = vadd.f32 %v940, 0.0
    %v949 = vadd.f32 %v941, 0.0
    %v950 = vadd.f32 %v942, 0.0
    %v951 = vadd.f32 %v943, 0.0
    %v952 = vadd.f32 %v944, 0.0
    %v953 = vadd.f32 %v945, 0.0
    %v954 = vadd.f32 %v946, 0.0
    %v955 = vadd.f32 %v947, 0.0
    %v956 = vsub.f32 %v349, %v605
    %v957 = vsub.f32 %v381, %v637
    %v958 = vsub.f32 %v413, %v669
    %v959 = vsub.f32 %v445, %v701
    %v960 = vsub.f32 %v477, %v733
    %v961 = vsub.f32 %v509, %v765
    %v962 = vsub.f32 %v541, %v797
    %v963 = vsub.f32 %v573, %v829
    %v964 = vmul.f32 %v956, %v956
    %v965 = vmul.f32 %v957, %v957
    %v966 = vmul.f32 %v958, %v958
    %v967 = vmul.f32 %v959, %v959
    %v968 = vmul.f32 %v960, %v960
    %v969 = vmul.f32 %v961, %v961
    %v970 = vmul.f32 %v962, %v962
    %v971 = vmul.f32 %v963, %v963
    %v980 = vrot.slane %v964, 5
    %v981 = vrot.slane %v965, 5
    %v982 = vrot.slane %v966, 5
    %v983 = vrot.slane %v967, 5
    %v984 = vrot.slane %v968, 5
    %v985 = vrot.slane %v969, 5
    %v986 = vrot.slane %v970, 5
    %v987 = vrot.slane %v971, 5
    %v996 = vadd.f32 %v948, %v980
    %v997 = vadd.f32 %v949, %v981
    %v998 = vadd.f32 %v950, %v982
    %v999 = vadd.f32 %v951, %v983
    %v1000 = vadd.f32 %v952, %v984
    %v1001 = vadd.f32 %v953, %v985
    %v1002 = vadd.f32 %v954, %v986
    %v1003 = vadd.f32 %v955, %v987
    %v1012 = vrot.slane %v996, 4
    %v1013 = vrot.slane %v997, 3
    %v1014 = vsel %vm879, %v1013, %v1012
    %v1015 = vrot.slane %v998, 2
    %v1016 = vsel %vm882, %v1015, %v1014
    %v1017 = vrot.slane %v999, 1
    %v1018 = vsel %vm885, %v1017, %v1016
    %v1019 = vsel %vm887, %v1000, %v1018
    %v1020 = vrot.slane %v1001, 7
    %v1021 = vsel %vm890, %v1020, %v1019
    %v1022 = vrot.slane %v1002, 6
    %v1023 = vsel %vm893, %v1022, %v1021
    %v1024 = vrot.slane %v1003, 5
    %v1025 = vsel %vm896, %v1024, %v1023
    %v1027 = vsel %vm931, %v1025, 0.0
    %v1028 = vadd.f32 %v964, 0.0
    %v1029 = vadd.f32 %v965, 0.0
    %v1030 = vadd.f32 %v966, 0.0
    %v1031 = vadd.f32 %v967, 0.0
    %v1032 = vadd.f32 %v968, 0.0
    %v1033 = vadd.f32 %v969, 0.0
    %v1034 = vadd.f32 %v970, 0.0
    %v1035 = vadd.f32 %v971, 0.0
    %v1036 = vrot.slane %v964, 1
    %v1037 = vrot.slane %v965, 1
    %v1038 = vrot.slane %v966, 1
    %v1039 = vrot.slane %v967, 1
    %v1040 = vrot.slane %v968, 1
    %v1041 = vrot.slane %v969, 1
    %v1042 = vrot.slane %v970, 1
    %v1043 = vrot.slane %v971, 1
    %v1052 = vadd.f32 %v1028, %v1036
    %v1053 = vadd.f32 %v1029, %v1037
    %v1054 = vadd.f32 %v1030, %v1038
    %v1055 = vadd.f32 %v1031, %v1039
    %v1056 = vadd.f32 %v1032, %v1040
    %v1057 = vadd.f32 %v1033, %v1041
    %v1058 = vadd.f32 %v1034, %v1042
    %v1059 = vadd.f32 %v1035, %v1043
    %v1060 = vrot.slane %v964, 2
    %v1061 = vrot.slane %v965, 2
    %v1062 = vrot.slane %v966, 2
    %v1063 = vrot.slane %v967, 2
    %v1064 = vrot.slane %v968, 2
    %v1065 = vrot.slane %v969, 2
    %v1066 = vrot.slane %v970, 2
    %v1067 = vrot.slane %v971, 2
    %v1076 = vadd.f32 %v1052, %v1060
    %v1077 = vadd.f32 %v1053, %v1061
    %v1078 = vadd.f32 %v1054, %v1062
    %v1079 = vadd.f32 %v1055, %v1063
    %v1080 = vadd.f32 %v1056, %v1064
    %v1081 = vadd.f32 %v1057, %v1065
    %v1082 = vadd.f32 %v1058, %v1066
    %v1083 = vadd.f32 %v1059, %v1067
    %v1084 = vrot.slane %v964, 3
    %v1085 = vrot.slane %v965, 3
    %v1086 = vrot.slane %v966, 3
    %v1087 = vrot.slane %v967, 3
    %v1088 = vrot.slane %v968, 3
    %v1089 = vrot.slane %v969, 3
    %v1090 = vrot.slane %v970, 3
    %v1091 = vrot.slane %v971, 3
    %v1100 = vadd.f32 %v1076, %v1084
    %v1101 = vadd.f32 %v1077, %v1085
    %v1102 = vadd.f32 %v1078, %v1086
    %v1103 = vadd.f32 %v1079, %v1087
    %v1104 = vadd.f32 %v1080, %v1088
    %v1105 = vadd.f32 %v1081, %v1089
    %v1106 = vadd.f32 %v1082, %v1090
    %v1107 = vadd.f32 %v1083, %v1091
    %v1108 = vrot.slane %v964, 4
    %v1109 = vrot.slane %v965, 4
    %v1110 = vrot.slane %v966, 4
    %v1111 = vrot.slane %v967, 4
    %v1112 = vrot.slane %v968, 4
    %v1113 = vrot.slane %v969, 4
    %v1114 = vrot.slane %v970, 4
    %v1115 = vrot.slane %v971, 4
    %v1124 = vadd.f32 %v1100, %v1108
    %v1125 = vadd.f32 %v1101, %v1109
    %v1126 = vadd.f32 %v1102, %v1110
    %v1127 = vadd.f32 %v1103, %v1111
    %v1128 = vadd.f32 %v1104, %v1112
    %v1129 = vadd.f32 %v1105, %v1113
    %v1130 = vadd.f32 %v1106, %v1114
    %v1131 = vadd.f32 %v1107, %v1115
    %v1132 = vadd.f32 %v1124, %v980
    %v1133 = vadd.f32 %v1125, %v981
    %v1134 = vadd.f32 %v1126, %v982
    %v1135 = vadd.f32 %v1127, %v983
    %v1136 = vadd.f32 %v1128, %v984
    %v1137 = vadd.f32 %v1129, %v985
    %v1138 = vadd.f32 %v1130, %v986
    %v1139 = vadd.f32 %v1131, %v987
    %v1140 = vsub.f32 %v350, %v606
    %v1141 = vsub.f32 %v382, %v638
    %v1142 = vsub.f32 %v414, %v670
    %v1143 = vsub.f32 %v446, %v702
    %v1144 = vsub.f32 %v478, %v734
    %v1145 = vsub.f32 %v510, %v766
    %v1146 = vsub.f32 %v542, %v798
    %v1147 = vsub.f32 %v574, %v830
    %v1148 = vmul.f32 %v1140, %v1140
    %v1149 = vmul.f32 %v1141, %v1141
    %v1150 = vmul.f32 %v1142, %v1142
    %v1151 = vmul.f32 %v1143, %v1143
    %v1152 = vmul.f32 %v1144, %v1144
    %v1153 = vmul.f32 %v1145, %v1145
    %v1154 = vmul.f32 %v1146, %v1146
    %v1155 = vmul.f32 %v1147, %v1147
    %v1164 = vrot.slane %v1148, 6
    %v1165 = vrot.slane %v1149, 6
    %v1166 = vrot.slane %v1150, 6
    %v1167 = vrot.slane %v1151, 6
    %v1168 = vrot.slane %v1152, 6
    %v1169 = vrot.slane %v1153, 6
    %v1170 = vrot.slane %v1154, 6
    %v1171 = vrot.slane %v1155, 6
    %v1180 = vadd.f32 %v1132, %v1164
    %v1181 = vadd.f32 %v1133, %v1165
    %v1182 = vadd.f32 %v1134, %v1166
    %v1183 = vadd.f32 %v1135, %v1167
    %v1184 = vadd.f32 %v1136, %v1168
    %v1185 = vadd.f32 %v1137, %v1169
    %v1186 = vadd.f32 %v1138, %v1170
    %v1187 = vadd.f32 %v1139, %v1171
    %v1188 = vrot.slane %v1148, 7
    %v1189 = vrot.slane %v1149, 7
    %v1190 = vrot.slane %v1150, 7
    %v1191 = vrot.slane %v1151, 7
    %v1192 = vrot.slane %v1152, 7
    %v1193 = vrot.slane %v1153, 7
    %v1194 = vrot.slane %v1154, 7
    %v1195 = vrot.slane %v1155, 7
    %v1204 = vadd.f32 %v1180, %v1188
    %v1205 = vadd.f32 %v1181, %v1189
    %v1206 = vadd.f32 %v1182, %v1190
    %v1207 = vadd.f32 %v1183, %v1191
    %v1208 = vadd.f32 %v1184, %v1192
    %v1209 = vadd.f32 %v1185, %v1193
    %v1210 = vadd.f32 %v1186, %v1194
    %v1211 = vadd.f32 %v1187, %v1195
    %v1212 = vadd.f32 %v1204, %v1148
    %v1213 = vadd.f32 %v1205, %v1149
    %v1214 = vadd.f32 %v1206, %v1150
    %v1215 = vadd.f32 %v1207, %v1151
    %v1216 = vadd.f32 %v1208, %v1152
    %v1217 = vadd.f32 %v1209, %v1153
    %v1218 = vadd.f32 %v1210, %v1154
    %v1219 = vadd.f32 %v1211, %v1155
    %v1220 = vrot.slane %v1148, 1
    %v1221 = vrot.slane %v1149, 1
    %v1222 = vrot.slane %v1150, 1
    %v1223 = vrot.slane %v1151, 1
    %v1224 = vrot.slane %v1152, 1
    %v1225 = vrot.slane %v1153, 1
    %v1226 = vrot.slane %v1154, 1
    %v1227 = vrot.slane %v1155, 1
    %v1236 = vadd.f32 %v1212, %v1220
    %v1237 = vadd.f32 %v1213, %v1221
    %v1238 = vadd.f32 %v1214, %v1222
    %v1239 = vadd.f32 %v1215, %v1223
    %v1240 = vadd.f32 %v1216, %v1224
    %v1241 = vadd.f32 %v1217, %v1225
    %v1242 = vadd.f32 %v1218, %v1226
    %v1243 = vadd.f32 %v1219, %v1227
    %v1244 = vrot.slane %v1148, 2
    %v1245 = vrot.slane %v1149, 2
    %v1246 = vrot.slane %v1150, 2
    %v1247 = vrot.slane %v1151, 2
    %v1248 = vrot.slane %v1152, 2
    %v1249 = vrot.slane %v1153, 2
    %v1250 = vrot.slane %v1154, 2
    %v1251 = vrot.slane %v1155, 2
    %v1260 = vadd.f32 %v1236, %v1244
    %v1261 = vadd.f32 %v1237, %v1245
    %v1262 = vadd.f32 %v1238, %v1246
    %v1263 = vadd.f32 %v1239, %v1247
    %v1264 = vadd.f32 %v1240, %v1248
    %v1265 = vadd.f32 %v1241, %v1249
    %v1266 = vadd.f32 %v1242, %v1250
    %v1267 = vadd.f32 %v1243, %v1251
    %v1268 = vrot.slane %v1148, 3
    %v1269 = vrot.slane %v1149, 3
    %v1270 = vrot.slane %v1150, 3
    %v1271 = vrot.slane %v1151, 3
    %v1272 = vrot.slane %v1152, 3
    %v1273 = vrot.slane %v1153, 3
    %v1274 = vrot.slane %v1154, 3
    %v1275 = vrot.slane %v1155, 3
    %v1284 = vadd.f32 %v1260, %v1268
    %v1285 = vadd.f32 %v1261, %v1269
    %v1286 = vadd.f32 %v1262, %v1270
    %v1287 = vadd.f32 %v1263, %v1271
    %v1288 = vadd.f32 %v1264, %v1272
    %v1289 = vadd.f32 %v1265, %v1273
    %v1290 = vadd.f32 %v1266, %v1274
    %v1291 = vadd.f32 %v1267, %v1275
    %v1292 = vrot.slane %v1148, 4
    %v1293 = vrot.slane %v1149, 4
    %v1294 = vrot.slane %v1150, 4
    %v1295 = vrot.slane %v1151, 4
    %v1296 = vrot.slane %v1152, 4
    %v1297 = vrot.slane %v1153, 4
    %v1298 = vrot.slane %v1154, 4
    %v1299 = vrot.slane %v1155, 4
    %v1308 = vadd.f32 %v1284, %v1292
    %v1309 = vadd.f32 %v1285, %v1293
    %v1310 = vadd.f32 %v1286, %v1294
    %v1311 = vadd.f32 %v1287, %v1295
    %v1312 = vadd.f32 %v1288, %v1296
    %v1313 = vadd.f32 %v1289, %v1297
    %v1314 = vadd.f32 %v1290, %v1298
    %v1315 = vadd.f32 %v1291, %v1299
    %v1316 = vrot.slane %v1148, 5
    %v1317 = vrot.slane %v1149, 5
    %v1318 = vrot.slane %v1150, 5
    %v1319 = vrot.slane %v1151, 5
    %v1320 = vrot.slane %v1152, 5
    %v1321 = vrot.slane %v1153, 5
    %v1322 = vrot.slane %v1154, 5
    %v1323 = vrot.slane %v1155, 5
    %v1332 = vadd.f32 %v1308, %v1316
    %v1333 = vadd.f32 %v1309, %v1317
    %v1334 = vadd.f32 %v1310, %v1318
    %v1335 = vadd.f32 %v1311, %v1319
    %v1336 = vadd.f32 %v1312, %v1320
    %v1337 = vadd.f32 %v1313, %v1321
    %v1338 = vadd.f32 %v1314, %v1322
    %v1339 = vadd.f32 %v1315, %v1323
    %v1340 = vsub.f32 %v351, %v607
    %v1341 = vsub.f32 %v383, %v639
    %v1342 = vsub.f32 %v415, %v671
    %v1343 = vsub.f32 %v447, %v703
    %v1344 = vsub.f32 %v479, %v735
    %v1345 = vsub.f32 %v511, %v767
    %v1346 = vsub.f32 %v543, %v799
    %v1347 = vsub.f32 %v575, %v831
    %v1348 = vmul.f32 %v1340, %v1340
    %v1349 = vmul.f32 %v1341, %v1341
    %v1350 = vmul.f32 %v1342, %v1342
    %v1351 = vmul.f32 %v1343, %v1343
    %v1352 = vmul.f32 %v1344, %v1344
    %v1353 = vmul.f32 %v1345, %v1345
    %v1354 = vmul.f32 %v1346, %v1346
    %v1355 = vmul.f32 %v1347, %v1347
    %v1364 = vrot.slane %v1348, 6
    %v1365 = vrot.slane %v1349, 6
    %v1366 = vrot.slane %v1350, 6
    %v1367 = vrot.slane %v1351, 6
    %v1368 = vrot.slane %v1352, 6
    %v1369 = vrot.slane %v1353, 6
    %v1370 = vrot.slane %v1354, 6
    %v1371 = vrot.slane %v1355, 6
    %v1380 = vadd.f32 %v1332, %v1364
    %v1381 = vadd.f32 %v1333, %v1365
    %v1382 = vadd.f32 %v1334, %v1366
    %v1383 = vadd.f32 %v1335, %v1367
    %v1384 = vadd.f32 %v1336, %v1368
    %v1385 = vadd.f32 %v1337, %v1369
    %v1386 = vadd.f32 %v1338, %v1370
    %v1387 = vadd.f32 %v1339, %v1371
    %v1388 = vrot.slane %v1348, 7
    %v1389 = vrot.slane %v1349, 7
    %v1390 = vrot.slane %v1350, 7
    %v1391 = vrot.slane %v1351, 7
    %v1392 = vrot.slane %v1352, 7
    %v1393 = vrot.slane %v1353, 7
    %v1394 = vrot.slane %v1354, 7
    %v1395 = vrot.slane %v1355, 7
    %v1404 = vadd.f32 %v1380, %v1388
    %v1405 = vadd.f32 %v1381, %v1389
    %v1406 = vadd.f32 %v1382, %v1390
    %v1407 = vadd.f32 %v1383, %v1391
    %v1408 = vadd.f32 %v1384, %v1392
    %v1409 = vadd.f32 %v1385, %v1393
    %v1410 = vadd.f32 %v1386, %v1394
    %v1411 = vadd.f32 %v1387, %v1395
    %v1412 = vadd.f32 %v1404, %v1348
    %v1413 = vadd.f32 %v1405, %v1349
    %v1414 = vadd.f32 %v1406, %v1350
    %v1415 = vadd.f32 %v1407, %v1351
    %v1416 = vadd.f32 %v1408, %v1352
    %v1417 = vadd.f32 %v1409, %v1353
    %v1418 = vadd.f32 %v1410, %v1354
    %v1419 = vadd.f32 %v1411, %v1355
    %v1420 = vrot.slane %v1348, 1
    %v1421 = vrot.slane %v1349, 1
    %v1422 = vrot.slane %v1350, 1
    %v1423 = vrot.slane %v1351, 1
    %v1424 = vrot.slane %v1352, 1
    %v1425 = vrot.slane %v1353, 1
    %v1426 = vrot.slane %v1354, 1
    %v1427 = vrot.slane %v1355, 1
    %v1436 = vadd.f32 %v1412, %v1420
    %v1437 = vadd.f32 %v1413, %v1421
    %v1438 = vadd.f32 %v1414, %v1422
    %v1439 = vadd.f32 %v1415, %v1423
    %v1440 = vadd.f32 %v1416, %v1424
    %v1441 = vadd.f32 %v1417, %v1425
    %v1442 = vadd.f32 %v1418, %v1426
    %v1443 = vadd.f32 %v1419, %v1427
    %v1444 = vrot.slane %v1348, 2
    %v1445 = vrot.slane %v1349, 2
    %v1446 = vrot.slane %v1350, 2
    %v1447 = vrot.slane %v1351, 2
    %v1448 = vrot.slane %v1352, 2
    %v1449 = vrot.slane %v1353, 2
    %v1450 = vrot.slane %v1354, 2
    %v1451 = vrot.slane %v1355, 2
    %v1460 = vadd.f32 %v1436, %v1444
    %v1461 = vadd.f32 %v1437, %v1445
    %v1462 = vadd.f32 %v1438, %v1446
    %v1463 = vadd.f32 %v1439, %v1447
    %v1464 = vadd.f32 %v1440, %v1448
    %v1465 = vadd.f32 %v1441, %v1449
    %v1466 = vadd.f32 %v1442, %v1450
    %v1467 = vadd.f32 %v1443, %v1451
    %v1468 = vrot.slane %v1348, 3
    %v1469 = vrot.slane %v1349, 3
    %v1470 = vrot.slane %v1350, 3
    %v1471 = vrot.slane %v1351, 3
    %v1472 = vrot.slane %v1352, 3
    %v1473 = vrot.slane %v1353, 3
    %v1474 = vrot.slane %v1354, 3
    %v1475 = vrot.slane %v1355, 3
    %v1484 = vadd.f32 %v1460, %v1468
    %v1485 = vadd.f32 %v1461, %v1469
    %v1486 = vadd.f32 %v1462, %v1470
    %v1487 = vadd.f32 %v1463, %v1471
    %v1488 = vadd.f32 %v1464, %v1472
    %v1489 = vadd.f32 %v1465, %v1473
    %v1490 = vadd.f32 %v1466, %v1474
    %v1491 = vadd.f32 %v1467, %v1475
    %v1500 = vrot.slane %v1484, 2
    %v1501 = vrot.slane %v1485, 1
    %v1502 = vsel %vm879, %v1501, %v1500
    %v1503 = vsel %vm882, %v1486, %v1502
    %v1504 = vrot.slane %v1487, 7
    %v1505 = vsel %vm885, %v1504, %v1503
    %v1506 = vrot.slane %v1488, 6
    %v1507 = vsel %vm887, %v1506, %v1505
    %v1508 = vrot.slane %v1489, 5
    %v1509 = vsel %vm890, %v1508, %v1507
    %v1510 = vrot.slane %v1490, 4
    %v1511 = vsel %vm893, %v1510, %v1509
    %v1512 = vrot.slane %v1491, 3
    %v1513 = vsel %vm896, %v1512, %v1511
    %v1515 = vsel %vm899, %v1513, 0.0
    %v1516 = vmul.f32 %v604, 0.14285715
    %v1517 = vmul.f32 %v636, 0.14285715
    %v1518 = vmul.f32 %v668, 0.14285715
    %v1519 = vmul.f32 %v700, 0.14285715
    %v1520 = vmul.f32 %v732, 0.14285715
    %v1521 = vmul.f32 %v764, 0.14285715
    %v1522 = vmul.f32 %v796, 0.14285715
    %v1523 = vmul.f32 %v828, 0.14285715
    %v1524 = vmul.f32 %v604, 0.5
    %v1525 = vmul.f32 %v636, 0.5
    %v1526 = vmul.f32 %v668, 0.5
    %v1527 = vmul.f32 %v700, 0.5
    %v1528 = vmul.f32 %v732, 0.5
    %v1529 = vmul.f32 %v764, 0.5
    %v1530 = vmul.f32 %v796, 0.5
    %v1531 = vmul.f32 %v828, 0.5
    %v1540 = vrot.slane %v1524, 2
    %v1541 = vrot.slane %v1525, 2
    %v1542 = vrot.slane %v1526, 2
    %v1543 = vrot.slane %v1527, 2
    %v1544 = vrot.slane %v1528, 2
    %v1545 = vrot.slane %v1529, 2
    %v1546 = vrot.slane %v1530, 2
    %v1547 = vrot.slane %v1531, 2
    %v1556 = vsub.f32 %v1516, %v1540
    %v1557 = vsub.f32 %v1517, %v1541
    %v1558 = vsub.f32 %v1518, %v1542
    %v1559 = vsub.f32 %v1519, %v1543
    %v1560 = vsub.f32 %v1520, %v1544
    %v1561 = vsub.f32 %v1521, %v1545
    %v1562 = vsub.f32 %v1522, %v1546
    %v1563 = vsub.f32 %v1523, %v1547
    %v1564 = vadd.f32 %v1516, %v1540
    %v1565 = vadd.f32 %v1517, %v1541
    %v1566 = vadd.f32 %v1518, %v1542
    %v1567 = vadd.f32 %v1519, %v1543
    %v1568 = vadd.f32 %v1520, %v1544
    %v1569 = vadd.f32 %v1521, %v1545
    %v1570 = vadd.f32 %v1522, %v1546
    %v1571 = vadd.f32 %v1523, %v1547
    %v1572 = vsub.f32 %v1564, %v1556
    %v1573 = vsub.f32 %v1565, %v1557
    %v1574 = vsub.f32 %v1566, %v1558
    %v1575 = vsub.f32 %v1567, %v1559
    %v1576 = vsub.f32 %v1568, %v1560
    %v1577 = vsub.f32 %v1569, %v1561
    %v1578 = vsub.f32 %v1570, %v1562
    %v1579 = vsub.f32 %v1571, %v1563
    %v1588 = vrot.slane %v1572, 1
    %v1589 = vrot.slane %v1573, 1
    %v1590 = vrot.slane %v1574, 1
    %v1591 = vrot.slane %v1575, 1
    %v1592 = vrot.slane %v1576, 1
    %v1593 = vrot.slane %v1577, 1
    %v1594 = vrot.slane %v1578, 1
    %v1595 = vrot.slane %v1579, 1
    %v1604 = vmul.f32 %v1572, %v1588
    %v1605 = vmul.f32 %v1573, %v1589
    %v1606 = vmul.f32 %v1574, %v1590
    %v1607 = vmul.f32 %v1575, %v1591
    %v1608 = vmul.f32 %v1576, %v1592
    %v1609 = vmul.f32 %v1577, %v1593
    %v1610 = vmul.f32 %v1578, %v1594
    %v1611 = vmul.f32 %v1579, %v1595
    %v1612 = vmul.f32 %v348, 0.14285715
    %v1613 = vmul.f32 %v380, 0.14285715
    %v1614 = vmul.f32 %v412, 0.14285715
    %v1615 = vmul.f32 %v444, 0.14285715
    %v1616 = vmul.f32 %v476, 0.14285715
    %v1617 = vmul.f32 %v508, 0.14285715
    %v1618 = vmul.f32 %v540, 0.14285715
    %v1619 = vmul.f32 %v572, 0.14285715
    %v1620 = vmul.f32 %v348, 0.5
    %v1621 = vmul.f32 %v380, 0.5
    %v1622 = vmul.f32 %v412, 0.5
    %v1623 = vmul.f32 %v444, 0.5
    %v1624 = vmul.f32 %v476, 0.5
    %v1625 = vmul.f32 %v508, 0.5
    %v1626 = vmul.f32 %v540, 0.5
    %v1627 = vmul.f32 %v572, 0.5
    %v1636 = vrot.slane %v1620, 2
    %v1637 = vrot.slane %v1621, 2
    %v1638 = vrot.slane %v1622, 2
    %v1639 = vrot.slane %v1623, 2
    %v1640 = vrot.slane %v1624, 2
    %v1641 = vrot.slane %v1625, 2
    %v1642 = vrot.slane %v1626, 2
    %v1643 = vrot.slane %v1627, 2
    %v1652 = vsub.f32 %v1612, %v1636
    %v1653 = vsub.f32 %v1613, %v1637
    %v1654 = vsub.f32 %v1614, %v1638
    %v1655 = vsub.f32 %v1615, %v1639
    %v1656 = vsub.f32 %v1616, %v1640
    %v1657 = vsub.f32 %v1617, %v1641
    %v1658 = vsub.f32 %v1618, %v1642
    %v1659 = vsub.f32 %v1619, %v1643
    %v1660 = vadd.f32 %v1612, %v1636
    %v1661 = vadd.f32 %v1613, %v1637
    %v1662 = vadd.f32 %v1614, %v1638
    %v1663 = vadd.f32 %v1615, %v1639
    %v1664 = vadd.f32 %v1616, %v1640
    %v1665 = vadd.f32 %v1617, %v1641
    %v1666 = vadd.f32 %v1618, %v1642
    %v1667 = vadd.f32 %v1619, %v1643
    %v1668 = vsub.f32 %v1660, %v1652
    %v1669 = vsub.f32 %v1661, %v1653
    %v1670 = vsub.f32 %v1662, %v1654
    %v1671 = vsub.f32 %v1663, %v1655
    %v1672 = vsub.f32 %v1664, %v1656
    %v1673 = vsub.f32 %v1665, %v1657
    %v1674 = vsub.f32 %v1666, %v1658
    %v1675 = vsub.f32 %v1667, %v1659
    %v1684 = vrot.slane %v1668, 1
    %v1685 = vrot.slane %v1669, 1
    %v1686 = vrot.slane %v1670, 1
    %v1687 = vrot.slane %v1671, 1
    %v1688 = vrot.slane %v1672, 1
    %v1689 = vrot.slane %v1673, 1
    %v1690 = vrot.slane %v1674, 1
    %v1691 = vrot.slane %v1675, 1
    %v1700 = vmul.f32 %v1668, %v1684
    %v1701 = vmul.f32 %v1669, %v1685
    %v1702 = vmul.f32 %v1670, %v1686
    %v1703 = vmul.f32 %v1671, %v1687
    %v1704 = vmul.f32 %v1672, %v1688
    %v1705 = vmul.f32 %v1673, %v1689
    %v1706 = vmul.f32 %v1674, %v1690
    %v1707 = vmul.f32 %v1675, %v1691
    %v1708 = vmin.f32 %v1660, %v1564
    %v1709 = vmin.f32 %v1661, %v1565
    %v1710 = vmin.f32 %v1662, %v1566
    %v1711 = vmin.f32 %v1663, %v1567
    %v1712 = vmin.f32 %v1664, %v1568
    %v1713 = vmin.f32 %v1665, %v1569
    %v1714 = vmin.f32 %v1666, %v1570
    %v1715 = vmin.f32 %v1667, %v1571
    %v1716 = vmax.f32 %v1652, %v1556
    %v1717 = vmax.f32 %v1653, %v1557
    %v1718 = vmax.f32 %v1654, %v1558
    %v1719 = vmax.f32 %v1655, %v1559
    %v1720 = vmax.f32 %v1656, %v1560
    %v1721 = vmax.f32 %v1657, %v1561
    %v1722 = vmax.f32 %v1658, %v1562
    %v1723 = vmax.f32 %v1659, %v1563
    %v1724 = vsub.f32 %v1708, %v1716
    %v1725 = vsub.f32 %v1709, %v1717
    %v1726 = vsub.f32 %v1710, %v1718
    %v1727 = vsub.f32 %v1711, %v1719
    %v1728 = vsub.f32 %v1712, %v1720
    %v1729 = vsub.f32 %v1713, %v1721
    %v1730 = vsub.f32 %v1714, %v1722
    %v1731 = vsub.f32 %v1715, %v1723
    %v1732 = vmax.f32 %v1724, 0.0
    %v1733 = vmax.f32 %v1725, 0.0
    %v1734 = vmax.f32 %v1726, 0.0
    %v1735 = vmax.f32 %v1727, 0.0
    %v1736 = vmax.f32 %v1728, 0.0
    %v1737 = vmax.f32 %v1729, 0.0
    %v1738 = vmax.f32 %v1730, 0.0
    %v1739 = vmax.f32 %v1731, 0.0
    %v1748 = vrot.slane %v1732, 1
    %v1749 = vrot.slane %v1733, 1
    %v1750 = vrot.slane %v1734, 1
    %v1751 = vrot.slane %v1735, 1
    %v1752 = vrot.slane %v1736, 1
    %v1753 = vrot.slane %v1737, 1
    %v1754 = vrot.slane %v1738, 1
    %v1755 = vrot.slane %v1739, 1
    %v1764 = vmul.f32 %v1732, %v1748
    %v1765 = vmul.f32 %v1733, %v1749
    %v1766 = vmul.f32 %v1734, %v1750
    %v1767 = vmul.f32 %v1735, %v1751
    %v1768 = vmul.f32 %v1736, %v1752
    %v1769 = vmul.f32 %v1737, %v1753
    %v1770 = vmul.f32 %v1738, %v1754
    %v1771 = vmul.f32 %v1739, %v1755
    %v1772 = vadd.f32 %v1700, %v1604
    %v1773 = vadd.f32 %v1701, %v1605
    %v1774 = vadd.f32 %v1702, %v1606
    %v1775 = vadd.f32 %v1703, %v1607
    %v1776 = vadd.f32 %v1704, %v1608
    %v1777 = vadd.f32 %v1705, %v1609
    %v1778 = vadd.f32 %v1706, %v1610
    %v1779 = vadd.f32 %v1707, %v1611
    %v1780 = vsub.f32 %v1772, %v1764
    %v1781 = vsub.f32 %v1773, %v1765
    %v1782 = vsub.f32 %v1774, %v1766
    %v1783 = vsub.f32 %v1775, %v1767
    %v1784 = vsub.f32 %v1776, %v1768
    %v1785 = vsub.f32 %v1777, %v1769
    %v1786 = vsub.f32 %v1778, %v1770
    %v1787 = vsub.f32 %v1779, %v1771
    %v1788 = vmax.f32 %v1780, 1e-12
    %v1789 = vmax.f32 %v1781, 1e-12
    %v1790 = vmax.f32 %v1782, 1e-12
    %v1791 = vmax.f32 %v1783, 1e-12
    %v1792 = vmax.f32 %v1784, 1e-12
    %v1793 = vmax.f32 %v1785, 1e-12
    %v1794 = vmax.f32 %v1786, 1e-12
    %v1795 = vmax.f32 %v1787, 1e-12
    %v1796 = vrcp.pop %v1788
    %v1797 = vmul.f32 %v1764, %v1796
    %v1798 = vrcp.pop %v1789
    %v1799 = vmul.f32 %v1765, %v1798
    %v1800 = vrcp.pop %v1790
    %v1801 = vmul.f32 %v1766, %v1800
    %v1802 = vrcp.pop %v1791
    %v1803 = vmul.f32 %v1767, %v1802
    %v1804 = vrcp.pop %v1792
    %v1805 = vmul.f32 %v1768, %v1804
    %v1806 = vrcp.pop %v1793
    %v1807 = vmul.f32 %v1769, %v1806
    %v1808 = vrcp.pop %v1794
    %v1809 = vmul.f32 %v1770, %v1808
    %v1810 = vrcp.pop %v1795
    %v1811 = vmul.f32 %v1771, %v1810
    %v1812 = vmul.f32 %v349, 0.5
    %v1813 = vmul.f32 %v381, 0.5
    %v1814 = vmul.f32 %v413, 0.5
    %v1815 = vmul.f32 %v445, 0.5
    %v1816 = vmul.f32 %v477, 0.5
    %v1817 = vmul.f32 %v509, 0.5
    %v1818 = vmul.f32 %v541, 0.5
    %v1819 = vmul.f32 %v573, 0.5
    %v1828 = vrot.slane %v1812, 2
    %v1829 = vrot.slane %v1813, 2
    %v1830 = vrot.slane %v1814, 2
    %v1831 = vrot.slane %v1815, 2
    %v1832 = vrot.slane %v1816, 2
    %v1833 = vrot.slane %v1817, 2
    %v1834 = vrot.slane %v1818, 2
    %v1835 = vrot.slane %v1819, 2
    %v1844 = vsub.f32 %v1612, %v1828
    %v1845 = vsub.f32 %v1613, %v1829
    %v1846 = vsub.f32 %v1614, %v1830
    %v1847 = vsub.f32 %v1615, %v1831
    %v1848 = vsub.f32 %v1616, %v1832
    %v1849 = vsub.f32 %v1617, %v1833
    %v1850 = vsub.f32 %v1618, %v1834
    %v1851 = vsub.f32 %v1619, %v1835
    %v1852 = vadd.f32 %v1612, %v1828
    %v1853 = vadd.f32 %v1613, %v1829
    %v1854 = vadd.f32 %v1614, %v1830
    %v1855 = vadd.f32 %v1615, %v1831
    %v1856 = vadd.f32 %v1616, %v1832
    %v1857 = vadd.f32 %v1617, %v1833
    %v1858 = vadd.f32 %v1618, %v1834
    %v1859 = vadd.f32 %v1619, %v1835
    %v1860 = vsub.f32 %v1852, %v1844
    %v1861 = vsub.f32 %v1853, %v1845
    %v1862 = vsub.f32 %v1854, %v1846
    %v1863 = vsub.f32 %v1855, %v1847
    %v1864 = vsub.f32 %v1856, %v1848
    %v1865 = vsub.f32 %v1857, %v1849
    %v1866 = vsub.f32 %v1858, %v1850
    %v1867 = vsub.f32 %v1859, %v1851
    %v1876 = vrot.slane %v1860, 1
    %v1877 = vrot.slane %v1861, 1
    %v1878 = vrot.slane %v1862, 1
    %v1879 = vrot.slane %v1863, 1
    %v1880 = vrot.slane %v1864, 1
    %v1881 = vrot.slane %v1865, 1
    %v1882 = vrot.slane %v1866, 1
    %v1883 = vrot.slane %v1867, 1
    %v1892 = vmul.f32 %v1668, %v1876
    %v1893 = vmul.f32 %v1669, %v1877
    %v1894 = vmul.f32 %v1670, %v1878
    %v1895 = vmul.f32 %v1671, %v1879
    %v1896 = vmul.f32 %v1672, %v1880
    %v1897 = vmul.f32 %v1673, %v1881
    %v1898 = vmul.f32 %v1674, %v1882
    %v1899 = vmul.f32 %v1675, %v1883
    %v1908 = vrot.slane %v1564, 3
    %v1909 = vrot.slane %v1565, 3
    %v1910 = vrot.slane %v1566, 3
    %v1911 = vrot.slane %v1567, 3
    %v1912 = vrot.slane %v1568, 3
    %v1913 = vrot.slane %v1569, 3
    %v1914 = vrot.slane %v1570, 3
    %v1915 = vrot.slane %v1571, 3
    %v1924 = vmin.f32 %v1660, %v1908
    %v1925 = vmin.f32 %v1661, %v1909
    %v1926 = vmin.f32 %v1662, %v1910
    %v1927 = vmin.f32 %v1663, %v1911
    %v1928 = vmin.f32 %v1664, %v1912
    %v1929 = vmin.f32 %v1665, %v1913
    %v1930 = vmin.f32 %v1666, %v1914
    %v1931 = vmin.f32 %v1667, %v1915
    %v1940 = vrot.slane %v1556, 3
    %v1941 = vrot.slane %v1557, 3
    %v1942 = vrot.slane %v1558, 3
    %v1943 = vrot.slane %v1559, 3
    %v1944 = vrot.slane %v1560, 3
    %v1945 = vrot.slane %v1561, 3
    %v1946 = vrot.slane %v1562, 3
    %v1947 = vrot.slane %v1563, 3
    %v1956 = vmax.f32 %v1652, %v1940
    %v1957 = vmax.f32 %v1653, %v1941
    %v1958 = vmax.f32 %v1654, %v1942
    %v1959 = vmax.f32 %v1655, %v1943
    %v1960 = vmax.f32 %v1656, %v1944
    %v1961 = vmax.f32 %v1657, %v1945
    %v1962 = vmax.f32 %v1658, %v1946
    %v1963 = vmax.f32 %v1659, %v1947
    %v1964 = vsub.f32 %v1924, %v1956
    %v1965 = vsub.f32 %v1925, %v1957
    %v1966 = vsub.f32 %v1926, %v1958
    %v1967 = vsub.f32 %v1927, %v1959
    %v1968 = vsub.f32 %v1928, %v1960
    %v1969 = vsub.f32 %v1929, %v1961
    %v1970 = vsub.f32 %v1930, %v1962
    %v1971 = vsub.f32 %v1931, %v1963
    %v1972 = vmax.f32 %v1964, 0.0
    %v1973 = vmax.f32 %v1965, 0.0
    %v1974 = vmax.f32 %v1966, 0.0
    %v1975 = vmax.f32 %v1967, 0.0
    %v1976 = vmax.f32 %v1968, 0.0
    %v1977 = vmax.f32 %v1969, 0.0
    %v1978 = vmax.f32 %v1970, 0.0
    %v1979 = vmax.f32 %v1971, 0.0
    %v1980 = vmin.f32 %v1852, %v1908
    %v1981 = vmin.f32 %v1853, %v1909
    %v1982 = vmin.f32 %v1854, %v1910
    %v1983 = vmin.f32 %v1855, %v1911
    %v1984 = vmin.f32 %v1856, %v1912
    %v1985 = vmin.f32 %v1857, %v1913
    %v1986 = vmin.f32 %v1858, %v1914
    %v1987 = vmin.f32 %v1859, %v1915
    %v1988 = vmax.f32 %v1844, %v1940
    %v1989 = vmax.f32 %v1845, %v1941
    %v1990 = vmax.f32 %v1846, %v1942
    %v1991 = vmax.f32 %v1847, %v1943
    %v1992 = vmax.f32 %v1848, %v1944
    %v1993 = vmax.f32 %v1849, %v1945
    %v1994 = vmax.f32 %v1850, %v1946
    %v1995 = vmax.f32 %v1851, %v1947
    %v1996 = vsub.f32 %v1980, %v1988
    %v1997 = vsub.f32 %v1981, %v1989
    %v1998 = vsub.f32 %v1982, %v1990
    %v1999 = vsub.f32 %v1983, %v1991
    %v2000 = vsub.f32 %v1984, %v1992
    %v2001 = vsub.f32 %v1985, %v1993
    %v2002 = vsub.f32 %v1986, %v1994
    %v2003 = vsub.f32 %v1987, %v1995
    %v2004 = vmax.f32 %v1996, 0.0
    %v2005 = vmax.f32 %v1997, 0.0
    %v2006 = vmax.f32 %v1998, 0.0
    %v2007 = vmax.f32 %v1999, 0.0
    %v2008 = vmax.f32 %v2000, 0.0
    %v2009 = vmax.f32 %v2001, 0.0
    %v2010 = vmax.f32 %v2002, 0.0
    %v2011 = vmax.f32 %v2003, 0.0
    %v2020 = vrot.slane %v2004, 1
    %v2021 = vrot.slane %v2005, 1
    %v2022 = vrot.slane %v2006, 1
    %v2023 = vrot.slane %v2007, 1
    %v2024 = vrot.slane %v2008, 1
    %v2025 = vrot.slane %v2009, 1
    %v2026 = vrot.slane %v2010, 1
    %v2027 = vrot.slane %v2011, 1
    %v2036 = vmul.f32 %v1972, %v2020
    %v2037 = vmul.f32 %v1973, %v2021
    %v2038 = vmul.f32 %v1974, %v2022
    %v2039 = vmul.f32 %v1975, %v2023
    %v2040 = vmul.f32 %v1976, %v2024
    %v2041 = vmul.f32 %v1977, %v2025
    %v2042 = vmul.f32 %v1978, %v2026
    %v2043 = vmul.f32 %v1979, %v2027
    %v2052 = vrot.slane %v1604, 3
    %v2053 = vrot.slane %v1605, 3
    %v2054 = vrot.slane %v1606, 3
    %v2055 = vrot.slane %v1607, 3
    %v2056 = vrot.slane %v1608, 3
    %v2057 = vrot.slane %v1609, 3
    %v2058 = vrot.slane %v1610, 3
    %v2059 = vrot.slane %v1611, 3
    %v2068 = vadd.f32 %v1892, %v2052
    %v2069 = vadd.f32 %v1893, %v2053
    %v2070 = vadd.f32 %v1894, %v2054
    %v2071 = vadd.f32 %v1895, %v2055
    %v2072 = vadd.f32 %v1896, %v2056
    %v2073 = vadd.f32 %v1897, %v2057
    %v2074 = vadd.f32 %v1898, %v2058
    %v2075 = vadd.f32 %v1899, %v2059
    %v2076 = vsub.f32 %v2068, %v2036
    %v2077 = vsub.f32 %v2069, %v2037
    %v2078 = vsub.f32 %v2070, %v2038
    %v2079 = vsub.f32 %v2071, %v2039
    %v2080 = vsub.f32 %v2072, %v2040
    %v2081 = vsub.f32 %v2073, %v2041
    %v2082 = vsub.f32 %v2074, %v2042
    %v2083 = vsub.f32 %v2075, %v2043
    %v2084 = vmax.f32 %v2076, 1e-12
    %v2085 = vmax.f32 %v2077, 1e-12
    %v2086 = vmax.f32 %v2078, 1e-12
    %v2087 = vmax.f32 %v2079, 1e-12
    %v2088 = vmax.f32 %v2080, 1e-12
    %v2089 = vmax.f32 %v2081, 1e-12
    %v2090 = vmax.f32 %v2082, 1e-12
    %v2091 = vmax.f32 %v2083, 1e-12
    %v2092 = vrcp.pop %v2084
    %v2093 = vmul.f32 %v2036, %v2092
    %v2094 = vrcp.pop %v2085
    %v2095 = vmul.f32 %v2037, %v2094
    %v2096 = vrcp.pop %v2086
    %v2097 = vmul.f32 %v2038, %v2096
    %v2098 = vrcp.pop %v2087
    %v2099 = vmul.f32 %v2039, %v2098
    %v2100 = vrcp.pop %v2088
    %v2101 = vmul.f32 %v2040, %v2100
    %v2102 = vrcp.pop %v2089
    %v2103 = vmul.f32 %v2041, %v2102
    %v2104 = vrcp.pop %v2090
    %v2105 = vmul.f32 %v2042, %v2104
    %v2106 = vrcp.pop %v2091
    %v2107 = vmul.f32 %v2043, %v2106
    %v2116 = vrot.slane %v1797, 3
    %v2117 = vrot.slane %v1799, 3
    %v2118 = vrot.slane %v1801, 3
    %v2119 = vrot.slane %v1803, 3
    %v2120 = vrot.slane %v1805, 3
    %v2121 = vrot.slane %v1807, 3
    %v2122 = vrot.slane %v1809, 3
    %v2123 = vrot.slane %v1811, 3
    %vm2132 = vcmp.gt.f32.partialorder %v2093, %v2116
    %vm2133 = vcmp.gt.f32.partialorder %v2095, %v2117
    %vm2134 = vcmp.gt.f32.partialorder %v2097, %v2118
    %vm2135 = vcmp.gt.f32.partialorder %v2099, %v2119
    %vm2136 = vcmp.gt.f32.partialorder %v2101, %v2120
    %vm2137 = vcmp.gt.f32.partialorder %v2103, %v2121
    %vm2138 = vcmp.gt.f32.partialorder %v2105, %v2122
    %vm2139 = vcmp.gt.f32.partialorder %v2107, %v2123
    %v2140 = vsel %vm2132, %v2093, %v2116
    %v2141 = vsel %vm2133, %v2095, %v2117
    %v2142 = vsel %vm2134, %v2097, %v2118
    %v2143 = vsel %vm2135, %v2099, %v2119
    %v2144 = vsel %vm2136, %v2101, %v2120
    %v2145 = vsel %vm2137, %v2103, %v2121
    %v2146 = vsel %vm2138, %v2105, %v2122
    %v2147 = vsel %vm2139, %v2107, %v2123
    %v2148 = vsel %vm2132, 1, 0
    %v2149 = vsel %vm2133, 1, 0
    %v2150 = vsel %vm2134, 1, 0
    %v2151 = vsel %vm2135, 1, 0
    %v2152 = vsel %vm2136, 1, 0
    %v2153 = vsel %vm2137, 1, 0
    %v2154 = vsel %vm2138, 1, 0
    %v2155 = vsel %vm2139, 1, 0
    %vm2156 = vcmp.eq.s32.totalorder %v2148, 1
    %vm2157 = vcmp.eq.s32.totalorder %v2149, 1
    %vm2158 = vcmp.eq.s32.totalorder %v2150, 1
    %vm2159 = vcmp.eq.s32.totalorder %v2151, 1
    %vm2160 = vcmp.eq.s32.totalorder %v2152, 1
    %vm2161 = vcmp.eq.s32.totalorder %v2153, 1
    %vm2162 = vcmp.eq.s32.totalorder %v2154, 1
    %vm2163 = vcmp.eq.s32.totalorder %v2155, 1
    %v2172 = vrot.slane %v348, 3
    %v2173 = vrot.slane %v380, 3
    %v2174 = vrot.slane %v412, 3
    %v2175 = vrot.slane %v444, 3
    %v2176 = vrot.slane %v476, 3
    %v2177 = vrot.slane %v508, 3
    %v2178 = vrot.slane %v540, 3
    %v2179 = vrot.slane %v572, 3
    %v2188 = vsel %vm2156, %v348, %v2172
    %v2189 = vsel %vm2157, %v380, %v2173
    %v2190 = vsel %vm2158, %v412, %v2174
    %v2191 = vsel %vm2159, %v444, %v2175
    %v2192 = vsel %vm2160, %v476, %v2176
    %v2193 = vsel %vm2161, %v508, %v2177
    %v2194 = vsel %vm2162, %v540, %v2178
    %v2195 = vsel %vm2163, %v572, %v2179
    %v2196 = vrot.slane %v348, 1
    %v2197 = vrot.slane %v380, 1
    %v2198 = vrot.slane %v412, 1
    %v2199 = vrot.slane %v444, 1
    %v2200 = vrot.slane %v476, 1
    %v2201 = vrot.slane %v508, 1
    %v2202 = vrot.slane %v540, 1
    %v2203 = vrot.slane %v572, 1
    %v2212 = vrot.slane %v348, 4
    %v2213 = vrot.slane %v380, 4
    %v2214 = vrot.slane %v412, 4
    %v2215 = vrot.slane %v444, 4
    %v2216 = vrot.slane %v476, 4
    %v2217 = vrot.slane %v508, 4
    %v2218 = vrot.slane %v540, 4
    %v2219 = vrot.slane %v572, 4
    %v2228 = vsel %vm2156, %v2196, %v2212
    %v2229 = vsel %vm2157, %v2197, %v2213
    %v2230 = vsel %vm2158, %v2198, %v2214
    %v2231 = vsel %vm2159, %v2199, %v2215
    %v2232 = vsel %vm2160, %v2200, %v2216
    %v2233 = vsel %vm2161, %v2201, %v2217
    %v2234 = vsel %vm2162, %v2202, %v2218
    %v2235 = vsel %vm2163, %v2203, %v2219
    %v2236 = vrot.slane %v348, 2
    %v2237 = vrot.slane %v380, 2
    %v2238 = vrot.slane %v412, 2
    %v2239 = vrot.slane %v444, 2
    %v2240 = vrot.slane %v476, 2
    %v2241 = vrot.slane %v508, 2
    %v2242 = vrot.slane %v540, 2
    %v2243 = vrot.slane %v572, 2
    %v2252 = vrot.slane %v348, 5
    %v2253 = vrot.slane %v380, 5
    %v2254 = vrot.slane %v412, 5
    %v2255 = vrot.slane %v444, 5
    %v2256 = vrot.slane %v476, 5
    %v2257 = vrot.slane %v508, 5
    %v2258 = vrot.slane %v540, 5
    %v2259 = vrot.slane %v572, 5
    %v2268 = vsel %vm2156, %v2236, %v2252
    %v2269 = vsel %vm2157, %v2237, %v2253
    %v2270 = vsel %vm2158, %v2238, %v2254
    %v2271 = vsel %vm2159, %v2239, %v2255
    %v2272 = vsel %vm2160, %v2240, %v2256
    %v2273 = vsel %vm2161, %v2241, %v2257
    %v2274 = vsel %vm2162, %v2242, %v2258
    %v2275 = vsel %vm2163, %v2243, %v2259
    %v2284 = vrot.slane %v349, 3
    %v2285 = vrot.slane %v381, 3
    %v2286 = vrot.slane %v413, 3
    %v2287 = vrot.slane %v445, 3
    %v2288 = vrot.slane %v477, 3
    %v2289 = vrot.slane %v509, 3
    %v2290 = vrot.slane %v541, 3
    %v2291 = vrot.slane %v573, 3
    %v2300 = vrot.slane %v348, 6
    %v2301 = vrot.slane %v380, 6
    %v2302 = vrot.slane %v412, 6
    %v2303 = vrot.slane %v444, 6
    %v2304 = vrot.slane %v476, 6
    %v2305 = vrot.slane %v508, 6
    %v2306 = vrot.slane %v540, 6
    %v2307 = vrot.slane %v572, 6
    %v2316 = vsel %vm2156, %v2284, %v2300
    %v2317 = vsel %vm2157, %v2285, %v2301
    %v2318 = vsel %vm2158, %v2286, %v2302
    %v2319 = vsel %vm2159, %v2287, %v2303
    %v2320 = vsel %vm2160, %v2288, %v2304
    %v2321 = vsel %vm2161, %v2289, %v2305
    %v2322 = vsel %vm2162, %v2290, %v2306
    %v2323 = vsel %vm2163, %v2291, %v2307
    %v2324 = vrot.slane %v349, 4
    %v2325 = vrot.slane %v381, 4
    %v2326 = vrot.slane %v413, 4
    %v2327 = vrot.slane %v445, 4
    %v2328 = vrot.slane %v477, 4
    %v2329 = vrot.slane %v509, 4
    %v2330 = vrot.slane %v541, 4
    %v2331 = vrot.slane %v573, 4
    %v2340 = vrot.slane %v348, 7
    %v2341 = vrot.slane %v380, 7
    %v2342 = vrot.slane %v412, 7
    %v2343 = vrot.slane %v444, 7
    %v2344 = vrot.slane %v476, 7
    %v2345 = vrot.slane %v508, 7
    %v2346 = vrot.slane %v540, 7
    %v2347 = vrot.slane %v572, 7
    %v2356 = vsel %vm2156, %v2324, %v2340
    %v2357 = vsel %vm2157, %v2325, %v2341
    %v2358 = vsel %vm2158, %v2326, %v2342
    %v2359 = vsel %vm2159, %v2327, %v2343
    %v2360 = vsel %vm2160, %v2328, %v2344
    %v2361 = vsel %vm2161, %v2329, %v2345
    %v2362 = vsel %vm2162, %v2330, %v2346
    %v2363 = vsel %vm2163, %v2331, %v2347
    %v2372 = vrot.slane %v604, 3
    %v2373 = vrot.slane %v636, 3
    %v2374 = vrot.slane %v668, 3
    %v2375 = vrot.slane %v700, 3
    %v2376 = vrot.slane %v732, 3
    %v2377 = vrot.slane %v764, 3
    %v2378 = vrot.slane %v796, 3
    %v2379 = vrot.slane %v828, 3
    %v2388 = vsel %vm2156, %v604, %v2372
    %v2389 = vsel %vm2157, %v636, %v2373
    %v2390 = vsel %vm2158, %v668, %v2374
    %v2391 = vsel %vm2159, %v700, %v2375
    %v2392 = vsel %vm2160, %v732, %v2376
    %v2393 = vsel %vm2161, %v764, %v2377
    %v2394 = vsel %vm2162, %v796, %v2378
    %v2395 = vsel %vm2163, %v828, %v2379
    %v2396 = vrot.slane %v604, 1
    %v2397 = vrot.slane %v636, 1
    %v2398 = vrot.slane %v668, 1
    %v2399 = vrot.slane %v700, 1
    %v2400 = vrot.slane %v732, 1
    %v2401 = vrot.slane %v764, 1
    %v2402 = vrot.slane %v796, 1
    %v2403 = vrot.slane %v828, 1
    %v2412 = vrot.slane %v604, 4
    %v2413 = vrot.slane %v636, 4
    %v2414 = vrot.slane %v668, 4
    %v2415 = vrot.slane %v700, 4
    %v2416 = vrot.slane %v732, 4
    %v2417 = vrot.slane %v764, 4
    %v2418 = vrot.slane %v796, 4
    %v2419 = vrot.slane %v828, 4
    %v2428 = vsel %vm2156, %v2396, %v2412
    %v2429 = vsel %vm2157, %v2397, %v2413
    %v2430 = vsel %vm2158, %v2398, %v2414
    %v2431 = vsel %vm2159, %v2399, %v2415
    %v2432 = vsel %vm2160, %v2400, %v2416
    %v2433 = vsel %vm2161, %v2401, %v2417
    %v2434 = vsel %vm2162, %v2402, %v2418
    %v2435 = vsel %vm2163, %v2403, %v2419
    %v2436 = vrot.slane %v604, 2
    %v2437 = vrot.slane %v636, 2
    %v2438 = vrot.slane %v668, 2
    %v2439 = vrot.slane %v700, 2
    %v2440 = vrot.slane %v732, 2
    %v2441 = vrot.slane %v764, 2
    %v2442 = vrot.slane %v796, 2
    %v2443 = vrot.slane %v828, 2
    %v2452 = vrot.slane %v604, 5
    %v2453 = vrot.slane %v636, 5
    %v2454 = vrot.slane %v668, 5
    %v2455 = vrot.slane %v700, 5
    %v2456 = vrot.slane %v732, 5
    %v2457 = vrot.slane %v764, 5
    %v2458 = vrot.slane %v796, 5
    %v2459 = vrot.slane %v828, 5
    %v2468 = vsel %vm2156, %v2436, %v2452
    %v2469 = vsel %vm2157, %v2437, %v2453
    %v2470 = vsel %vm2158, %v2438, %v2454
    %v2471 = vsel %vm2159, %v2439, %v2455
    %v2472 = vsel %vm2160, %v2440, %v2456
    %v2473 = vsel %vm2161, %v2441, %v2457
    %v2474 = vsel %vm2162, %v2442, %v2458
    %v2475 = vsel %vm2163, %v2443, %v2459
    %v2484 = vrot.slane %v605, 3
    %v2485 = vrot.slane %v637, 3
    %v2486 = vrot.slane %v669, 3
    %v2487 = vrot.slane %v701, 3
    %v2488 = vrot.slane %v733, 3
    %v2489 = vrot.slane %v765, 3
    %v2490 = vrot.slane %v797, 3
    %v2491 = vrot.slane %v829, 3
    %v2500 = vrot.slane %v604, 6
    %v2501 = vrot.slane %v636, 6
    %v2502 = vrot.slane %v668, 6
    %v2503 = vrot.slane %v700, 6
    %v2504 = vrot.slane %v732, 6
    %v2505 = vrot.slane %v764, 6
    %v2506 = vrot.slane %v796, 6
    %v2507 = vrot.slane %v828, 6
    %v2516 = vsel %vm2156, %v2484, %v2500
    %v2517 = vsel %vm2157, %v2485, %v2501
    %v2518 = vsel %vm2158, %v2486, %v2502
    %v2519 = vsel %vm2159, %v2487, %v2503
    %v2520 = vsel %vm2160, %v2488, %v2504
    %v2521 = vsel %vm2161, %v2489, %v2505
    %v2522 = vsel %vm2162, %v2490, %v2506
    %v2523 = vsel %vm2163, %v2491, %v2507
    %v2524 = vsub.f32 %v2188, %v2388
    %v2525 = vsub.f32 %v2189, %v2389
    %v2526 = vsub.f32 %v2190, %v2390
    %v2527 = vsub.f32 %v2191, %v2391
    %v2528 = vsub.f32 %v2192, %v2392
    %v2529 = vsub.f32 %v2193, %v2393
    %v2530 = vsub.f32 %v2194, %v2394
    %v2531 = vsub.f32 %v2195, %v2395
    %v2532 = vmul.f32 %v2524, %v2524
    %v2533 = vmul.f32 %v2525, %v2525
    %v2534 = vmul.f32 %v2526, %v2526
    %v2535 = vmul.f32 %v2527, %v2527
    %v2536 = vmul.f32 %v2528, %v2528
    %v2537 = vmul.f32 %v2529, %v2529
    %v2538 = vmul.f32 %v2530, %v2530
    %v2539 = vmul.f32 %v2531, %v2531
    %v2540 = vsub.f32 %v2228, %v2428
    %v2541 = vsub.f32 %v2229, %v2429
    %v2542 = vsub.f32 %v2230, %v2430
    %v2543 = vsub.f32 %v2231, %v2431
    %v2544 = vsub.f32 %v2232, %v2432
    %v2545 = vsub.f32 %v2233, %v2433
    %v2546 = vsub.f32 %v2234, %v2434
    %v2547 = vsub.f32 %v2235, %v2435
    %v2548 = vmul.f32 %v2540, %v2540
    %v2549 = vmul.f32 %v2541, %v2541
    %v2550 = vmul.f32 %v2542, %v2542
    %v2551 = vmul.f32 %v2543, %v2543
    %v2552 = vmul.f32 %v2544, %v2544
    %v2553 = vmul.f32 %v2545, %v2545
    %v2554 = vmul.f32 %v2546, %v2546
    %v2555 = vmul.f32 %v2547, %v2547
    %v2556 = vadd.f32 %v2532, %v2548
    %v2557 = vadd.f32 %v2533, %v2549
    %v2558 = vadd.f32 %v2534, %v2550
    %v2559 = vadd.f32 %v2535, %v2551
    %v2560 = vadd.f32 %v2536, %v2552
    %v2561 = vadd.f32 %v2537, %v2553
    %v2562 = vadd.f32 %v2538, %v2554
    %v2563 = vadd.f32 %v2539, %v2555
    %v2564 = vrsqrt.pop %v2268
    %v2565 = vmul.f32 %v2268, %v2564
    %vm2566 = vcmp.eq.f32.partialorder %v2268, inf
    %v2567 = vsel %vm2566, %v2268, %v2565
    %vm2568 = vcmp.eq.f32.partialorder %v2268, 0.0
    %v2569 = vand.u32 %v2268, 2147483648
    %v2570 = vsel %vm2568, %v2569, %v2567
    %v2571 = vrsqrt.pop %v2269
    %v2572 = vmul.f32 %v2269, %v2571
    %vm2573 = vcmp.eq.f32.partialorder %v2269, inf
    %v2574 = vsel %vm2573, %v2269, %v2572
    %vm2575 = vcmp.eq.f32.partialorder %v2269, 0.0
    %v2576 = vand.u32 %v2269, 2147483648
    %v2577 = vsel %vm2575, %v2576, %v2574
    %v2578 = vrsqrt.pop %v2270
    %v2579 = vmul.f32 %v2270, %v2578
    %vm2580 = vcmp.eq.f32.partialorder %v2270, inf
    %v2581 = vsel %vm2580, %v2270, %v2579
    %vm2582 = vcmp.eq.f32.partialorder %v2270, 0.0
    %v2583 = vand.u32 %v2270, 2147483648
    %v2584 = vsel %vm2582, %v2583, %v2581
    %v2585 = vrsqrt.pop %v2271
    %v2586 = vmul.f32 %v2271, %v2585
    %vm2587 = vcmp.eq.f32.partialorder %v2271, inf
    %v2588 = vsel %vm2587, %v2271, %v2586
    %vm2589 = vcmp.eq.f32.partialorder %v2271, 0.0
    %v2590 = vand.u32 %v2271, 2147483648
    %v2591 = vsel %vm2589, %v2590, %v2588
    %v2592 = vrsqrt.pop %v2272
    %v2593 = vmul.f32 %v2272, %v2592
    %vm2594 = vcmp.eq.f32.partialorder %v2272, inf
    %v2595 = vsel %vm2594, %v2272, %v2593
    %vm2596 = vcmp.eq.f32.partialorder %v2272, 0.0
    %v2597 = vand.u32 %v2272, 2147483648
    %v2598 = vsel %vm2596, %v2597, %v2595
    %v2599 = vrsqrt.pop %v2273
    %v2600 = vmul.f32 %v2273, %v2599
    %vm2601 = vcmp.eq.f32.partialorder %v2273, inf
    %v2602 = vsel %vm2601, %v2273, %v2600
    %vm2603 = vcmp.eq.f32.partialorder %v2273, 0.0
    %v2604 = vand.u32 %v2273, 2147483648
    %v2605 = vsel %vm2603, %v2604, %v2602
    %v2606 = vrsqrt.pop %v2274
    %v2607 = vmul.f32 %v2274, %v2606
    %vm2608 = vcmp.eq.f32.partialorder %v2274, inf
    %v2609 = vsel %vm2608, %v2274, %v2607
    %vm2610 = vcmp.eq.f32.partialorder %v2274, 0.0
    %v2611 = vand.u32 %v2274, 2147483648
    %v2612 = vsel %vm2610, %v2611, %v2609
    %v2613 = vrsqrt.pop %v2275
    %v2614 = vmul.f32 %v2275, %v2613
    %vm2615 = vcmp.eq.f32.partialorder %v2275, inf
    %v2616 = vsel %vm2615, %v2275, %v2614
    %vm2617 = vcmp.eq.f32.partialorder %v2275, 0.0
    %v2618 = vand.u32 %v2275, 2147483648
    %v2619 = vsel %vm2617, %v2618, %v2616
    %v2620 = vrsqrt.pop %v2468
    %v2621 = vmul.f32 %v2468, %v2620
    %vm2622 = vcmp.eq.f32.partialorder %v2468, inf
    %v2623 = vsel %vm2622, %v2468, %v2621
    %vm2624 = vcmp.eq.f32.partialorder %v2468, 0.0
    %v2625 = vand.u32 %v2468, 2147483648
    %v2626 = vsel %vm2624, %v2625, %v2623
    %v2627 = vrsqrt.pop %v2469
    %v2628 = vmul.f32 %v2469, %v2627
    %vm2629 = vcmp.eq.f32.partialorder %v2469, inf
    %v2630 = vsel %vm2629, %v2469, %v2628
    %vm2631 = vcmp.eq.f32.partialorder %v2469, 0.0
    %v2632 = vand.u32 %v2469, 2147483648
    %v2633 = vsel %vm2631, %v2632, %v2630
    %v2634 = vrsqrt.pop %v2470
    %v2635 = vmul.f32 %v2470, %v2634
    %vm2636 = vcmp.eq.f32.partialorder %v2470, inf
    %v2637 = vsel %vm2636, %v2470, %v2635
    %vm2638 = vcmp.eq.f32.partialorder %v2470, 0.0
    %v2639 = vand.u32 %v2470, 2147483648
    %v2640 = vsel %vm2638, %v2639, %v2637
    %v2641 = vrsqrt.pop %v2471
    %v2642 = vmul.f32 %v2471, %v2641
    %vm2643 = vcmp.eq.f32.partialorder %v2471, inf
    %v2644 = vsel %vm2643, %v2471, %v2642
    %vm2645 = vcmp.eq.f32.partialorder %v2471, 0.0
    %v2646 = vand.u32 %v2471, 2147483648
    %v2647 = vsel %vm2645, %v2646, %v2644
    %v2648 = vrsqrt.pop %v2472
    %v2649 = vmul.f32 %v2472, %v2648
    %vm2650 = vcmp.eq.f32.partialorder %v2472, inf
    %v2651 = vsel %vm2650, %v2472, %v2649
    %vm2652 = vcmp.eq.f32.partialorder %v2472, 0.0
    %v2653 = vand.u32 %v2472, 2147483648
    %v2654 = vsel %vm2652, %v2653, %v2651
    %v2655 = vrsqrt.pop %v2473
    %v2656 = vmul.f32 %v2473, %v2655
    %vm2657 = vcmp.eq.f32.partialorder %v2473, inf
    %v2658 = vsel %vm2657, %v2473, %v2656
    %vm2659 = vcmp.eq.f32.partialorder %v2473, 0.0
    %v2660 = vand.u32 %v2473, 2147483648
    %v2661 = vsel %vm2659, %v2660, %v2658
    %v2662 = vrsqrt.pop %v2474
    %v2663 = vmul.f32 %v2474, %v2662
    %vm2664 = vcmp.eq.f32.partialorder %v2474, inf
    %v2665 = vsel %vm2664, %v2474, %v2663
    %vm2666 = vcmp.eq.f32.partialorder %v2474, 0.0
    %v2667 = vand.u32 %v2474, 2147483648
    %v2668 = vsel %vm2666, %v2667, %v2665
    %v2669 = vrsqrt.pop %v2475
    %v2670 = vmul.f32 %v2475, %v2669
    %vm2671 = vcmp.eq.f32.partialorder %v2475, inf
    %v2672 = vsel %vm2671, %v2475, %v2670
    %vm2673 = vcmp.eq.f32.partialorder %v2475, 0.0
    %v2674 = vand.u32 %v2475, 2147483648
    %v2675 = vsel %vm2673, %v2674, %v2672
    %v2676 = vsub.f32 %v2570, %v2626
    %v2677 = vsub.f32 %v2577, %v2633
    %v2678 = vsub.f32 %v2584, %v2640
    %v2679 = vsub.f32 %v2591, %v2647
    %v2680 = vsub.f32 %v2598, %v2654
    %v2681 = vsub.f32 %v2605, %v2661
    %v2682 = vsub.f32 %v2612, %v2668
    %v2683 = vsub.f32 %v2619, %v2675
    %v2684 = vmul.f32 %v2676, %v2676
    %v2685 = vmul.f32 %v2677, %v2677
    %v2686 = vmul.f32 %v2678, %v2678
    %v2687 = vmul.f32 %v2679, %v2679
    %v2688 = vmul.f32 %v2680, %v2680
    %v2689 = vmul.f32 %v2681, %v2681
    %v2690 = vmul.f32 %v2682, %v2682
    %v2691 = vmul.f32 %v2683, %v2683
    %v2692 = vrsqrt.pop %v2316
    %v2693 = vmul.f32 %v2316, %v2692
    %vm2694 = vcmp.eq.f32.partialorder %v2316, inf
    %v2695 = vsel %vm2694, %v2316, %v2693
    %vm2696 = vcmp.eq.f32.partialorder %v2316, 0.0
    %v2697 = vand.u32 %v2316, 2147483648
    %v2698 = vsel %vm2696, %v2697, %v2695
    %v2699 = vrsqrt.pop %v2317
    %v2700 = vmul.f32 %v2317, %v2699
    %vm2701 = vcmp.eq.f32.partialorder %v2317, inf
    %v2702 = vsel %vm2701, %v2317, %v2700
    %vm2703 = vcmp.eq.f32.partialorder %v2317, 0.0
    %v2704 = vand.u32 %v2317, 2147483648
    %v2705 = vsel %vm2703, %v2704, %v2702
    %v2706 = vrsqrt.pop %v2318
    %v2707 = vmul.f32 %v2318, %v2706
    %vm2708 = vcmp.eq.f32.partialorder %v2318, inf
    %v2709 = vsel %vm2708, %v2318, %v2707
    %vm2710 = vcmp.eq.f32.partialorder %v2318, 0.0
    %v2711 = vand.u32 %v2318, 2147483648
    %v2712 = vsel %vm2710, %v2711, %v2709
    %v2713 = vrsqrt.pop %v2319
    %v2714 = vmul.f32 %v2319, %v2713
    %vm2715 = vcmp.eq.f32.partialorder %v2319, inf
    %v2716 = vsel %vm2715, %v2319, %v2714
    %vm2717 = vcmp.eq.f32.partialorder %v2319, 0.0
    %v2718 = vand.u32 %v2319, 2147483648
    %v2719 = vsel %vm2717, %v2718, %v2716
    %v2720 = vrsqrt.pop %v2320
    %v2721 = vmul.f32 %v2320, %v2720
    %vm2722 = vcmp.eq.f32.partialorder %v2320, inf
    %v2723 = vsel %vm2722, %v2320, %v2721
    %vm2724 = vcmp.eq.f32.partialorder %v2320, 0.0
    %v2725 = vand.u32 %v2320, 2147483648
    %v2726 = vsel %vm2724, %v2725, %v2723
    %v2727 = vrsqrt.pop %v2321
    %v2728 = vmul.f32 %v2321, %v2727
    %vm2729 = vcmp.eq.f32.partialorder %v2321, inf
    %v2730 = vsel %vm2729, %v2321, %v2728
    %vm2731 = vcmp.eq.f32.partialorder %v2321, 0.0
    %v2732 = vand.u32 %v2321, 2147483648
    %v2733 = vsel %vm2731, %v2732, %v2730
    %v2734 = vrsqrt.pop %v2322
    %v2735 = vmul.f32 %v2322, %v2734
    %vm2736 = vcmp.eq.f32.partialorder %v2322, inf
    %v2737 = vsel %vm2736, %v2322, %v2735
    %vm2738 = vcmp.eq.f32.partialorder %v2322, 0.0
    %v2739 = vand.u32 %v2322, 2147483648
    %v2740 = vsel %vm2738, %v2739, %v2737
    %v2741 = vrsqrt.pop %v2323
    %v2742 = vmul.f32 %v2323, %v2741
    %vm2743 = vcmp.eq.f32.partialorder %v2323, inf
    %v2744 = vsel %vm2743, %v2323, %v2742
    %vm2745 = vcmp.eq.f32.partialorder %v2323, 0.0
    %v2746 = vand.u32 %v2323, 2147483648
    %v2747 = vsel %vm2745, %v2746, %v2744
    %v2748 = vrsqrt.pop %v2516
    %v2749 = vmul.f32 %v2516, %v2748
    %vm2750 = vcmp.eq.f32.partialorder %v2516, inf
    %v2751 = vsel %vm2750, %v2516, %v2749
    %vm2752 = vcmp.eq.f32.partialorder %v2516, 0.0
    %v2753 = vand.u32 %v2516, 2147483648
    %v2754 = vsel %vm2752, %v2753, %v2751
    %v2755 = vrsqrt.pop %v2517
    %v2756 = vmul.f32 %v2517, %v2755
    %vm2757 = vcmp.eq.f32.partialorder %v2517, inf
    %v2758 = vsel %vm2757, %v2517, %v2756
    %vm2759 = vcmp.eq.f32.partialorder %v2517, 0.0
    %v2760 = vand.u32 %v2517, 2147483648
    %v2761 = vsel %vm2759, %v2760, %v2758
    %v2762 = vrsqrt.pop %v2518
    %v2763 = vmul.f32 %v2518, %v2762
    %vm2764 = vcmp.eq.f32.partialorder %v2518, inf
    %v2765 = vsel %vm2764, %v2518, %v2763
    %vm2766 = vcmp.eq.f32.partialorder %v2518, 0.0
    %v2767 = vand.u32 %v2518, 2147483648
    %v2768 = vsel %vm2766, %v2767, %v2765
    %v2769 = vrsqrt.pop %v2519
    %v2770 = vmul.f32 %v2519, %v2769
    %vm2771 = vcmp.eq.f32.partialorder %v2519, inf
    %v2772 = vsel %vm2771, %v2519, %v2770
    %vm2773 = vcmp.eq.f32.partialorder %v2519, 0.0
    %v2774 = vand.u32 %v2519, 2147483648
    %v2775 = vsel %vm2773, %v2774, %v2772
    %v2776 = vrsqrt.pop %v2520
    %v2777 = vmul.f32 %v2520, %v2776
    %vm2778 = vcmp.eq.f32.partialorder %v2520, inf
    %v2779 = vsel %vm2778, %v2520, %v2777
    %vm2780 = vcmp.eq.f32.partialorder %v2520, 0.0
    %v2781 = vand.u32 %v2520, 2147483648
    %v2782 = vsel %vm2780, %v2781, %v2779
    %v2783 = vrsqrt.pop %v2521
    %v2784 = vmul.f32 %v2521, %v2783
    %vm2785 = vcmp.eq.f32.partialorder %v2521, inf
    %v2786 = vsel %vm2785, %v2521, %v2784
    %vm2787 = vcmp.eq.f32.partialorder %v2521, 0.0
    %v2788 = vand.u32 %v2521, 2147483648
    %v2789 = vsel %vm2787, %v2788, %v2786
    %v2790 = vrsqrt.pop %v2522
    %v2791 = vmul.f32 %v2522, %v2790
    %vm2792 = vcmp.eq.f32.partialorder %v2522, inf
    %v2793 = vsel %vm2792, %v2522, %v2791
    %vm2794 = vcmp.eq.f32.partialorder %v2522, 0.0
    %v2795 = vand.u32 %v2522, 2147483648
    %v2796 = vsel %vm2794, %v2795, %v2793
    %v2797 = vrsqrt.pop %v2523
    %v2798 = vmul.f32 %v2523, %v2797
    %vm2799 = vcmp.eq.f32.partialorder %v2523, inf
    %v2800 = vsel %vm2799, %v2523, %v2798
    %vm2801 = vcmp.eq.f32.partialorder %v2523, 0.0
    %v2802 = vand.u32 %v2523, 2147483648
    %v2803 = vsel %vm2801, %v2802, %v2800
    %v2804 = vsub.f32 %v2698, %v2754
    %v2805 = vsub.f32 %v2705, %v2761
    %v2806 = vsub.f32 %v2712, %v2768
    %v2807 = vsub.f32 %v2719, %v2775
    %v2808 = vsub.f32 %v2726, %v2782
    %v2809 = vsub.f32 %v2733, %v2789
    %v2810 = vsub.f32 %v2740, %v2796
    %v2811 = vsub.f32 %v2747, %v2803
    %v2812 = vmul.f32 %v2804, %v2804
    %v2813 = vmul.f32 %v2805, %v2805
    %v2814 = vmul.f32 %v2806, %v2806
    %v2815 = vmul.f32 %v2807, %v2807
    %v2816 = vmul.f32 %v2808, %v2808
    %v2817 = vmul.f32 %v2809, %v2809
    %v2818 = vmul.f32 %v2810, %v2810
    %v2819 = vmul.f32 %v2811, %v2811
    %v2820 = vadd.f32 %v2684, %v2812
    %v2821 = vadd.f32 %v2685, %v2813
    %v2822 = vadd.f32 %v2686, %v2814
    %v2823 = vadd.f32 %v2687, %v2815
    %v2824 = vadd.f32 %v2688, %v2816
    %v2825 = vadd.f32 %v2689, %v2817
    %v2826 = vadd.f32 %v2690, %v2818
    %v2827 = vadd.f32 %v2691, %v2819
    %v2828 = vsub.f32 %v2356, %v2140
    %v2829 = vsub.f32 %v2357, %v2141
    %v2830 = vsub.f32 %v2358, %v2142
    %v2831 = vsub.f32 %v2359, %v2143
    %v2832 = vsub.f32 %v2360, %v2144
    %v2833 = vsub.f32 %v2361, %v2145
    %v2834 = vsub.f32 %v2362, %v2146
    %v2835 = vsub.f32 %v2363, %v2147
    %v2836 = vmul.f32 %v2828, %v2828
    %v2837 = vmul.f32 %v2829, %v2829
    %v2838 = vmul.f32 %v2830, %v2830
    %v2839 = vmul.f32 %v2831, %v2831
    %v2840 = vmul.f32 %v2832, %v2832
    %v2841 = vmul.f32 %v2833, %v2833
    %v2842 = vmul.f32 %v2834, %v2834
    %v2843 = vmul.f32 %v2835, %v2835
    %v2844 = vadd.f32 %v2556, %v2820
    %v2845 = vadd.f32 %v2557, %v2821
    %v2846 = vadd.f32 %v2558, %v2822
    %v2847 = vadd.f32 %v2559, %v2823
    %v2848 = vadd.f32 %v2560, %v2824
    %v2849 = vadd.f32 %v2561, %v2825
    %v2850 = vadd.f32 %v2562, %v2826
    %v2851 = vadd.f32 %v2563, %v2827
    %v2852 = vmul.f32 %v2844, 5.0
    %v2853 = vmul.f32 %v2845, 5.0
    %v2854 = vmul.f32 %v2846, 5.0
    %v2855 = vmul.f32 %v2847, 5.0
    %v2856 = vmul.f32 %v2848, 5.0
    %v2857 = vmul.f32 %v2849, 5.0
    %v2858 = vmul.f32 %v2850, 5.0
    %v2859 = vmul.f32 %v2851, 5.0
    %v2860 = vadd.f32 %v2852, %v2836
    %v2861 = vadd.f32 %v2853, %v2837
    %v2862 = vadd.f32 %v2854, %v2838
    %v2863 = vadd.f32 %v2855, %v2839
    %v2864 = vadd.f32 %v2856, %v2840
    %v2865 = vadd.f32 %v2857, %v2841
    %v2866 = vadd.f32 %v2858, %v2842
    %v2867 = vadd.f32 %v2859, %v2843
    %v2876 = vrot.slane %v2860, 5
    %v2877 = vrot.slane %v2861, 4
    %v2878 = vsel %vm879, %v2877, %v2876
    %v2879 = vrot.slane %v2862, 3
    %v2880 = vsel %vm882, %v2879, %v2878
    %v2881 = vrot.slane %v2863, 2
    %v2882 = vsel %vm885, %v2881, %v2880
    %v2883 = vrot.slane %v2864, 1
    %v2884 = vsel %vm887, %v2883, %v2882
    %v2885 = vsel %vm890, %v2865, %v2884
    %v2886 = vrot.slane %v2866, 7
    %v2887 = vsel %vm893, %v2886, %v2885
    %v2888 = vrot.slane %v2867, 6
    %v2889 = vsel %vm896, %v2888, %v2887
    %v2891 = vsel %vm899, %v2889, 0.0
    %v2892 = vmul.f32 %v1027, 0.5
    %v2893 = vadd.f32 %v2891, %v2892
    %v2894 = vadd.f32 %v2893, %v1515
    %v2895 = vadd.f32 %v860, %v2894
    %2896 = vst [vmem:[#allocation2] sm:$0xff] %v2895
    // Predicated region
    $region14: #{tpu_custom_call.1} parent=1 // pred_check
      %p2897 = pneg %p844
    $region15: #{tpu_custom_call.1} parent=1 // pred_check_branch
      %2899 = sbr.rel (%p2897) target = $region17
    $region16: #{tpu_custom_call.1} parent=1 // pred_region
      %v2900 = vld [vmem:[#allocation2] sm:$0xff]
      %2901 = vadd.xlane.f32.xlu0 %v2900
      %v2902 = vpop.xlane.xlu0 %2901
      %v2903 = vrot.slane %v2902, 4
      %v2904 = vadd.f32 %v2902, %v2903
      %v2905 = vrot.slane %v2904, 2
      %v2906 = vadd.f32 %v2904, %v2905
      %v2907 = vrot.slane %v2906, 1
      %v2908 = vadd.f32 %v2906, %v2907
      %s2909 = vtos %v2908
      %s2910 = scalar_lea.smem [#allocation3], 0
      %2911 = sst [smem:[%s2910]] %s2909
    $region17: #{tpu_custom_call.1} parent=1 // pred_fallthru
      _
    // Predicated region
    $region18: #{tpu_custom_call.1} parent=1 // pred_check
      _
    $region19: #{tpu_custom_call.1} parent=1 // pred_check_branch
      %2913 = sbr.rel (0) target = $region21
    $region20: #{tpu_custom_call.1} parent=1 // pred_region
      %s2915 = ssub.s32 16, 16
      %2916 = vsyncadd [#allocation4], %s2915
      %2919 = dma.smem_to_hbm [#allocation3], 16, %s2, [#allocation4]
    $region21: #{tpu_custom_call.1} parent=1 // pred_fallthru
      _
    // Predicated region
    $region22: #{tpu_custom_call.1} parent=1 // pred_check
      _
    $region23: #{tpu_custom_call.1} parent=1 // pred_check_branch
      %2921 = sbr.rel (0) target = $region25
    $region24: #{tpu_custom_call.1} parent=1 // pred_region
      %2922 = dma.done [#allocation4], 16
    $region25: #{tpu_custom_call.1} parent=1 // pred_fallthru
      _
    %2923 = sfence
    %2924 = vsyncpa [#allocation4], 1

// kernel: tpu_custom_call.1
$region0: #{tpu_custom_call.1}
  #allocation0 [shape = 'u32[]', space=smem, size = 0x4, offset = 0x4, fixed_abs, tag = 'smem constant byte address 0x4 - core index']
  #allocation1 [shape = 'u32[144,128]{1,0:T(1,128)}', space=vmem, size = 0x12000, scoped, tag = 'internal scratch']
  #allocation2 [shape = 'f32[8,128]{1,0:T(8,128)}', space=vmem, size = 0x1000, scoped, tag = 'scratch operand']
  %s0 = inlined_call_operand.hbm [shape: f32[60,8,128], index: 0, kind: input, shape index: {}]
  %s1 = inlined_call_operand.hbm [shape: f32[1,1], index: 1, kind: output, shape index: {}]
  %s2 = sld [smem:[#allocation0]]
  $region26: #{tpu_custom_call.1} parent=0
    _
  %s4 = ssub.s32 1, %s2
  %s5 = scalar_select 0, %s4, %s2
  $region1: #{tpu_custom_call.1} parent=0
    #allocation3 [shape = 'u8[245760]{0}', space=vmem, size = 0x3c000, scoped, tag = 'input window, operand 0, single buffered']
    #allocation4 [shape = 's32[1]{0}', space=sflag, size = 0x4, scoped, tag = 'scoped memory for tpu_custom_call.1']
    #allocation5 [shape = 's32[1]{0}', space=sflag, size = 0x4, scoped, tag = 'scoped memory for tpu_custom_call.1']
    #allocation6 [shape = 'u8[512]{0}', space=smem, size = 0x200, scoped, tag = 'output window, operand 0, single buffered']
    %6 = vsyncpa [#allocation4], 0
    %7 = vsyncpa [#allocation5], 0
    // Predicated region
    $region2: #{tpu_custom_call.1} parent=1 // pred_check
      _
    $region3: #{tpu_custom_call.1} parent=1 // pred_check_branch
      %9 = sbr.rel (0) target = $region5
    $region4: #{tpu_custom_call.1} parent=1 // pred_region
      %s10 = sadd.s32 0, 0
      %s12 = ssub.s32 7680, 7680
      %13 = vsyncadd [#allocation4], %s12
      %s14 = smul.addr %s10, 128
      %s15 = scalar_lea.hbm %s0, %s14
      %s16 = sshll.u32 [#allocation3], 4
      %s17 = int_to_ptr.vmem [resolvable:$true] %s16
      %22 = dma.hbm_to_vmem [thread:$0]  %s15, 7680, %s17, [#allocation4], 128, 128, 8
    $region5: #{tpu_custom_call.1} parent=1 // pred_fallthru
      _
    // Predicated region
    $region6: #{tpu_custom_call.1} parent=1 // pred_check
      _
    $region7: #{tpu_custom_call.1} parent=1 // pred_check_branch
      %24 = sbr.rel (0) target = $region9
    $region8: #{tpu_custom_call.1} parent=1 // pred_region
      %25 = dma.done [#allocation4], 7680
    $region9: #{tpu_custom_call.1} parent=1 // pred_fallthru
      _
    %s26 = sadd.s32 0, 0
    %p27 = scmp.eq.s32.totalorder 0, 0
    // Predicated region
    $region10: #{tpu_custom_call.1} parent=1 // pred_check
      %p28 = pneg %p27
    $region11: #{tpu_custom_call.1} parent=1 // pred_check_branch
      %30 = sbr.rel (%p28) target = $region13
    $region12: #{tpu_custom_call.1} parent=1 // pred_region
      %31 = vst [vmem:[#allocation2] sm:$0xff] 0.0
    $region13: #{tpu_custom_call.1} parent=1 // pred_fallthru
      _
    %s32 = sadd.s32 0, 0
    %s33 = smul.u32 %s32, 1024
    %v34 = vlaneseq
    %v35 = vshrl.u32 %v34, 7
    %v36 = vlaneseq
    %v37 = vand.u32 %v36, 127
    %v38 = vmul.u32 %v35, 128
    %v39 = vstv %s33
    %v40 = vadd.s32 %v39, %v38
    %v41 = vadd.s32 %v40, %v37
    %vm42 = vcmp.lt.s32.totalorder %v41, 98
    %v43 = vld [vmem:[#allocation2] sm:$0xff]
    %s44 = scalar_lea.vmem [#allocation3], 272
    %v45 = vld [vmem:[%s44] sm:$0xff]
    %vm46 = vcmp.gt.f32.partialorder %v45, 0.0
    %vm47 = vmand %vm42, %vm46
    %vm48 = vcmp.eq.f32.partialorder %v45, 0.0
    %vm49 = vmand %vm42, %vm48
    %s50 = scalar_lea.vmem [#allocation3], 32
    %v51 = vld [vmem:[%s50] sm:$0xff]
    %v52 = vsub.f32 %v51, %v45
    %v53 = vmul.f32 %v52, %v52
    %v54 = vadd.f32 %v53, 0.0
    %s55 = scalar_lea.vmem [#allocation3], 72
    %v56 = vld [vmem:[%s55] sm:$0xff]
    %s57 = scalar_lea.vmem [#allocation3], 312
    %v58 = vld [vmem:[%s57] sm:$0xff]
    %v59 = vsub.f32 %v56, %v58
    %v60 = vmul.f32 %v59, %v59
    %v61 = vadd.f32 %v54, %v60
    %v62 = vsel %vm49, %v61, 0.0
    %s63 = scalar_lea.vmem [#allocation3], 80
    %v64 = vld [vmem:[%s63] sm:$0xff]
    %s65 = scalar_lea.vmem [#allocation3], 320
    %v66 = vld [vmem:[%s65] sm:$0xff]
    %v67 = vsub.f32 %v64, %v66
    %v68 = vmul.f32 %v67, %v67
    %v69 = vadd.f32 %v68, 0.0
    %s70 = scalar_lea.vmem [#allocation3], 88
    %v71 = vld [vmem:[%s70] sm:$0xff]
    %s72 = scalar_lea.vmem [#allocation3], 328
    %v73 = vld [vmem:[%s72] sm:$0xff]
    %v74 = vsub.f32 %v71, %v73
    %v75 = vmul.f32 %v74, %v74
    %v76 = vadd.f32 %v69, %v75
    %s77 = scalar_lea.vmem [#allocation3], 96
    %v78 = vld [vmem:[%s77] sm:$0xff]
    %s79 = scalar_lea.vmem [#allocation3], 336
    %v80 = vld [vmem:[%s79] sm:$0xff]
    %v81 = vsub.f32 %v78, %v80
    %v82 = vmul.f32 %v81, %v81
    %v83 = vadd.f32 %v76, %v82
    %s84 = scalar_lea.vmem [#allocation3], 104
    %v85 = vld [vmem:[%s84] sm:$0xff]
    %s86 = scalar_lea.vmem [#allocation3], 344
    %v87 = vld [vmem:[%s86] sm:$0xff]
    %v88 = vsub.f32 %v85, %v87
    %v89 = vmul.f32 %v88, %v88
    %v90 = vadd.f32 %v83, %v89
    %s91 = scalar_lea.vmem [#allocation3], 112
    %v92 = vld [vmem:[%s91] sm:$0xff]
    %s93 = scalar_lea.vmem [#allocation3], 352
    %v94 = vld [vmem:[%s93] sm:$0xff]
    %v95 = vsub.f32 %v92, %v94
    %v96 = vmul.f32 %v95, %v95
    %v97 = vadd.f32 %v90, %v96
    %s98 = scalar_lea.vmem [#allocation3], 120
    %v99 = vld [vmem:[%s98] sm:$0xff]
    %s100 = scalar_lea.vmem [#allocation3], 360
    %v101 = vld [vmem:[%s100] sm:$0xff]
    %v102 = vsub.f32 %v99, %v101
    %v103 = vmul.f32 %v102, %v102
    %v104 = vadd.f32 %v97, %v103
    %s105 = scalar_lea.vmem [#allocation3], 128
    %v106 = vld [vmem:[%s105] sm:$0xff]
    %s107 = scalar_lea.vmem [#allocation3], 368
    %v108 = vld [vmem:[%s107] sm:$0xff]
    %v109 = vsub.f32 %v106, %v108
    %v110 = vmul.f32 %v109, %v109
    %v111 = vadd.f32 %v104, %v110
    %s112 = scalar_lea.vmem [#allocation3], 136
    %v113 = vld [vmem:[%s112] sm:$0xff]
    %s114 = scalar_lea.vmem [#allocation3], 376
    %v115 = vld [vmem:[%s114] sm:$0xff]
    %v116 = vsub.f32 %v113, %v115
    %v117 = vmul.f32 %v116, %v116
    %v118 = vadd.f32 %v111, %v117
    %s119 = scalar_lea.vmem [#allocation3], 144
    %v120 = vld [vmem:[%s119] sm:$0xff]
    %s121 = scalar_lea.vmem [#allocation3], 384
    %v122 = vld [vmem:[%s121] sm:$0xff]
    %v123 = vsub.f32 %v120, %v122
    %v124 = vmul.f32 %v123, %v123
    %v125 = vadd.f32 %v118, %v124
    %s126 = scalar_lea.vmem [#allocation3], 152
    %v127 = vld [vmem:[%s126] sm:$0xff]
    %s128 = scalar_lea.vmem [#allocation3], 392
    %v129 = vld [vmem:[%s128] sm:$0xff]
    %v130 = vsub.f32 %v127, %v129
    %v131 = vmul.f32 %v130, %v130
    %v132 = vadd.f32 %v125, %v131
    %s133 = scalar_lea.vmem [#allocation3], 160
    %v134 = vld [vmem:[%s133] sm:$0xff]
    %s135 = scalar_lea.vmem [#allocation3], 400
    %v136 = vld [vmem:[%s135] sm:$0xff]
    %v137 = vsub.f32 %v134, %v136
    %v138 = vmul.f32 %v137, %v137
    %v139 = vadd.f32 %v132, %v138
    %s140 = scalar_lea.vmem [#allocation3], 168
    %v141 = vld [vmem:[%s140] sm:$0xff]
    %s142 = scalar_lea.vmem [#allocation3], 408
    %v143 = vld [vmem:[%s142] sm:$0xff]
    %v144 = vsub.f32 %v141, %v143
    %v145 = vmul.f32 %v144, %v144
    %v146 = vadd.f32 %v139, %v145
    %s147 = scalar_lea.vmem [#allocation3], 176
    %v148 = vld [vmem:[%s147] sm:$0xff]
    %s149 = scalar_lea.vmem [#allocation3], 416
    %v150 = vld [vmem:[%s149] sm:$0xff]
    %v151 = vsub.f32 %v148, %v150
    %v152 = vmul.f32 %v151, %v151
    %v153 = vadd.f32 %v146, %v152
    %s154 = scalar_lea.vmem [#allocation3], 184
    %v155 = vld [vmem:[%s154] sm:$0xff]
    %s156 = scalar_lea.vmem [#allocation3], 424
    %v157 = vld [vmem:[%s156] sm:$0xff]
    %v158 = vsub.f32 %v155, %v157
    %v159 = vmul.f32 %v158, %v158
    %v160 = vadd.f32 %v153, %v159
    %s161 = scalar_lea.vmem [#allocation3], 192
    %v162 = vld [vmem:[%s161] sm:$0xff]
    %s163 = scalar_lea.vmem [#allocation3], 432
    %v164 = vld [vmem:[%s163] sm:$0xff]
    %v165 = vsub.f32 %v162, %v164
    %v166 = vmul.f32 %v165, %v165
    %v167 = vadd.f32 %v160, %v166
    %s168 = scalar_lea.vmem [#allocation3], 200
    %v169 = vld [vmem:[%s168] sm:$0xff]
    %s170 = scalar_lea.vmem [#allocation3], 440
    %v171 = vld [vmem:[%s170] sm:$0xff]
    %v172 = vsub.f32 %v169, %v171
    %v173 = vmul.f32 %v172, %v172
    %v174 = vadd.f32 %v167, %v173
    %s175 = scalar_lea.vmem [#allocation3], 208
    %v176 = vld [vmem:[%s175] sm:$0xff]
    %s177 = scalar_lea.vmem [#allocation3], 448
    %v178 = vld [vmem:[%s177] sm:$0xff]
    %v179 = vsub.f32 %v176, %v178
    %v180 = vmul.f32 %v179, %v179
    %v181 = vadd.f32 %v174, %v180
    %s182 = scalar_lea.vmem [#allocation3], 216
    %v183 = vld [vmem:[%s182] sm:$0xff]
    %s184 = scalar_lea.vmem [#allocation3], 456
    %v185 = vld [vmem:[%s184] sm:$0xff]
    %v186 = vsub.f32 %v183, %v185
    %v187 = vmul.f32 %v186, %v186
    %v188 = vadd.f32 %v181, %v187
    %s189 = scalar_lea.vmem [#allocation3], 224
    %v190 = vld [vmem:[%s189] sm:$0xff]
    %s191 = scalar_lea.vmem [#allocation3], 464
    %v192 = vld [vmem:[%s191] sm:$0xff]
    %v193 = vsub.f32 %v190, %v192
    %v194 = vmul.f32 %v193, %v193
    %v195 = vadd.f32 %v188, %v194
    %s196 = scalar_lea.vmem [#allocation3], 232
    %v197 = vld [vmem:[%s196] sm:$0xff]
    %s198 = scalar_lea.vmem [#allocation3], 472
    %v199 = vld [vmem:[%s198] sm:$0xff]
    %v200 = vsub.f32 %v197, %v199
    %v201 = vmul.f32 %v200, %v200
    %v202 = vadd.f32 %v195, %v201
    %v203 = vsel %vm47, %v202, 0.0
    %s204 = scalar_lea.vmem [#allocation3], 240
    %v205 = vld [vmem:[%s204] sm:$0xff]
    %v206 = vmul.f32 %v205, 0.14285715
    %s207 = scalar_lea.vmem [#allocation3], 248
    %v208 = vld [vmem:[%s207] sm:$0xff]
    %v209 = vmul.f32 %v208, 0.14285715
    %s210 = scalar_lea.vmem [#allocation3], 256
    %v211 = vld [vmem:[%s210] sm:$0xff]
    %s212 = scalar_lea.vmem [#allocation3], 264
    %v213 = vld [vmem:[%s212] sm:$0xff]
    %v214 = vmul.f32 %v211, 0.5
    %v215 = vsub.f32 %v206, %v214
    %v216 = vmul.f32 %v213, 0.5
    %v217 = vsub.f32 %v209, %v216
    %v218 = vadd.f32 %v206, %v214
    %v219 = vadd.f32 %v209, %v216
    %v220 = vsub.f32 %v218, %v215
    %v221 = vsub.f32 %v219, %v217
    %v222 = vmul.f32 %v220, %v221
    %v223 = vld [vmem:[#allocation3] sm:$0xff]
    %v224 = vmul.f32 %v223, 0.14285715
    %s225 = scalar_lea.vmem [#allocation3], 8
    %v226 = vld [vmem:[%s225] sm:$0xff]
    %v227 = vmul.f32 %v226, 0.14285715
    %s228 = scalar_lea.vmem [#allocation3], 16
    %v229 = vld [vmem:[%s228] sm:$0xff]
    %s230 = scalar_lea.vmem [#allocation3], 24
    %v231 = vld [vmem:[%s230] sm:$0xff]
    %v232 = vmul.f32 %v229, 0.5
    %v233 = vsub.f32 %v224, %v232
    %v234 = vmul.f32 %v231, 0.5
    %v235 = vsub.f32 %v227, %v234
    %v236 = vadd.f32 %v224, %v232
    %v237 = vadd.f32 %v227, %v234
    %v238 = vsub.f32 %v236, %v233
    %v239 = vsub.f32 %v237, %v235
    %v240 = vmul.f32 %v238, %v239
    %v241 = vmin.f32 %v236, %v218
    %v242 = vmax.f32 %v233, %v215
    %v243 = vsub.f32 %v241, %v242
    %v244 = vmax.f32 %v243, 0.0
    %v245 = vmin.f32 %v237, %v219
    %v246 = vmax.f32 %v235, %v217
    %v247 = vsub.f32 %v245, %v246
    %v248 = vmax.f32 %v247, 0.0
    %v249 = vmul.f32 %v244, %v248
    %v250 = vadd.f32 %v240, %v222
    %v251 = vsub.f32 %v250, %v249
    %v252 = vmax.f32 %v251, 1e-12
    %v253 = vrcp.pop %v252
    %v254 = vmul.f32 %v249, %v253
    %s255 = scalar_lea.vmem [#allocation3], 40
    %v256 = vld [vmem:[%s255] sm:$0xff]
    %v257 = vmul.f32 %v256, 0.14285715
    %s258 = scalar_lea.vmem [#allocation3], 48
    %v259 = vld [vmem:[%s258] sm:$0xff]
    %v260 = vmul.f32 %v259, 0.14285715
    %s261 = scalar_lea.vmem [#allocation3], 56
    %v262 = vld [vmem:[%s261] sm:$0xff]
    %s263 = scalar_lea.vmem [#allocation3], 64
    %v264 = vld [vmem:[%s263] sm:$0xff]
    %v265 = vmul.f32 %v262, 0.5
    %v266 = vsub.f32 %v257, %v265
    %v267 = vmul.f32 %v264, 0.5
    %v268 = vsub.f32 %v260, %v267
    %v269 = vadd.f32 %v257, %v265
    %v270 = vadd.f32 %v260, %v267
    %v271 = vsub.f32 %v269, %v266
    %v272 = vsub.f32 %v270, %v268
    %v273 = vmul.f32 %v271, %v272
    %v274 = vmin.f32 %v269, %v218
    %v275 = vmax.f32 %v266, %v215
    %v276 = vsub.f32 %v274, %v275
    %v277 = vmax.f32 %v276, 0.0
    %v278 = vmin.f32 %v270, %v219
    %v279 = vmax.f32 %v268, %v217
    %v280 = vsub.f32 %v278, %v279
    %v281 = vmax.f32 %v280, 0.0
    %v282 = vmul.f32 %v277, %v281
    %v283 = vadd.f32 %v273, %v222
    %v284 = vsub.f32 %v283, %v282
    %v285 = vmax.f32 %v284, 1e-12
    %v286 = vrcp.pop %v285
    %v287 = vmul.f32 %v282, %v286
    %vm288 = vcmp.gt.f32.partialorder %v287, %v254
    %v289 = vsel %vm288, %v287, %v254
    %v290 = vsel %vm288, 1, 0
    %vm291 = vcmp.eq.s32.totalorder %v290, 1
    %v292 = vsel %vm291, %v256, %v223
    %v293 = vsel %vm291, %v259, %v226
    %v294 = vsel %vm291, %v262, %v229
    %v295 = vsel %vm291, %v264, %v231
    %v296 = vsel %vm291, %v56, %v51
    %s297 = scalar_lea.vmem [#allocation3], 280
    %v298 = vld [vmem:[%s297] sm:$0xff]
    %v299 = vsel %vm291, %v298, %v205
    %s300 = scalar_lea.vmem [#allocation3], 288
    %v301 = vld [vmem:[%s300] sm:$0xff]
    %v302 = vsel %vm291, %v301, %v208
    %s303 = scalar_lea.vmem [#allocation3], 296
    %v304 = vld [vmem:[%s303] sm:$0xff]
    %v305 = vsel %vm291, %v304, %v211
    %s306 = scalar_lea.vmem [#allocation3], 304
    %v307 = vld [vmem:[%s306] sm:$0xff]
    %v308 = vsel %vm291, %v307, %v213
    %v309 = vsub.f32 %v292, %v299
    %v310 = vmul.f32 %v309, %v309
    %v311 = vsub.f32 %v293, %v302
    %v312 = vmul.f32 %v311, %v311
    %v313 = vadd.f32 %v310, %v312
    %v314 = vrsqrt.pop %v294
    %v315 = vmul.f32 %v294, %v314
    %vm316 = vcmp.eq.f32.partialorder %v294, inf
    %v317 = vsel %vm316, %v294, %v315
    %vm318 = vcmp.eq.f32.partialorder %v294, 0.0
    %v319 = vand.u32 %v294, 2147483648
    %v320 = vsel %vm318, %v319, %v317
    %v321 = vrsqrt.pop %v305
    %v322 = vmul.f32 %v305, %v321
    %vm323 = vcmp.eq.f32.partialorder %v305, inf
    %v324 = vsel %vm323, %v305, %v322
    %vm325 = vcmp.eq.f32.partialorder %v305, 0.0
    %v326 = vand.u32 %v305, 2147483648
    %v327 = vsel %vm325, %v326, %v324
    %v328 = vsub.f32 %v320, %v327
    %v329 = vmul.f32 %v328, %v328
    %v330 = vrsqrt.pop %v295
    %v331 = vmul.f32 %v295, %v330
    %vm332 = vcmp.eq.f32.partialorder %v295, inf
    %v333 = vsel %vm332, %v295, %v331
    %vm334 = vcmp.eq.f32.partialorder %v295, 0.0
    %v335 = vand.u32 %v295, 2147483648
    %v336 = vsel %vm334, %v335, %v333
    %v337 = vrsqrt.pop %v308
    %v338 = vmul.f32 %v308, %v337
    %vm339 = vcmp.eq.f32.partialorder %v308, inf
    %v340 = vsel %vm339, %v308, %v338
    %vm341 = vcmp.eq.f32.partialorder %v308, 0.0
    %v342 = vand.u32 %v308, 2147483648
    %v343 = vsel %vm341, %v342, %v340
    %v344 = vsub.f32 %v336, %v343
    %v345 = vmul.f32 %v344, %v344
    %v346 = vadd.f32 %v329, %v345
    %v347 = vsub.f32 %v296, %v289
    %v348 = vmul.f32 %v347, %v347
    %v349 = vadd.f32 %v313, %v346
    %v350 = vmul.f32 %v349, 5.0
    %v351 = vadd.f32 %v350, %v348
    %v352 = vsel %vm47, %v351, 0.0
    %v353 = vmul.f32 %v62, 0.5
    %v354 = vadd.f32 %v352, %v353
    %v355 = vadd.f32 %v354, %v203
    %v356 = vadd.f32 %v43, %v355
    %357 = vst [vmem:[#allocation2] sm:$0xff] %v356
    // Predicated region
    $region14: #{tpu_custom_call.1} parent=1 // pred_check
      %p358 = pneg %p27
    $region15: #{tpu_custom_call.1} parent=1 // pred_check_branch
      %360 = sbr.rel (%p358) target = $region17
    $region16: #{tpu_custom_call.1} parent=1 // pred_region
      %v361 = vld [vmem:[#allocation2] sm:$0xff]
      %362 = vadd.xlane.f32.xlu0 %v361
      %v363 = vpop.xlane.xlu0 %362
      %v364 = vrot.slane %v363, 4
      %v365 = vadd.f32 %v363, %v364
      %v366 = vrot.slane %v365, 2
      %v367 = vadd.f32 %v365, %v366
      %v368 = vrot.slane %v367, 1
      %v369 = vadd.f32 %v367, %v368
      %s370 = vtos %v369
      %s371 = scalar_lea.smem [#allocation6], 0
      %372 = sst [smem:[%s371]] %s370
    $region17: #{tpu_custom_call.1} parent=1 // pred_fallthru
      _
    // Predicated region
    $region18: #{tpu_custom_call.1} parent=1 // pred_check
      _
    $region19: #{tpu_custom_call.1} parent=1 // pred_check_branch
      %374 = sbr.rel (0) target = $region21
    $region20: #{tpu_custom_call.1} parent=1 // pred_region
      %s376 = ssub.s32 16, 16
      %377 = vsyncadd [#allocation5], %s376
      %380 = dma.smem_to_hbm [#allocation6], 16, %s1, [#allocation5]
    $region21: #{tpu_custom_call.1} parent=1 // pred_fallthru
      _
    // Predicated region
    $region22: #{tpu_custom_call.1} parent=1 // pred_check
      _
    $region23: #{tpu_custom_call.1} parent=1 // pred_check_branch
      %382 = sbr.rel (0) target = $region25
    $region24: #{tpu_custom_call.1} parent=1 // pred_region
      %383 = dma.done [#allocation5], 16
    $region25: #{tpu_custom_call.1} parent=1 // pred_fallthru
      _
    %384 = sfence
    %385 = vsyncpa [#allocation4], 1
    %386 = vsyncpa [#allocation5], 1

</llo_original>
